<compile_context>
chip_gen: v7x
topology: tpu7x:2x2x1
jax: 0.10.0
libtpu: 0.0.40
codegen_flags: <defaults>
</compile_context>

<pallas_src>
from functools import partial

import numpy as np

import jax
import jax.numpy as jnp
from jax.experimental import pallas as pl
from jax.experimental.pallas import tpu as pltpu

KS = 3
PAD = 1
EPS = 1e-5          # nn.BatchNorm2d default eps
LANE = 128


def _round_up(x, m):
    return (x + m - 1) // m * m


def _vmem_limit_bytes():
    """Per-generation scoped-VMEM limit instead of a flat 32 MiB."""
    try:
        phys = int(pltpu.get_tpu_info().vmem_capacity_bytes)
        # ~96 MiB on the 128-MiB parts (v5e/v6e), ~48 MiB on v7x (64 MiB physical).
        return min(phys * 3 // 4, 96 * 1024 * 1024)
    except Exception:
        return 32 * 1024 * 1024     # conservative, known-safe fallback


VMEM_LIMIT = _vmem_limit_bytes()


def _pick_row_tile(total_rows, row_bytes, budget_bytes=8 * 1024 * 1024):
    """Largest multiple-of-8 divisor of total_rows under a per-buffer VMEM budget."""
    cap = max(8, min(total_rows, 4096, budget_bytes // max(row_bytes, 1)))
    cap -= cap % 8
    t = max(cap, 8)
    while t >= 8:
        if total_rows % t == 0:
            return t
        t -= 8
    return 8


def conv_taps_kernel(x_lo_ref, x_hi_ref, w_ref, mask_ref, conv_ref, stats_ref, *,
                     tm, wp, halo, cout_p):
    """One (batch, row-block) step of the 3x3 conv over row-flattened padded NHWC.

    x_lo_ref:  (1, tm, cin_p)      padded-input flat rows [ib*tm, (ib+1)*tm)
    x_hi_ref:  (1, hb, cin_p)      next hb >= 2*Wp+2 rows (halo for tap rows ky=1,2)
    w_ref:     (9, cin_p, cout_p)  folded weights, VMEM-resident (constant index_map)
    mask_ref:  (tm, 1) f32         1.0 for rows that are real output pixels, else 0.0
    conv_ref:  (1, tm, cout_p)     pre-BN conv tile (lane-dense)
    stats_ref: (1, 1, 8, cout_p)   row 0 = per-channel sum, row 1 = sum of squares
    """
    x_lo = x_lo_ref[0]                                   # (tm, cin_p)
    x_halo = x_hi_ref[0][:halo]                          # (halo, cin_p)
    xwin = jnp.concatenate([x_lo, x_halo], axis=0)       # (tm + halo, cin_p)

    acc = jnp.zeros((tm, cout_p), jnp.float32)
    for ky in range(KS):
        for kx in range(KS):
            off = ky * wp + kx                           # static flat-row tap shift
            acc = acc + jnp.dot(xwin[off:off + tm],
                                w_ref[ky * KS + kx],
                                preferred_element_type=jnp.float32)

    # Zero garbage rows (spatial-pad columns / row padding) so stats stay exact.
    acc = acc * mask_ref[...]

    conv_ref[0] = acc.astype(conv_ref.dtype)

    s = jnp.sum(acc, axis=0, keepdims=True)              # (1, cout_p)
    ss = jnp.sum(acc * acc, axis=0, keepdims=True)       # (1, cout_p)
    stats_ref[0, 0] = jnp.concatenate(
        [s, ss, jnp.zeros((6, cout_p), jnp.float32)], axis=0)


def bn_relu_kernel(conv_ref, scale_ref, shift_ref, out_ref):
    """y = max(conv * scale + shift, 0) with the BN affine pre-folded into scale/shift."""
    y = conv_ref[...].astype(jnp.float32) * scale_ref[...] + shift_ref[...]
    out_ref[...] = jnp.maximum(y, 0.0).astype(out_ref.dtype)


@partial(jax.jit, static_argnames=("tm", "use_bf16"))
def conv_bn_relu(x_nchw, weight_oihw, gamma, beta, *, tm=512, use_bf16=False):
    """ConvBNReLU forward.  x_nchw: (N, Cin, H, W); weight_oihw: (Cout, Cin, 3, 3).

    Only ks=3, stride=1, padding=1 (the module defaults) are implemented.
    `tm` is the pass-1 row tile (flattened H*Wp rows per block); re-sweep per TPU
    generation: 512-1024 is fine on v5e/v6e, watch the 64 MiB VMEM ceiling on v7x.
    `use_bf16=True` casts the MXU operands and the conv intermediate to bf16
    (f32 accumulation / f32 BN stats) -- a perf/precision trade-off.
    """
    n, cin, h, w_img = x_nchw.shape
    cout = weight_oihw.shape[0]
    assert weight_oihw.shape == (cout, cin, KS, KS)

    compute_dtype = jnp.bfloat16 if use_bf16 else jnp.float32
    conv_dtype = jnp.bfloat16 if use_bf16 else jnp.float32
    out_dtype = x_nchw.dtype

    hp, wp = h + 2 * PAD, w_img + 2 * PAD
    cin_p = _round_up(cin, 8)              # tiny sublane pad; NOT a 9x im2col
    cout_p = _round_up(cout, LANE)         # lane-dense output stores

    halo = 2 * wp + 2                      # extra flat rows needed below each row block
    hb = _round_up(halo, 8)                # halo feed block size (2nd BlockSpec, same array)
    tm_eff = _round_up(max(min(tm, _round_up(h * wp, 8)), hb), hb)
    hi_per_lo = tm_eff // hb               # halo block index stride per row-block

    lout_p = _round_up(h * wp, tm_eff)     # padded extended-output rows per image
    grid_m = lout_p // tm_eff
    in_rows = lout_p + hb                  # >= hp*wp; covers the last halo read exactly

    # ---- layout prep (cheap XLA glue: pad + flatten only; no im2col) -------------
    x_nhwc = jnp.transpose(x_nchw, (0, 2, 3, 1))
    xp = jnp.pad(x_nhwc.astype(compute_dtype),
                 ((0, 0), (PAD, PAD), (PAD, PAD), (0, cin_p - cin)))
    xflat = xp.reshape(n, hp * wp, cin_p)
    xflat = jnp.pad(xflat, ((0, 0), (0, in_rows - hp * wp), (0, 0)))

    wmat = jnp.transpose(weight_oihw, (2, 3, 1, 0)).reshape(KS * KS, cin, cout)
    wmat = jnp.pad(wmat.astype(compute_dtype),
                   ((0, 0), (0, cin_p - cin), (0, cout_p - cout)))

    r = jnp.arange(lout_p, dtype=jnp.int32)
    mask = ((r % wp) < w_img) & (r < h * wp)          # real output pixels only
    mask = mask.astype(jnp.float32).reshape(lout_p, 1)

    # ---- pass 1: in-kernel 3x3 taps + per-tile BN partial stats ------------------
    kernel1 = partial(conv_taps_kernel, tm=tm_eff, wp=wp, halo=halo, cout_p=cout_p)
    conv3d, stats = pl.pallas_call(
        kernel1,
        out_shape=(
            jax.ShapeDtypeStruct((n, lout_p, cout_p), conv_dtype),
            jax.ShapeDtypeStruct((n, grid_m, 8, cout_p), jnp.float32),
        ),
        grid_spec=pltpu.PrefetchScalarGridSpec(
            num_scalar_prefetch=0,
            grid=(n, grid_m),
            in_specs=[
                pl.BlockSpec((1, tm_eff, cin_p), lambda nb, ib: (nb, ib, 0)),
                pl.BlockSpec((1, hb, cin_p),
                             lambda nb, ib: (nb, (ib + 1) * hi_per_lo, 0)),
                pl.BlockSpec((KS * KS, cin_p, cout_p), lambda nb, ib: (0, 0, 0)),
                pl.BlockSpec((tm_eff, 1), lambda nb, ib: (ib, 0)),
            ],
            out_specs=(
                pl.BlockSpec((1, tm_eff, cout_p), lambda nb, ib: (nb, ib, 0)),
                pl.BlockSpec((1, 1, 8, cout_p), lambda nb, ib: (nb, ib, 0, 0)),
            ),
        ),
        compiler_params=pltpu.CompilerParams(
            dimension_semantics=("parallel", "parallel"),
            vmem_limit_bytes=VMEM_LIMIT,
        ),
    )(xflat, xflat, wmat, mask)

    # ---- tiny per-channel math: batch stats + folded BN affine -------------------
    total = jnp.float32(n * h * w_img)                 # garbage rows were zeroed in-kernel
    ch_sum = jnp.sum(stats[:, :, 0, :], axis=(0, 1))   # (cout_p,)
    ch_sumsq = jnp.sum(stats[:, :, 1, :], axis=(0, 1))
    mean = ch_sum / total
    var = jnp.maximum(ch_sumsq / total - mean * mean, 0.0)
    inv_std = jax.lax.rsqrt(var + EPS)
    gamma_p = jnp.pad(gamma.astype(jnp.float32), (0, cout_p - cout))
    beta_p = jnp.pad(beta.astype(jnp.float32), (0, cout_p - cout))
    scale = (gamma_p * inv_std).reshape(1, cout_p)
    shift = (beta_p - mean * gamma_p * inv_std).reshape(1, cout_p)

    # ---- pass 2: tiled fused scale/shift + ReLU (pure HBM-bandwidth bound) -------
    total_rows = n * lout_p
    conv2d = conv3d.reshape(total_rows, cout_p)
    row_bytes = cout_p * (np.dtype(conv_dtype).itemsize + np.dtype(out_dtype).itemsize)
    tm2 = _pick_row_tile(total_rows, row_bytes)
    alias = {0: 0} if np.dtype(conv_dtype) == np.dtype(out_dtype) else {}
    out2d = pl.pallas_call(
        bn_relu_kernel,
        out_shape=jax.ShapeDtypeStruct((total_rows, cout_p), out_dtype),
        grid_spec=pltpu.PrefetchScalarGridSpec(
            num_scalar_prefetch=0,
            grid=(total_rows // tm2,),
            in_specs=[
                pl.BlockSpec((tm2, cout_p), lambda i: (i, 0)),
                pl.BlockSpec((1, cout_p), lambda i: (0, 0)),
                pl.BlockSpec((1, cout_p), lambda i: (0, 0)),
            ],
            out_specs=pl.BlockSpec((tm2, cout_p), lambda i: (i, 0)),
        ),
        compiler_params=pltpu.CompilerParams(
            dimension_semantics=("parallel",),
            vmem_limit_bytes=VMEM_LIMIT,
        ),
        input_output_aliases=alias,
    )(conv2d, scale, shift)

    # ---- strip padding / garbage columns, back to NCHW ---------------------------
    out = out2d.reshape(n, lout_p, cout_p)[:, :h * wp, :cout]
    out = out.reshape(n, h, wp, cout)[:, :, :w_img, :]
    return jnp.transpose(out, (0, 3, 1, 2))


def _reference(x_nchw, weight_oihw, gamma, beta):
    """Pure-JAX reference matching PyTorch ConvBNReLU.forward (training-mode BN)."""
    y = jax.lax.conv_general_dilated(
        x_nchw, weight_oihw, window_strides=(1, 1),
        padding=((PAD, PAD), (PAD, PAD)),
        dimension_numbers=("NCHW", "OIHW", "NCHW"))
    mean = jnp.mean(y, axis=(0, 2, 3), keepdims=True)
    var = jnp.mean((y - mean) ** 2, axis=(0, 2, 3), keepdims=True)
    y = (y - mean) * jax.lax.rsqrt(var + EPS)
    y = y * gamma.reshape(1, -1, 1, 1) + beta.reshape(1, -1, 1, 1)
    return jnp.maximum(y, 0.0)


if __name__ == "__main__":
    key = jax.random.PRNGKey(0)
    k_x, k_w, k_g, k_b = jax.random.split(key, 4)

    N, Cin, Cout, H, W = 2, 4, 8, 16, 16

    x = jax.random.normal(k_x, (N, Cin, H, W), dtype=jnp.float32)
    # nn.Conv2d weight shape: (out_chan, in_chan, ks, ks); deterministic synthetic init.
    weight = jax.random.normal(k_w, (Cout, Cin, KS, KS), dtype=jnp.float32) * 0.1
    # BN affine params (perturbed from the defaults gamma=1, beta=0 to exercise the path).
    gamma = 1.0 + 0.1 * jax.random.normal(k_g, (Cout,), dtype=jnp.float32)
    beta = 0.1 * jax.random.normal(k_b, (Cout,), dtype=jnp.float32)

    ref = _reference(x, weight, gamma, beta)

    # Default f32 path: must match the PyTorch-equivalent reference tightly.
    out = jax.block_until_ready(conv_bn_relu(x, weight, gamma, beta))
    assert out.shape == (N, Cout, H, W)
    err = float(jnp.max(jnp.abs(out - ref)))
    assert jnp.allclose(out, ref, atol=1e-4, rtol=1e-4), err

    # Optional bf16 fast path (perf-review item): bf16 MXU operands + bf16 conv
    # intermediate, f32 accumulation/stats.  Looser tolerance by construction.
    out_bf16 = jax.block_until_ready(
        conv_bn_relu(x, weight, gamma, beta, use_bf16=True))
    err_bf16 = float(jnp.max(jnp.abs(out_bf16 - ref)))
    assert jnp.allclose(out_bf16, ref, atol=6e-2, rtol=6e-2), err_bf16

    print("KERNEL_OK")
</pallas_src>

<mosaic_0001>
module attributes {stable_mosaic.version = 11 : i64} {
  func.func @conv_taps_kernel(%arg0: i32, %arg1: i32, %arg2: memref<1x320x8xf32, #tpu.memory_space<vmem>>, %arg3: memref<1x40x8xf32, #tpu.memory_space<vmem>>, %arg4: memref<9x8x128xf32, #tpu.memory_space<vmem>>, %arg5: memref<320x1xf32, #tpu.memory_space<vmem>>, %arg6: memref<1x320x128xf32, #tpu.memory_space<vmem>>, %arg7: memref<1x1x8x128xf32, #tpu.memory_space<vmem>>) attributes {dimension_semantics = [#tpu.dimension_semantics<parallel>, #tpu.dimension_semantics<parallel>], iteration_bounds = array<i64: 2, 1>, scalar_prefetch = 0 : i64, scratch_operands = 0 : i64, tpu.core_type = #tpu.core_type<tc>, window_params = [{transform_indices = @transform_0, window_bounds = array<i64: 1, 320, 8>}, {transform_indices = @transform_1, window_bounds = array<i64: 1, 40, 8>}, {pipeline_mode = #tpu.pipeline_mode<synchronous>, transform_indices = @transform_2, window_bounds = array<i64: 9, 8, 128>}, {transform_indices = @transform_3, window_bounds = array<i64: 320, 1>}, {transform_indices = @transform_4, window_bounds = array<i64: 1, 320, 128>}, {transform_indices = @transform_5, window_bounds = array<i64: 1, 1, 8, 128>}]} {
    %c0 = arith.constant 0 : index
    %c0_0 = arith.constant 0 : index
    %c0_1 = arith.constant 0 : index
    %0 = vector.load %arg2[%c0, %c0_0, %c0_1] : memref<1x320x8xf32, #tpu.memory_space<vmem>>, vector<1x320x8xf32>
    %1 = vector.shape_cast %0 : vector<1x320x8xf32> to vector<320x8xf32>
    %c0_2 = arith.constant 0 : index
    %c0_3 = arith.constant 0 : index
    %c0_4 = arith.constant 0 : index
    %2 = vector.load %arg3[%c0_2, %c0_3, %c0_4] : memref<1x40x8xf32, #tpu.memory_space<vmem>>, vector<1x40x8xf32>
    %3 = vector.shape_cast %2 : vector<1x40x8xf32> to vector<40x8xf32>
    %4 = vector.extract_strided_slice %3 {offsets = [0, 0], sizes = [38, 8], strides = [1, 1]} : vector<40x8xf32> to vector<38x8xf32>
    %5 = tpu.concatenate %1, %4 in 0 : vector<320x8xf32>, vector<38x8xf32> -> vector<358x8xf32>
    %cst = arith.constant 0.000000e+00 : f32
    %6 = vector.broadcast %cst : f32 to vector<320x128xf32>
    %7 = vector.extract_strided_slice %5 {offsets = [0, 0], sizes = [320, 8], strides = [1, 1]} : vector<358x8xf32> to vector<320x8xf32>
    %c0_5 = arith.constant 0 : index
    %c0_6 = arith.constant 0 : index
    %c0_7 = arith.constant 0 : index
    %8 = vector.load %arg4[%c0_5, %c0_6, %c0_7] : memref<9x8x128xf32, #tpu.memory_space<vmem>>, vector<1x8x128xf32>
    %9 = vector.shape_cast %8 : vector<1x8x128xf32> to vector<8x128xf32>
    %cst_8 = arith.constant dense<0.000000e+00> : vector<320x128xf32>
    %10 = tpu.matmul %7, %9, %cst_8 {dimension_numbers = #tpu.dot_dimension_numbers<[1], [0], [0], [1], [0, 0, 1, 1], [], []>} : vector<320x8xf32>, vector<8x128xf32>, vector<320x128xf32> -> vector<320x128xf32>
    %11 = arith.addf %6, %10 : vector<320x128xf32>
    %12 = vector.extract_strided_slice %5 {offsets = [1, 0], sizes = [320, 8], strides = [1, 1]} : vector<358x8xf32> to vector<320x8xf32>
    %c1 = arith.constant 1 : index
    %c0_9 = arith.constant 0 : index
    %c0_10 = arith.constant 0 : index
    %13 = vector.load %arg4[%c1, %c0_9, %c0_10] : memref<9x8x128xf32, #tpu.memory_space<vmem>>, vector<1x8x128xf32>
    %14 = vector.shape_cast %13 : vector<1x8x128xf32> to vector<8x128xf32>
    %cst_11 = arith.constant dense<0.000000e+00> : vector<320x128xf32>
    %15 = tpu.matmul %12, %14, %cst_11 {dimension_numbers = #tpu.dot_dimension_numbers<[1], [0], [0], [1], [0, 0, 1, 1], [], []>} : vector<320x8xf32>, vector<8x128xf32>, vector<320x128xf32> -> vector<320x128xf32>
    %16 = arith.addf %11, %15 : vector<320x128xf32>
    %17 = vector.extract_strided_slice %5 {offsets = [2, 0], sizes = [320, 8], strides = [1, 1]} : vector<358x8xf32> to vector<320x8xf32>
    %c2 = arith.constant 2 : index
    %c0_12 = arith.constant 0 : index
    %c0_13 = arith.constant 0 : index
    %18 = vector.load %arg4[%c2, %c0_12, %c0_13] : memref<9x8x128xf32, #tpu.memory_space<vmem>>, vector<1x8x128xf32>
    %19 = vector.shape_cast %18 : vector<1x8x128xf32> to vector<8x128xf32>
    %cst_14 = arith.constant dense<0.000000e+00> : vector<320x128xf32>
    %20 = tpu.matmul %17, %19, %cst_14 {dimension_numbers = #tpu.dot_dimension_numbers<[1], [0], [0], [1], [0, 0, 1, 1], [], []>} : vector<320x8xf32>, vector<8x128xf32>, vector<320x128xf32> -> vector<320x128xf32>
    %21 = arith.addf %16, %20 : vector<320x128xf32>
    %22 = vector.extract_strided_slice %5 {offsets = [18, 0], sizes = [320, 8], strides = [1, 1]} : vector<358x8xf32> to vector<320x8xf32>
    %c3 = arith.constant 3 : index
    %c0_15 = arith.constant 0 : index
    %c0_16 = arith.constant 0 : index
    %23 = vector.load %arg4[%c3, %c0_15, %c0_16] : memref<9x8x128xf32, #tpu.memory_space<vmem>>, vector<1x8x128xf32>
    %24 = vector.shape_cast %23 : vector<1x8x128xf32> to vector<8x128xf32>
    %cst_17 = arith.constant dense<0.000000e+00> : vector<320x128xf32>
    %25 = tpu.matmul %22, %24, %cst_17 {dimension_numbers = #tpu.dot_dimension_numbers<[1], [0], [0], [1], [0, 0, 1, 1], [], []>} : vector<320x8xf32>, vector<8x128xf32>, vector<320x128xf32> -> vector<320x128xf32>
    %26 = arith.addf %21, %25 : vector<320x128xf32>
    %27 = vector.extract_strided_slice %5 {offsets = [19, 0], sizes = [320, 8], strides = [1, 1]} : vector<358x8xf32> to vector<320x8xf32>
    %c4 = arith.constant 4 : index
    %c0_18 = arith.constant 0 : index
    %c0_19 = arith.constant 0 : index
    %28 = vector.load %arg4[%c4, %c0_18, %c0_19] : memref<9x8x128xf32, #tpu.memory_space<vmem>>, vector<1x8x128xf32>
    %29 = vector.shape_cast %28 : vector<1x8x128xf32> to vector<8x128xf32>
    %cst_20 = arith.constant dense<0.000000e+00> : vector<320x128xf32>
    %30 = tpu.matmul %27, %29, %cst_20 {dimension_numbers = #tpu.dot_dimension_numbers<[1], [0], [0], [1], [0, 0, 1, 1], [], []>} : vector<320x8xf32>, vector<8x128xf32>, vector<320x128xf32> -> vector<320x128xf32>
    %31 = arith.addf %26, %30 : vector<320x128xf32>
    %32 = vector.extract_strided_slice %5 {offsets = [20, 0], sizes = [320, 8], strides = [1, 1]} : vector<358x8xf32> to vector<320x8xf32>
    %c5 = arith.constant 5 : index
    %c0_21 = arith.constant 0 : index
    %c0_22 = arith.constant 0 : index
    %33 = vector.load %arg4[%c5, %c0_21, %c0_22] : memref<9x8x128xf32, #tpu.memory_space<vmem>>, vector<1x8x128xf32>
    %34 = vector.shape_cast %33 : vector<1x8x128xf32> to vector<8x128xf32>
    %cst_23 = arith.constant dense<0.000000e+00> : vector<320x128xf32>
    %35 = tpu.matmul %32, %34, %cst_23 {dimension_numbers = #tpu.dot_dimension_numbers<[1], [0], [0], [1], [0, 0, 1, 1], [], []>} : vector<320x8xf32>, vector<8x128xf32>, vector<320x128xf32> -> vector<320x128xf32>
    %36 = arith.addf %31, %35 : vector<320x128xf32>
    %37 = vector.extract_strided_slice %5 {offsets = [36, 0], sizes = [320, 8], strides = [1, 1]} : vector<358x8xf32> to vector<320x8xf32>
    %c6 = arith.constant 6 : index
    %c0_24 = arith.constant 0 : index
    %c0_25 = arith.constant 0 : index
    %38 = vector.load %arg4[%c6, %c0_24, %c0_25] : memref<9x8x128xf32, #tpu.memory_space<vmem>>, vector<1x8x128xf32>
    %39 = vector.shape_cast %38 : vector<1x8x128xf32> to vector<8x128xf32>
    %cst_26 = arith.constant dense<0.000000e+00> : vector<320x128xf32>
    %40 = tpu.matmul %37, %39, %cst_26 {dimension_numbers = #tpu.dot_dimension_numbers<[1], [0], [0], [1], [0, 0, 1, 1], [], []>} : vector<320x8xf32>, vector<8x128xf32>, vector<320x128xf32> -> vector<320x128xf32>
    %41 = arith.addf %36, %40 : vector<320x128xf32>
    %42 = vector.extract_strided_slice %5 {offsets = [37, 0], sizes = [320, 8], strides = [1, 1]} : vector<358x8xf32> to vector<320x8xf32>
    %c7 = arith.constant 7 : index
    %c0_27 = arith.constant 0 : index
    %c0_28 = arith.constant 0 : index
    %43 = vector.load %arg4[%c7, %c0_27, %c0_28] : memref<9x8x128xf32, #tpu.memory_space<vmem>>, vector<1x8x128xf32>
    %44 = vector.shape_cast %43 : vector<1x8x128xf32> to vector<8x128xf32>
    %cst_29 = arith.constant dense<0.000000e+00> : vector<320x128xf32>
    %45 = tpu.matmul %42, %44, %cst_29 {dimension_numbers = #tpu.dot_dimension_numbers<[1], [0], [0], [1], [0, 0, 1, 1], [], []>} : vector<320x8xf32>, vector<8x128xf32>, vector<320x128xf32> -> vector<320x128xf32>
    %46 = arith.addf %41, %45 : vector<320x128xf32>
    %47 = vector.extract_strided_slice %5 {offsets = [38, 0], sizes = [320, 8], strides = [1, 1]} : vector<358x8xf32> to vector<320x8xf32>
    %c8 = arith.constant 8 : index
    %c0_30 = arith.constant 0 : index
    %c0_31 = arith.constant 0 : index
    %48 = vector.load %arg4[%c8, %c0_30, %c0_31] : memref<9x8x128xf32, #tpu.memory_space<vmem>>, vector<1x8x128xf32>
    %49 = vector.shape_cast %48 : vector<1x8x128xf32> to vector<8x128xf32>
    %cst_32 = arith.constant dense<0.000000e+00> : vector<320x128xf32>
    %50 = tpu.matmul %47, %49, %cst_32 {dimension_numbers = #tpu.dot_dimension_numbers<[1], [0], [0], [1], [0, 0, 1, 1], [], []>} : vector<320x8xf32>, vector<8x128xf32>, vector<320x128xf32> -> vector<320x128xf32>
    %51 = arith.addf %46, %50 : vector<320x128xf32>
    %c0_33 = arith.constant 0 : index
    %c0_34 = arith.constant 0 : index
    %52 = vector.load %arg5[%c0_33, %c0_34] : memref<320x1xf32, #tpu.memory_space<vmem>>, vector<320x1xf32>
    %53 = vector.broadcast %52 : vector<320x1xf32> to vector<320x128xf32>
    %54 = arith.mulf %51, %53 : vector<320x128xf32>
    %c0_35 = arith.constant 0 : index
    %c0_36 = arith.constant 0 : index
    %c0_37 = arith.constant 0 : index
    %55 = vector.load %arg6[%c0_35, %c0_36, %c0_37] : memref<1x320x128xf32, #tpu.memory_space<vmem>>, vector<1x320x128xf32>
    %56 = vector.shape_cast %55 : vector<1x320x128xf32> to vector<320x128xf32>
    %57 = vector.shape_cast %54 : vector<320x128xf32> to vector<1x320x128xf32>
    tpu.vector_store %arg6[%c0_35, %c0_36, %c0_37], %57 {strides = array<i32>} : memref<1x320x128xf32, #tpu.memory_space<vmem>>, vector<1x320x128xf32>,
    %cst_38 = arith.constant dense<0.000000e+00> : vector<128xf32>
    %58 = vector.multi_reduction <add>, %54, %cst_38 [0] : vector<320x128xf32> to vector<128xf32>
    %59 = vector.shape_cast %58 : vector<128xf32> to vector<1x128xf32>
    %60 = arith.mulf %54, %54 : vector<320x128xf32>
    %cst_39 = arith.constant dense<0.000000e+00> : vector<128xf32>
    %61 = vector.multi_reduction <add>, %60, %cst_39 [0] : vector<320x128xf32> to vector<128xf32>
    %62 = vector.shape_cast %61 : vector<128xf32> to vector<1x128xf32>
    %cst_40 = arith.constant 0.000000e+00 : f32
    %63 = vector.broadcast %cst_40 : f32 to vector<6x128xf32>
    %64 = tpu.concatenate %59, %62, %63 in 0 : vector<1x128xf32>, vector<1x128xf32>, vector<6x128xf32> -> vector<8x128xf32>
    %c0_41 = arith.constant 0 : index
    %c0_42 = arith.constant 0 : index
    %c0_43 = arith.constant 0 : index
    %c0_44 = arith.constant 0 : index
    %65 = vector.load %arg7[%c0_41, %c0_42, %c0_43, %c0_44] : memref<1x1x8x128xf32, #tpu.memory_space<vmem>>, vector<1x1x8x128xf32>
    %66 = vector.shape_cast %65 : vector<1x1x8x128xf32> to vector<8x128xf32>
    %67 = vector.shape_cast %64 : vector<8x128xf32> to vector<1x1x8x128xf32>
    tpu.vector_store %arg7[%c0_41, %c0_42, %c0_43, %c0_44], %67 {strides = array<i32>} : memref<1x1x8x128xf32, #tpu.memory_space<vmem>>, vector<1x1x8x128xf32>,
    return
  }
  func.func @transform_0(%arg0: i32, %arg1: i32) -> (i32, i32, i32) {
    %c0_i32 = arith.constant 0 : i32
    %c0_i32_0 = arith.constant 0 : i32
    return %arg0, %arg1, %c0_i32 : i32, i32, i32
  }
  func.func @transform_1(%arg0: i32, %arg1: i32) -> (i32, i32, i32) {
    %c1_i32 = arith.constant 1 : i32
    %0 = arith.addi %arg1, %c1_i32 : i32
    %c8_i32 = arith.constant 8 : i32
    %1 = arith.muli %0, %c8_i32 : i32
    %c0_i32 = arith.constant 0 : i32
    %c0_i32_0 = arith.constant 0 : i32
    return %arg0, %1, %c0_i32 : i32, i32, i32
  }
  func.func @transform_2(%arg0: i32, %arg1: i32) -> (i32, i32, i32) {
    %c0_i32 = arith.constant 0 : i32
    %c0_i32_0 = arith.constant 0 : i32
    %c0_i32_1 = arith.constant 0 : i32
    %c0_i32_2 = arith.constant 0 : i32
    return %c0_i32, %c0_i32_0, %c0_i32_1 : i32, i32, i32
  }
  func.func @transform_3(%arg0: i32, %arg1: i32) -> (i32, i32) {
    %c0_i32 = arith.constant 0 : i32
    %c0_i32_0 = arith.constant 0 : i32
    return %arg1, %c0_i32 : i32, i32
  }
  func.func @transform_4(%arg0: i32, %arg1: i32) -> (i32, i32, i32) {
    %c0_i32 = arith.constant 0 : i32
    %c0_i32_0 = arith.constant 0 : i32
    return %arg0, %arg1, %c0_i32 : i32, i32, i32
  }
  func.func @transform_5(%arg0: i32, %arg1: i32) -> (i32, i32, i32, i32) {
    %c0_i32 = arith.constant 0 : i32
    %c0_i32_0 = arith.constant 0 : i32
    %c0_i32_1 = arith.constant 0 : i32
    return %arg0, %arg1, %c0_i32, %c0_i32_0 : i32, i32, i32, i32
  }
}

module attributes {stable_mosaic.version = 11 : i64} {
  func.func @bn_relu_kernel(%arg0: i32, %arg1: memref<640x128xf32, #tpu.memory_space<vmem>>, %arg2: memref<1x128xf32, #tpu.memory_space<vmem>>, %arg3: memref<1x128xf32, #tpu.memory_space<vmem>>, %arg4: memref<640x128xf32, #tpu.memory_space<vmem>>) attributes {dimension_semantics = [#tpu.dimension_semantics<parallel>], iteration_bounds = array<i64: 1>, scalar_prefetch = 0 : i64, scratch_operands = 0 : i64, tpu.core_type = #tpu.core_type<tc>, window_params = [{transform_indices = @transform_0, window_bounds = array<i64: 640, 128>}, {pipeline_mode = #tpu.pipeline_mode<synchronous>, transform_indices = @transform_1, window_bounds = array<i64: 1, 128>}, {pipeline_mode = #tpu.pipeline_mode<synchronous>, transform_indices = @transform_2, window_bounds = array<i64: 1, 128>}, {transform_indices = @transform_3, window_bounds = array<i64: 640, 128>}]} {
    %c0 = arith.constant 0 : index
    %c0_0 = arith.constant 0 : index
    %0 = vector.load %arg1[%c0, %c0_0] : memref<640x128xf32, #tpu.memory_space<vmem>>, vector<640x128xf32>
    %c0_1 = arith.constant 0 : index
    %c0_2 = arith.constant 0 : index
    %1 = vector.load %arg2[%c0_1, %c0_2] : memref<1x128xf32, #tpu.memory_space<vmem>>, vector<1x128xf32>
    %2 = vector.broadcast %1 : vector<1x128xf32> to vector<640x128xf32>
    %3 = arith.mulf %0, %2 : vector<640x128xf32>
    %c0_3 = arith.constant 0 : index
    %c0_4 = arith.constant 0 : index
    %4 = vector.load %arg3[%c0_3, %c0_4] : memref<1x128xf32, #tpu.memory_space<vmem>>, vector<1x128xf32>
    %5 = vector.broadcast %4 : vector<1x128xf32> to vector<640x128xf32>
    %6 = arith.addf %3, %5 : vector<640x128xf32>
    %cst = arith.constant 0.000000e+00 : f32
    %7 = vector.broadcast %cst : f32 to vector<640x128xf32>
    %8 = arith.maximumf %6, %7 : vector<640x128xf32>
    %c0_5 = arith.constant 0 : index
    %c0_6 = arith.constant 0 : index
    %9 = vector.load %arg4[%c0_5, %c0_6] : memref<640x128xf32, #tpu.memory_space<vmem>>, vector<640x128xf32>
    tpu.vector_store %arg4[%c0_5, %c0_6], %8 {strides = array<i32>} : memref<640x128xf32, #tpu.memory_space<vmem>>, vector<640x128xf32>,
    return
  }
  func.func @transform_0(%arg0: i32) -> (i32, i32) {
    %c0_i32 = arith.constant 0 : i32
    %c0_i32_0 = arith.constant 0 : i32
    return %arg0, %c0_i32 : i32, i32
  }
  func.func @transform_1(%arg0: i32) -> (i32, i32) {
    %c0_i32 = arith.constant 0 : i32
    %c0_i32_0 = arith.constant 0 : i32
    %c0_i32_1 = arith.constant 0 : i32
    return %c0_i32, %c0_i32_0 : i32, i32
  }
  func.func @transform_2(%arg0: i32) -> (i32, i32) {
    %c0_i32 = arith.constant 0 : i32
    %c0_i32_0 = arith.constant 0 : i32
    %c0_i32_1 = arith.constant 0 : i32
    return %c0_i32, %c0_i32_0 : i32, i32
  }
  func.func @transform_3(%arg0: i32) -> (i32, i32) {
    %c0_i32 = arith.constant 0 : i32
    %c0_i32_0 = arith.constant 0 : i32
    return %arg0, %c0_i32 : i32, i32
  }
}

</mosaic_0001>

<llo_original>
// kernel: conv_bn_relu.3
$region0: #{conv_bn_relu.3}
  #allocation0 [shape = 'u32[]', space=smem, size = 0x4, offset = 0x4, fixed_abs, tag = 'smem constant byte address 0x4 - core index']
  #allocation1 [shape = 'u32[144,128]{1,0:T(1,128)}', space=vmem, size = 0x12000, scoped, tag = 'internal scratch']
  %s0 = inlined_call_operand.vmem [shape: f32[640,128], index: 0, kind: input, shape index: {}, may-alias: {0,3}]
  %s1 = inlined_call_operand.vmem [shape: f32[1,128], index: 1, kind: input, shape index: {}]
  %s2 = inlined_call_operand.vmem [shape: f32[1,128], index: 2, kind: input, shape index: {}]
  %s3 = inlined_call_operand.vmem [shape: f32[640,128], index: 3, kind: output, shape index: {}, may-alias: {0,3}]
  %s4 = sld [smem:[#allocation0]]
  $region22: #{conv_bn_relu.3} parent=0
    _
  %s6 = ssub.s32 1, %s4
  %s7 = scalar_select 0, %s6, %s4
  // Predicated region
  $region2: #{conv_bn_relu.3} parent=0 // pred_check
    _
  $region3: #{conv_bn_relu.3} parent=0 // pred_check_branch
    %9 = sbr.rel (0) target = $region5
  $region4: #{conv_bn_relu.3} parent=0 // pred_region
    _
  $region5: #{conv_bn_relu.3} parent=0 // pred_fallthru
    _
  // Predicated region
  $region6: #{conv_bn_relu.3} parent=0 // pred_check
    _
  $region7: #{conv_bn_relu.3} parent=0 // pred_check_branch
    %11 = sbr.rel (0) target = $region9
  $region8: #{conv_bn_relu.3} parent=0 // pred_region
    _
  $region9: #{conv_bn_relu.3} parent=0 // pred_fallthru
    _
  // Predicated region
  $region10: #{conv_bn_relu.3} parent=0 // pred_check
    _
  $region11: #{conv_bn_relu.3} parent=0 // pred_check_branch
    %13 = sbr.rel (0) target = $region13
  $region12: #{conv_bn_relu.3} parent=0 // pred_region
    _
  $region13: #{conv_bn_relu.3} parent=0 // pred_fallthru
    _
  %v14 = vld [vmem:[%s0] sm:$0xff]
  %v15 = vld [vmem:[%s0 + $0x8] sm:$0xff]
  %v16 = vld [vmem:[%s0 + $0x10] sm:$0xff]
  %v17 = vld [vmem:[%s0 + $0x18] sm:$0xff]
  %v18 = vld [vmem:[%s0 + $0x20] sm:$0xff]
  %v19 = vld [vmem:[%s0 + $0x28] sm:$0xff]
  %v20 = vld [vmem:[%s0 + $0x30] sm:$0xff]
  %v21 = vld [vmem:[%s0 + $0x38] sm:$0xff]
  %v22 = vld [vmem:[%s0 + $0x40] sm:$0xff]
  %v23 = vld [vmem:[%s0 + $0x48] sm:$0xff]
  %v24 = vld [vmem:[%s0 + $0x50] sm:$0xff]
  %v25 = vld [vmem:[%s0 + $0x58] sm:$0xff]
  %v26 = vld [vmem:[%s0 + $0x60] sm:$0xff]
  %v27 = vld [vmem:[%s0 + $0x68] sm:$0xff]
  %v28 = vld [vmem:[%s0 + $0x70] sm:$0xff]
  %v29 = vld [vmem:[%s0 + $0x78] sm:$0xff]
  %v30 = vld [vmem:[%s0 + $0x80] sm:$0xff]
  %v31 = vld [vmem:[%s0 + $0x88] sm:$0xff]
  %v32 = vld [vmem:[%s0 + $0x90] sm:$0xff]
  %v33 = vld [vmem:[%s0 + $0x98] sm:$0xff]
  %v34 = vld [vmem:[%s0 + $0xa0] sm:$0xff]
  %v35 = vld [vmem:[%s0 + $0xa8] sm:$0xff]
  %v36 = vld [vmem:[%s0 + $0xb0] sm:$0xff]
  %v37 = vld [vmem:[%s0 + $0xb8] sm:$0xff]
  %v38 = vld [vmem:[%s0 + $0xc0] sm:$0xff]
  %v39 = vld [vmem:[%s0 + $0xc8] sm:$0xff]
  %v40 = vld [vmem:[%s0 + $0xd0] sm:$0xff]
  %v41 = vld [vmem:[%s0 + $0xd8] sm:$0xff]
  %v42 = vld [vmem:[%s0 + $0xe0] sm:$0xff]
  %v43 = vld [vmem:[%s0 + $0xe8] sm:$0xff]
  %v44 = vld [vmem:[%s0 + $0xf0] sm:$0xff]
  %v45 = vld [vmem:[%s0 + $0xf8] sm:$0xff]
  %v46 = vld [vmem:[%s0 + $0x100] sm:$0xff]
  %v47 = vld [vmem:[%s0 + $0x108] sm:$0xff]
  %v48 = vld [vmem:[%s0 + $0x110] sm:$0xff]
  %v49 = vld [vmem:[%s0 + $0x118] sm:$0xff]
  %v50 = vld [vmem:[%s0 + $0x120] sm:$0xff]
  %v51 = vld [vmem:[%s0 + $0x128] sm:$0xff]
  %v52 = vld [vmem:[%s0 + $0x130] sm:$0xff]
  %v53 = vld [vmem:[%s0 + $0x138] sm:$0xff]
  %v54 = vld [vmem:[%s0 + $0x140] sm:$0xff]
  %v55 = vld [vmem:[%s0 + $0x148] sm:$0xff]
  %v56 = vld [vmem:[%s0 + $0x150] sm:$0xff]
  %v57 = vld [vmem:[%s0 + $0x158] sm:$0xff]
  %v58 = vld [vmem:[%s0 + $0x160] sm:$0xff]
  %v59 = vld [vmem:[%s0 + $0x168] sm:$0xff]
  %v60 = vld [vmem:[%s0 + $0x170] sm:$0xff]
  %v61 = vld [vmem:[%s0 + $0x178] sm:$0xff]
  %v62 = vld [vmem:[%s0 + $0x180] sm:$0xff]
  %v63 = vld [vmem:[%s0 + $0x188] sm:$0xff]
  %v64 = vld [vmem:[%s0 + $0x190] sm:$0xff]
  %v65 = vld [vmem:[%s0 + $0x198] sm:$0xff]
  %v66 = vld [vmem:[%s0 + $0x1a0] sm:$0xff]
  %v67 = vld [vmem:[%s0 + $0x1a8] sm:$0xff]
  %v68 = vld [vmem:[%s0 + $0x1b0] sm:$0xff]
  %v69 = vld [vmem:[%s0 + $0x1b8] sm:$0xff]
  %v70 = vld [vmem:[%s0 + $0x1c0] sm:$0xff]
  %v71 = vld [vmem:[%s0 + $0x1c8] sm:$0xff]
  %v72 = vld [vmem:[%s0 + $0x1d0] sm:$0xff]
  %v73 = vld [vmem:[%s0 + $0x1d8] sm:$0xff]
  %v74 = vld [vmem:[%s0 + $0x1e0] sm:$0xff]
  %v75 = vld [vmem:[%s0 + $0x1e8] sm:$0xff]
  %v76 = vld [vmem:[%s0 + $0x1f0] sm:$0xff]
  %v77 = vld [vmem:[%s0 + $0x1f8] sm:$0xff]
  %v78 = vld [vmem:[%s0 + $0x200] sm:$0xff]
  %v79 = vld [vmem:[%s0 + $0x208] sm:$0xff]
  %v80 = vld [vmem:[%s0 + $0x210] sm:$0xff]
  %v81 = vld [vmem:[%s0 + $0x218] sm:$0xff]
  %v82 = vld [vmem:[%s0 + $0x220] sm:$0xff]
  %v83 = vld [vmem:[%s0 + $0x228] sm:$0xff]
  %v84 = vld [vmem:[%s0 + $0x230] sm:$0xff]
  %v85 = vld [vmem:[%s0 + $0x238] sm:$0xff]
  %v86 = vld [vmem:[%s0 + $0x240] sm:$0xff]
  %v87 = vld [vmem:[%s0 + $0x248] sm:$0xff]
  %v88 = vld [vmem:[%s0 + $0x250] sm:$0xff]
  %v89 = vld [vmem:[%s0 + $0x258] sm:$0xff]
  %v90 = vld [vmem:[%s0 + $0x260] sm:$0xff]
  %v91 = vld [vmem:[%s0 + $0x268] sm:$0xff]
  %v92 = vld [vmem:[%s0 + $0x270] sm:$0xff]
  %v93 = vld [vmem:[%s0 + $0x278] sm:$0xff]
  %v94 = vld [vmem:[%s1] sm:$0x1]
  %v96 = vlaneseq
  %v97 = vshrl.u32 %v96, 7
  %v98 = vsub.s32 0, %v97
  %v99 = vrot.slane %v94, %v98
  %v101 = vmul.f32 %v14, %v99
  %v102 = vmul.f32 %v15, %v99
  %v103 = vmul.f32 %v16, %v99
  %v104 = vmul.f32 %v17, %v99
  %v105 = vmul.f32 %v18, %v99
  %v106 = vmul.f32 %v19, %v99
  %v107 = vmul.f32 %v20, %v99
  %v108 = vmul.f32 %v21, %v99
  %v109 = vmul.f32 %v22, %v99
  %v110 = vmul.f32 %v23, %v99
  %v111 = vmul.f32 %v24, %v99
  %v112 = vmul.f32 %v25, %v99
  %v113 = vmul.f32 %v26, %v99
  %v114 = vmul.f32 %v27, %v99
  %v115 = vmul.f32 %v28, %v99
  %v116 = vmul.f32 %v29, %v99
  %v117 = vmul.f32 %v30, %v99
  %v118 = vmul.f32 %v31, %v99
  %v119 = vmul.f32 %v32, %v99
  %v120 = vmul.f32 %v33, %v99
  %v121 = vmul.f32 %v34, %v99
  %v122 = vmul.f32 %v35, %v99
  %v123 = vmul.f32 %v36, %v99
  %v124 = vmul.f32 %v37, %v99
  %v125 = vmul.f32 %v38, %v99
  %v126 = vmul.f32 %v39, %v99
  %v127 = vmul.f32 %v40, %v99
  %v128 = vmul.f32 %v41, %v99
  %v129 = vmul.f32 %v42, %v99
  %v130 = vmul.f32 %v43, %v99
  %v131 = vmul.f32 %v44, %v99
  %v132 = vmul.f32 %v45, %v99
  %v133 = vmul.f32 %v46, %v99
  %v134 = vmul.f32 %v47, %v99
  %v135 = vmul.f32 %v48, %v99
  %v136 = vmul.f32 %v49, %v99
  %v137 = vmul.f32 %v50, %v99
  %v138 = vmul.f32 %v51, %v99
  %v139 = vmul.f32 %v52, %v99
  %v140 = vmul.f32 %v53, %v99
  %v141 = vmul.f32 %v54, %v99
  %v142 = vmul.f32 %v55, %v99
  %v143 = vmul.f32 %v56, %v99
  %v144 = vmul.f32 %v57, %v99
  %v145 = vmul.f32 %v58, %v99
  %v146 = vmul.f32 %v59, %v99
  %v147 = vmul.f32 %v60, %v99
  %v148 = vmul.f32 %v61, %v99
  %v149 = vmul.f32 %v62, %v99
  %v150 = vmul.f32 %v63, %v99
  %v151 = vmul.f32 %v64, %v99
  %v152 = vmul.f32 %v65, %v99
  %v153 = vmul.f32 %v66, %v99
  %v154 = vmul.f32 %v67, %v99
  %v155 = vmul.f32 %v68, %v99
  %v156 = vmul.f32 %v69, %v99
  %v157 = vmul.f32 %v70, %v99
  %v158 = vmul.f32 %v71, %v99
  %v159 = vmul.f32 %v72, %v99
  %v160 = vmul.f32 %v73, %v99
  %v161 = vmul.f32 %v74, %v99
  %v162 = vmul.f32 %v75, %v99
  %v163 = vmul.f32 %v76, %v99
  %v164 = vmul.f32 %v77, %v99
  %v165 = vmul.f32 %v78, %v99
  %v166 = vmul.f32 %v79, %v99
  %v167 = vmul.f32 %v80, %v99
  %v168 = vmul.f32 %v81, %v99
  %v169 = vmul.f32 %v82, %v99
  %v170 = vmul.f32 %v83, %v99
  %v171 = vmul.f32 %v84, %v99
  %v172 = vmul.f32 %v85, %v99
  %v173 = vmul.f32 %v86, %v99
  %v174 = vmul.f32 %v87, %v99
  %v175 = vmul.f32 %v88, %v99
  %v176 = vmul.f32 %v89, %v99
  %v177 = vmul.f32 %v90, %v99
  %v178 = vmul.f32 %v91, %v99
  %v179 = vmul.f32 %v92, %v99
  %v180 = vmul.f32 %v93, %v99
  %v181 = vld [vmem:[%s2] sm:$0x1]
  %v183 = vlaneseq
  %v184 = vshrl.u32 %v183, 7
  %v185 = vsub.s32 0, %v184
  %v186 = vrot.slane %v181, %v185
  %v188 = vadd.f32 %v101, %v186
  %v189 = vadd.f32 %v102, %v186
  %v190 = vadd.f32 %v103, %v186
  %v191 = vadd.f32 %v104, %v186
  %v192 = vadd.f32 %v105, %v186
  %v193 = vadd.f32 %v106, %v186
  %v194 = vadd.f32 %v107, %v186
  %v195 = vadd.f32 %v108, %v186
  %v196 = vadd.f32 %v109, %v186
  %v197 = vadd.f32 %v110, %v186
  %v198 = vadd.f32 %v111, %v186
  %v199 = vadd.f32 %v112, %v186
  %v200 = vadd.f32 %v113, %v186
  %v201 = vadd.f32 %v114, %v186
  %v202 = vadd.f32 %v115, %v186
  %v203 = vadd.f32 %v116, %v186
  %v204 = vadd.f32 %v117, %v186
  %v205 = vadd.f32 %v118, %v186
  %v206 = vadd.f32 %v119, %v186
  %v207 = vadd.f32 %v120, %v186
  %v208 = vadd.f32 %v121, %v186
  %v209 = vadd.f32 %v122, %v186
  %v210 = vadd.f32 %v123, %v186
  %v211 = vadd.f32 %v124, %v186
  %v212 = vadd.f32 %v125, %v186
  %v213 = vadd.f32 %v126, %v186
  %v214 = vadd.f32 %v127, %v186
  %v215 = vadd.f32 %v128, %v186
  %v216 = vadd.f32 %v129, %v186
  %v217 = vadd.f32 %v130, %v186
  %v218 = vadd.f32 %v131, %v186
  %v219 = vadd.f32 %v132, %v186
  %v220 = vadd.f32 %v133, %v186
  %v221 = vadd.f32 %v134, %v186
  %v222 = vadd.f32 %v135, %v186
  %v223 = vadd.f32 %v136, %v186
  %v224 = vadd.f32 %v137, %v186
  %v225 = vadd.f32 %v138, %v186
  %v226 = vadd.f32 %v139, %v186
  %v227 = vadd.f32 %v140, %v186
  %v228 = vadd.f32 %v141, %v186
  %v229 = vadd.f32 %v142, %v186
  %v230 = vadd.f32 %v143, %v186
  %v231 = vadd.f32 %v144, %v186
  %v232 = vadd.f32 %v145, %v186
  %v233 = vadd.f32 %v146, %v186
  %v234 = vadd.f32 %v147, %v186
  %v235 = vadd.f32 %v148, %v186
  %v236 = vadd.f32 %v149, %v186
  %v237 = vadd.f32 %v150, %v186
  %v238 = vadd.f32 %v151, %v186
  %v239 = vadd.f32 %v152, %v186
  %v240 = vadd.f32 %v153, %v186
  %v241 = vadd.f32 %v154, %v186
  %v242 = vadd.f32 %v155, %v186
  %v243 = vadd.f32 %v156, %v186
  %v244 = vadd.f32 %v157, %v186
  %v245 = vadd.f32 %v158, %v186
  %v246 = vadd.f32 %v159, %v186
  %v247 = vadd.f32 %v160, %v186
  %v248 = vadd.f32 %v161, %v186
  %v249 = vadd.f32 %v162, %v186
  %v250 = vadd.f32 %v163, %v186
  %v251 = vadd.f32 %v164, %v186
  %v252 = vadd.f32 %v165, %v186
  %v253 = vadd.f32 %v166, %v186
  %v254 = vadd.f32 %v167, %v186
  %v255 = vadd.f32 %v168, %v186
  %v256 = vadd.f32 %v169, %v186
  %v257 = vadd.f32 %v170, %v186
  %v258 = vadd.f32 %v171, %v186
  %v259 = vadd.f32 %v172, %v186
  %v260 = vadd.f32 %v173, %v186
  %v261 = vadd.f32 %v174, %v186
  %v262 = vadd.f32 %v175, %v186
  %v263 = vadd.f32 %v176, %v186
  %v264 = vadd.f32 %v177, %v186
  %v265 = vadd.f32 %v178, %v186
  %v266 = vadd.f32 %v179, %v186
  %v267 = vadd.f32 %v180, %v186
  %v268 = vmax.f32 %v188, 0.0
  %v269 = vmax.f32 %v189, 0.0
  %v270 = vmax.f32 %v190, 0.0
  %v271 = vmax.f32 %v191, 0.0
  %v272 = vmax.f32 %v192, 0.0
  %v273 = vmax.f32 %v193, 0.0
  %v274 = vmax.f32 %v194, 0.0
  %v275 = vmax.f32 %v195, 0.0
  %v276 = vmax.f32 %v196, 0.0
  %v277 = vmax.f32 %v197, 0.0
  %v278 = vmax.f32 %v198, 0.0
  %v279 = vmax.f32 %v199, 0.0
  %v280 = vmax.f32 %v200, 0.0
  %v281 = vmax.f32 %v201, 0.0
  %v282 = vmax.f32 %v202, 0.0
  %v283 = vmax.f32 %v203, 0.0
  %v284 = vmax.f32 %v204, 0.0
  %v285 = vmax.f32 %v205, 0.0
  %v286 = vmax.f32 %v206, 0.0
  %v287 = vmax.f32 %v207, 0.0
  %v288 = vmax.f32 %v208, 0.0
  %v289 = vmax.f32 %v209, 0.0
  %v290 = vmax.f32 %v210, 0.0
  %v291 = vmax.f32 %v211, 0.0
  %v292 = vmax.f32 %v212, 0.0
  %v293 = vmax.f32 %v213, 0.0
  %v294 = vmax.f32 %v214, 0.0
  %v295 = vmax.f32 %v215, 0.0
  %v296 = vmax.f32 %v216, 0.0
  %v297 = vmax.f32 %v217, 0.0
  %v298 = vmax.f32 %v218, 0.0
  %v299 = vmax.f32 %v219, 0.0
  %v300 = vmax.f32 %v220, 0.0
  %v301 = vmax.f32 %v221, 0.0
  %v302 = vmax.f32 %v222, 0.0
  %v303 = vmax.f32 %v223, 0.0
  %v304 = vmax.f32 %v224, 0.0
  %v305 = vmax.f32 %v225, 0.0
  %v306 = vmax.f32 %v226, 0.0
  %v307 = vmax.f32 %v227, 0.0
  %v308 = vmax.f32 %v228, 0.0
  %v309 = vmax.f32 %v229, 0.0
  %v310 = vmax.f32 %v230, 0.0
  %v311 = vmax.f32 %v231, 0.0
  %v312 = vmax.f32 %v232, 0.0
  %v313 = vmax.f32 %v233, 0.0
  %v314 = vmax.f32 %v234, 0.0
  %v315 = vmax.f32 %v235, 0.0
  %v316 = vmax.f32 %v236, 0.0
  %v317 = vmax.f32 %v237, 0.0
  %v318 = vmax.f32 %v238, 0.0
  %v319 = vmax.f32 %v239, 0.0
  %v320 = vmax.f32 %v240, 0.0
  %v321 = vmax.f32 %v241, 0.0
  %v322 = vmax.f32 %v242, 0.0
  %v323 = vmax.f32 %v243, 0.0
  %v324 = vmax.f32 %v244, 0.0
  %v325 = vmax.f32 %v245, 0.0
  %v326 = vmax.f32 %v246, 0.0
  %v327 = vmax.f32 %v247, 0.0
  %v328 = vmax.f32 %v248, 0.0
  %v329 = vmax.f32 %v249, 0.0
  %v330 = vmax.f32 %v250, 0.0
  %v331 = vmax.f32 %v251, 0.0
  %v332 = vmax.f32 %v252, 0.0
  %v333 = vmax.f32 %v253, 0.0
  %v334 = vmax.f32 %v254, 0.0
  %v335 = vmax.f32 %v255, 0.0
  %v336 = vmax.f32 %v256, 0.0
  %v337 = vmax.f32 %v257, 0.0
  %v338 = vmax.f32 %v258, 0.0
  %v339 = vmax.f32 %v259, 0.0
  %v340 = vmax.f32 %v260, 0.0
  %v341 = vmax.f32 %v261, 0.0
  %v342 = vmax.f32 %v262, 0.0
  %v343 = vmax.f32 %v263, 0.0
  %v344 = vmax.f32 %v264, 0.0
  %v345 = vmax.f32 %v265, 0.0
  %v346 = vmax.f32 %v266, 0.0
  %v347 = vmax.f32 %v267, 0.0
  %348 = vst [vmem:[%s3] sm:$0xff] %v268
  %349 = vst [vmem:[%s3 + $0x8] sm:$0xff] %v269
  %350 = vst [vmem:[%s3 + $0x10] sm:$0xff] %v270
  %351 = vst [vmem:[%s3 + $0x18] sm:$0xff] %v271
  %352 = vst [vmem:[%s3 + $0x20] sm:$0xff] %v272
  %353 = vst [vmem:[%s3 + $0x28] sm:$0xff] %v273
  %354 = vst [vmem:[%s3 + $0x30] sm:$0xff] %v274
  %355 = vst [vmem:[%s3 + $0x38] sm:$0xff] %v275
  %356 = vst [vmem:[%s3 + $0x40] sm:$0xff] %v276
  %357 = vst [vmem:[%s3 + $0x48] sm:$0xff] %v277
  %358 = vst [vmem:[%s3 + $0x50] sm:$0xff] %v278
  %359 = vst [vmem:[%s3 + $0x58] sm:$0xff] %v279
  %360 = vst [vmem:[%s3 + $0x60] sm:$0xff] %v280
  %361 = vst [vmem:[%s3 + $0x68] sm:$0xff] %v281
  %362 = vst [vmem:[%s3 + $0x70] sm:$0xff] %v282
  %363 = vst [vmem:[%s3 + $0x78] sm:$0xff] %v283
  %364 = vst [vmem:[%s3 + $0x80] sm:$0xff] %v284
  %365 = vst [vmem:[%s3 + $0x88] sm:$0xff] %v285
  %366 = vst [vmem:[%s3 + $0x90] sm:$0xff] %v286
  %367 = vst [vmem:[%s3 + $0x98] sm:$0xff] %v287
  %368 = vst [vmem:[%s3 + $0xa0] sm:$0xff] %v288
  %369 = vst [vmem:[%s3 + $0xa8] sm:$0xff] %v289
  %370 = vst [vmem:[%s3 + $0xb0] sm:$0xff] %v290
  %371 = vst [vmem:[%s3 + $0xb8] sm:$0xff] %v291
  %372 = vst [vmem:[%s3 + $0xc0] sm:$0xff] %v292
  %373 = vst [vmem:[%s3 + $0xc8] sm:$0xff] %v293
  %374 = vst [vmem:[%s3 + $0xd0] sm:$0xff] %v294
  %375 = vst [vmem:[%s3 + $0xd8] sm:$0xff] %v295
  %376 = vst [vmem:[%s3 + $0xe0] sm:$0xff] %v296
  %377 = vst [vmem:[%s3 + $0xe8] sm:$0xff] %v297
  %378 = vst [vmem:[%s3 + $0xf0] sm:$0xff] %v298
  %379 = vst [vmem:[%s3 + $0xf8] sm:$0xff] %v299
  %380 = vst [vmem:[%s3 + $0x100] sm:$0xff] %v300
  %381 = vst [vmem:[%s3 + $0x108] sm:$0xff] %v301
  %382 = vst [vmem:[%s3 + $0x110] sm:$0xff] %v302
  %383 = vst [vmem:[%s3 + $0x118] sm:$0xff] %v303
  %384 = vst [vmem:[%s3 + $0x120] sm:$0xff] %v304
  %385 = vst [vmem:[%s3 + $0x128] sm:$0xff] %v305
  %386 = vst [vmem:[%s3 + $0x130] sm:$0xff] %v306
  %387 = vst [vmem:[%s3 + $0x138] sm:$0xff] %v307
  %388 = vst [vmem:[%s3 + $0x140] sm:$0xff] %v308
  %389 = vst [vmem:[%s3 + $0x148] sm:$0xff] %v309
  %390 = vst [vmem:[%s3 + $0x150] sm:$0xff] %v310
  %391 = vst [vmem:[%s3 + $0x158] sm:$0xff] %v311
  %392 = vst [vmem:[%s3 + $0x160] sm:$0xff] %v312
  %393 = vst [vmem:[%s3 + $0x168] sm:$0xff] %v313
  %394 = vst [vmem:[%s3 + $0x170] sm:$0xff] %v314
  %395 = vst [vmem:[%s3 + $0x178] sm:$0xff] %v315
  %396 = vst [vmem:[%s3 + $0x180] sm:$0xff] %v316
  %397 = vst [vmem:[%s3 + $0x188] sm:$0xff] %v317
  %398 = vst [vmem:[%s3 + $0x190] sm:$0xff] %v318
  %399 = vst [vmem:[%s3 + $0x198] sm:$0xff] %v319
  %400 = vst [vmem:[%s3 + $0x1a0] sm:$0xff] %v320
  %401 = vst [vmem:[%s3 + $0x1a8] sm:$0xff] %v321
  %402 = vst [vmem:[%s3 + $0x1b0] sm:$0xff] %v322
  %403 = vst [vmem:[%s3 + $0x1b8] sm:$0xff] %v323
  %404 = vst [vmem:[%s3 + $0x1c0] sm:$0xff] %v324
  %405 = vst [vmem:[%s3 + $0x1c8] sm:$0xff] %v325
  %406 = vst [vmem:[%s3 + $0x1d0] sm:$0xff] %v326
  %407 = vst [vmem:[%s3 + $0x1d8] sm:$0xff] %v327
  %408 = vst [vmem:[%s3 + $0x1e0] sm:$0xff] %v328
  %409 = vst [vmem:[%s3 + $0x1e8] sm:$0xff] %v329
  %410 = vst [vmem:[%s3 + $0x1f0] sm:$0xff] %v330
  %411 = vst [vmem:[%s3 + $0x1f8] sm:$0xff] %v331
  %412 = vst [vmem:[%s3 + $0x200] sm:$0xff] %v332
  %413 = vst [vmem:[%s3 + $0x208] sm:$0xff] %v333
  %414 = vst [vmem:[%s3 + $0x210] sm:$0xff] %v334
  %415 = vst [vmem:[%s3 + $0x218] sm:$0xff] %v335
  %416 = vst [vmem:[%s3 + $0x220] sm:$0xff] %v336
  %417 = vst [vmem:[%s3 + $0x228] sm:$0xff] %v337
  %418 = vst [vmem:[%s3 + $0x230] sm:$0xff] %v338
  %419 = vst [vmem:[%s3 + $0x238] sm:$0xff] %v339
  %420 = vst [vmem:[%s3 + $0x240] sm:$0xff] %v340
  %421 = vst [vmem:[%s3 + $0x248] sm:$0xff] %v341
  %422 = vst [vmem:[%s3 + $0x250] sm:$0xff] %v342
  %423 = vst [vmem:[%s3 + $0x258] sm:$0xff] %v343
  %424 = vst [vmem:[%s3 + $0x260] sm:$0xff] %v344
  %425 = vst [vmem:[%s3 + $0x268] sm:$0xff] %v345
  %426 = vst [vmem:[%s3 + $0x270] sm:$0xff] %v346
  %427 = vst [vmem:[%s3 + $0x278] sm:$0xff] %v347
  // Predicated region
  $region14: #{conv_bn_relu.3} parent=0 // pred_check
    _
  $region15: #{conv_bn_relu.3} parent=0 // pred_check_branch
    %429 = sbr.rel (0) target = $region17
  $region16: #{conv_bn_relu.3} parent=0 // pred_region
    _
  $region17: #{conv_bn_relu.3} parent=0 // pred_fallthru
    _
  // Predicated region
  $region18: #{conv_bn_relu.3} parent=0 // pred_check
    _
  $region19: #{conv_bn_relu.3} parent=0 // pred_check_branch
    %431 = sbr.rel (0) target = $region21
  $region20: #{conv_bn_relu.3} parent=0 // pred_region
    _
  $region21: #{conv_bn_relu.3} parent=0 // pred_fallthru
    _

// kernel: conv_bn_relu.2
$region0: #{conv_bn_relu.2}
  #allocation0 [shape = 'u32[]', space=smem, size = 0x4, offset = 0x4, fixed_abs, tag = 'smem constant byte address 0x4 - core index']
  #allocation1 [shape = 'u32[144,128]{1,0:T(1,128)}', space=vmem, size = 0x12000, scoped, tag = 'internal scratch']
  %s0 = inlined_call_operand.vmem [shape: f32[2,360,8], index: 0, kind: input, shape index: {}, may-alias: {0,1}]
  %s1 = inlined_call_operand.vmem [shape: f32[2,360,8], index: 1, kind: input, shape index: {}, may-alias: {0,1}]
  %s2 = inlined_call_operand.vmem [shape: f32[9,8,128], index: 2, kind: input, shape index: {}]
  %s3 = inlined_call_operand.vmem [shape: f32[320,1], index: 3, kind: input, shape index: {}]
  %s4 = inlined_call_operand.vmem [shape: f32[2,320,128], index: 4, kind: output, shape index: {0}]
  %s5 = inlined_call_operand.vmem [shape: f32[2,1,8,128], index: 5, kind: output, shape index: {1}]
  %6 = xla_tuple %s4, %s5
  %s7 = sld [smem:[#allocation0]]
  $region57: #{conv_bn_relu.2} parent=0
    _
  %s9 = ssub.s32 1, %s7
  %s10 = scalar_select 0, %s9, %s7
  loop: start=0, step=1, limit=4
  $region2: #{conv_bn_relu.2} parent=0 // loop_pre_header
    _
  $region3: #{conv_bn_relu.2} parent=0 // loop_header
    %s12 = sphi 0, %s16
    %p13 = scmp.ge.s32.totalorder %s12, 4
    %s19 = sphi 0, %s31
    %s20 = sphi 0, %s27
    %s21 = sphi 0, %s19
    %s22 = sphi 0, %s20
    %s23 = sphi 0, %s21
    %s24 = sphi 0, %s22
    %s36 = sphi 0, %s38
    %s39 = sphi 0, %s36
    %s40 = sphi 0, %s39
    %s56 = sphi 0, %s40
    %s68 = sphi 0, %s70
    %s71 = sphi 0, %s68
    %s72 = sphi 0, %s71
    %s88 = sphi 0, %s72
    %s92 = sphi 0, %s92
    %s94 = sphi 0, %s92
    %s95 = sphi 0, %s94
    %s109 = sphi 0, %s95
    %s115 = sphi 0, %s117
    %s118 = sphi 0, %s115
    %s119 = sphi 0, %s118
    %s135 = sphi 0, %s119
    %s143 = sphi 0, %s145
    %s146 = sphi 0, %s143
    %s147 = sphi 0, %s146
    %s163 = sphi 0, %s147
    %s171 = sphi 0, %s173
    %s174 = sphi 0, %s171
    %s175 = sphi 0, %s174
    %s191 = sphi 0, %s175
  $region4: #{conv_bn_relu.2} parent=0 // loop_header_branch
    %15 = sbr.rel (%p13) target = $region8
  $region5: #{conv_bn_relu.2} parent=0 // loop_body
    %s17 = ssub.s32 %s12, 1
    %s18 = ssub.s32 %s12, 2
    %s25 = sadd.s32 1, %s20
    %p26 = scmp.ge.s32.totalorder %s25, 1
    %s27 = scalar_select %p26, 0, %s25
    %s28 = sadd.s32 1, %s19
    %s29 = scalar_select %p26, %s28, %s19
    %p30 = scmp.ge.s32.totalorder %s29, 2
    %s31 = scalar_select %p30, 0, %s29
    %s32 = ssub.s32 %s19, %s31
    %s33 = ssub.s32 %s20, %s27
    %s34 = sor.u32 %s32, %s33
    %p35 = scmp.eq.s32.totalorder %s34, 0
    %s37 = sadd.s32 %s36, 1
    %s38 = scalar_select %p35, %s36, %s37
    %p41 = pneg %p35
    %p42 = scmp.eq.s32.totalorder %s12, 1
    %p43 = por %p41, %p42
    %p44 = scmp.ne.s32.totalorder %s36, %s39
    %p45 = scmp.eq.s32.totalorder %s12, 0
    %p46 = por %p44, %p45
    %p47 = scmp.ne.s32.totalorder %s36, %s39
    %p48 = scmp.eq.s32.totalorder %s17, 1
    %p49 = por %p47, %p48
    %p50 = scmp.ne.s32.totalorder %s39, %s40
    %p51 = scmp.eq.s32.totalorder %s17, 0
    %p52 = por %p50, %p51
    %p53 = scmp.ne.s32.totalorder %s39, %s40
    %p54 = scmp.eq.s32.totalorder %s18, 1
    %p55 = por %p53, %p54
    %p57 = scmp.ne.s32.totalorder %s40, %s56
    %p58 = scmp.eq.s32.totalorder %s18, 0
    %p59 = por %p57, %p58
    %s60 = sadd.s32 %s20, 1
    %s61 = smul.u32 %s60, 8
    %s62 = sadd.s32 %s27, 1
    %s63 = smul.u32 %s62, 8
    %s64 = ssub.s32 %s19, %s31
    %s65 = ssub.s32 %s61, %s63
    %s66 = sor.u32 %s64, %s65
    %p67 = scmp.eq.s32.totalorder %s66, 0
    %s69 = sadd.s32 %s68, 1
    %s70 = scalar_select %p67, %s68, %s69
    %p73 = pneg %p67
    %p74 = scmp.eq.s32.totalorder %s12, 1
    %p75 = por %p73, %p74
    %p76 = scmp.ne.s32.totalorder %s68, %s71
    %p77 = scmp.eq.s32.totalorder %s12, 0
    %p78 = por %p76, %p77
    %p79 = scmp.ne.s32.totalorder %s68, %s71
    %p80 = scmp.eq.s32.totalorder %s17, 1
    %p81 = por %p79, %p80
    %p82 = scmp.ne.s32.totalorder %s71, %s72
    %p83 = scmp.eq.s32.totalorder %s17, 0
    %p84 = por %p82, %p83
    %p85 = scmp.ne.s32.totalorder %s71, %s72
    %p86 = scmp.eq.s32.totalorder %s18, 1
    %p87 = por %p85, %p86
    %p89 = scmp.ne.s32.totalorder %s72, %s88
    %p90 = scmp.eq.s32.totalorder %s18, 0
    %p91 = por %p89, %p90
    %s93 = sadd.s32 %s92, 1
    %p96 = scmp.eq.s32.totalorder %s12, 1
    %p97 = scmp.ne.s32.totalorder %s92, %s94
    %p98 = scmp.eq.s32.totalorder %s12, 0
    %p99 = por %p97, %p98
    %p100 = scmp.ne.s32.totalorder %s92, %s94
    %p101 = scmp.eq.s32.totalorder %s17, 1
    %p102 = por %p100, %p101
    %p103 = scmp.ne.s32.totalorder %s94, %s95
    %p104 = scmp.eq.s32.totalorder %s17, 0
    %p105 = por %p103, %p104
    %p106 = scmp.ne.s32.totalorder %s94, %s95
    %p107 = scmp.eq.s32.totalorder %s18, 1
    %p108 = por %p106, %p107
    %p110 = scmp.ne.s32.totalorder %s95, %s109
    %p111 = scmp.eq.s32.totalorder %s18, 0
    %p112 = por %p110, %p111
    %s113 = ssub.s32 %s20, %s27
    %p114 = scmp.eq.s32.totalorder %s113, 0
    %s116 = sadd.s32 %s115, 1
    %s117 = scalar_select %p114, %s115, %s116
    %p120 = pneg %p114
    %p121 = scmp.eq.s32.totalorder %s12, 1
    %p122 = por %p120, %p121
    %p123 = scmp.ne.s32.totalorder %s115, %s118
    %p124 = scmp.eq.s32.totalorder %s12, 0
    %p125 = por %p123, %p124
    %p126 = scmp.ne.s32.totalorder %s115, %s118
    %p127 = scmp.eq.s32.totalorder %s17, 1
    %p128 = por %p126, %p127
    %p129 = scmp.ne.s32.totalorder %s118, %s119
    %p130 = scmp.eq.s32.totalorder %s17, 0
    %p131 = por %p129, %p130
    %p132 = scmp.ne.s32.totalorder %s118, %s119
    %p133 = scmp.eq.s32.totalorder %s18, 1
    %p134 = por %p132, %p133
    %p136 = scmp.ne.s32.totalorder %s119, %s135
    %p137 = scmp.eq.s32.totalorder %s18, 0
    %p138 = por %p136, %p137
    %s139 = ssub.s32 %s19, %s31
    %s140 = ssub.s32 %s20, %s27
    %s141 = sor.u32 %s139, %s140
    %p142 = scmp.eq.s32.totalorder %s141, 0
    %s144 = sadd.s32 %s143, 1
    %s145 = scalar_select %p142, %s143, %s144
    %p148 = pneg %p142
    %p149 = scmp.eq.s32.totalorder %s12, 1
    %p150 = por %p148, %p149
    %p151 = scmp.ne.s32.totalorder %s143, %s146
    %p152 = scmp.eq.s32.totalorder %s12, 0
    %p153 = por %p151, %p152
    %p154 = scmp.ne.s32.totalorder %s143, %s146
    %p155 = scmp.eq.s32.totalorder %s17, 1
    %p156 = por %p154, %p155
    %p157 = scmp.ne.s32.totalorder %s146, %s147
    %p158 = scmp.eq.s32.totalorder %s17, 0
    %p159 = por %p157, %p158
    %p160 = scmp.ne.s32.totalorder %s146, %s147
    %p161 = scmp.eq.s32.totalorder %s18, 1
    %p162 = por %p160, %p161
    %p164 = scmp.ne.s32.totalorder %s147, %s163
    %p165 = scmp.eq.s32.totalorder %s18, 0
    %p166 = por %p164, %p165
    %s167 = ssub.s32 %s19, %s31
    %s168 = ssub.s32 %s20, %s27
    %s169 = sor.u32 %s167, %s168
    %p170 = scmp.eq.s32.totalorder %s169, 0
    %s172 = sadd.s32 %s171, 1
    %s173 = scalar_select %p170, %s171, %s172
    %p176 = pneg %p170
    %p177 = scmp.eq.s32.totalorder %s12, 1
    %p178 = por %p176, %p177
    %p179 = scmp.ne.s32.totalorder %s171, %s174
    %p180 = scmp.eq.s32.totalorder %s12, 0
    %p181 = por %p179, %p180
    %p182 = scmp.ne.s32.totalorder %s171, %s174
    %p183 = scmp.eq.s32.totalorder %s17, 1
    %p184 = por %p182, %p183
    %p185 = scmp.ne.s32.totalorder %s174, %s175
    %p186 = scmp.eq.s32.totalorder %s17, 0
    %p187 = por %p185, %p186
    %p188 = scmp.ne.s32.totalorder %s174, %s175
    %p189 = scmp.eq.s32.totalorder %s18, 1
    %p190 = por %p188, %p189
    %p192 = scmp.ne.s32.totalorder %s175, %s191
    %p193 = scmp.eq.s32.totalorder %s18, 0
    %p194 = por %p192, %p193
    %p195 = scmp.le.s32.totalorder 1, %s12
    %p196 = scmp.lt.s32.totalorder %s12, 3
    %p197 = pnand %p195, %p196
    %p198 = pneg %p197
    // Predicated region
    $region9: #{conv_bn_relu.2} parent=5 // pred_check
      _
    $region10: #{conv_bn_relu.2} parent=5 // pred_check_branch
      %200 = sbr.rel (%p197) target = $region12
    $region11: #{conv_bn_relu.2} parent=5 // pred_region
      %s201 = ssub.s32 %s12, 1
      // Predicated region
      $region13: #{conv_bn_relu.2} parent=11 // pred_check
        %p202 = pneg %p105
      $region14: #{conv_bn_relu.2} parent=11 // pred_check_branch
        %204 = sbr.rel (%p202) target = $region16
      $region15: #{conv_bn_relu.2} parent=11 // pred_region
        _
      $region16: #{conv_bn_relu.2} parent=11 // pred_fallthru
        _
      // Predicated region
      $region17: #{conv_bn_relu.2} parent=11 // pred_check
        %p205 = pneg %p131
      $region18: #{conv_bn_relu.2} parent=11 // pred_check_branch
        %207 = sbr.rel (%p205) target = $region20
      $region19: #{conv_bn_relu.2} parent=11 // pred_region
        %s208 = smul.u32 40, %s22
        %p209 = scmp.lt.s32.totalorder %s208, 39
        %s210 = scalar_select %p209, %s208, 39
        %s211 = smul.addr %s210, 8
        %s212 = scalar_lea.vmem %s3, %s211
        %s213 = smul.u32 40, %s22
      $region20: #{conv_bn_relu.2} parent=11 // pred_fallthru
        _
    $region12: #{conv_bn_relu.2} parent=5 // pred_fallthru
      _
    %p214 = scmp.lt.s32.totalorder %s12, 2
    // Predicated region
    $region21: #{conv_bn_relu.2} parent=5 // pred_check
      %p215 = pneg %p214
    $region22: #{conv_bn_relu.2} parent=5 // pred_check_branch
      %217 = sbr.rel (%p215) target = $region24
    $region23: #{conv_bn_relu.2} parent=5 // pred_region
      // Predicated region
      $region25: #{conv_bn_relu.2} parent=23 // pred_check
        %p218 = pneg %p46
      $region26: #{conv_bn_relu.2} parent=23 // pred_check_branch
        %220 = sbr.rel (%p218) target = $region28
      $region27: #{conv_bn_relu.2} parent=23 // pred_region
        %s221 = smul.u32 40, %s20
        %s222 = ssub.s32 45, %s221
        %p223 = scmp.lt.s32.totalorder %s222, 40
        %s224 = scalar_select %p223, %s222, 40
        %s225 = smul.u32 128, %s224
        %p226 = scmp.lt.s32.totalorder %s19, 1
        %s227 = scalar_select %p226, %s19, 1
        %p228 = scmp.lt.s32.totalorder %s221, 44
        %s229 = scalar_select %p228, %s221, 44
        %s230 = smul.addr %s227, 45
        %s231 = sadd.s32 %s229, %s230
        %s232 = smul.addr %s231, 8
        %s233 = scalar_lea.vmem %s0, %s232
        %s234 = smul.u32 40, %s20
        %s235 = ssub.s32 45, %s234
        %p236 = scmp.lt.s32.totalorder %s235, 40
        %s237 = scalar_select %p236, %s235, 40
        %s238 = smul.u32 128, %s237
      $region28: #{conv_bn_relu.2} parent=23 // pred_fallthru
        _
      // Predicated region
      $region29: #{conv_bn_relu.2} parent=23 // pred_check
        %p239 = pneg %p78
      $region30: #{conv_bn_relu.2} parent=23 // pred_check_branch
        %241 = sbr.rel (%p239) target = $region32
      $region31: #{conv_bn_relu.2} parent=23 // pred_region
        %s242 = sadd.s32 %s20, 1
        %s243 = smul.u32 %s242, 8
        %s244 = smul.u32 5, %s243
        %p245 = scmp.lt.s32.totalorder %s19, 1
        %s246 = scalar_select %p245, %s19, 1
        %p247 = scmp.lt.s32.totalorder %s244, 44
        %s248 = scalar_select %p247, %s244, 44
        %s249 = smul.addr %s246, 45
        %s250 = sadd.s32 %s248, %s249
        %s251 = smul.addr %s250, 8
        %s252 = scalar_lea.vmem %s1, %s251
        %s253 = sadd.s32 %s20, 1
        %s254 = smul.u32 %s253, 8
        %s255 = smul.u32 5, %s254
      $region32: #{conv_bn_relu.2} parent=23 // pred_fallthru
        _
    $region24: #{conv_bn_relu.2} parent=5 // pred_fallthru
      _
    %p256 = scmp.le.s32.totalorder 1, %s12
    %p257 = scmp.lt.s32.totalorder %s12, 3
    %p258 = pnand %p256, %p257
    %p259 = pneg %p258
    // Predicated region
    $region33: #{conv_bn_relu.2} parent=5 // pred_check
      _
    $region34: #{conv_bn_relu.2} parent=5 // pred_check_branch
      %261 = sbr.rel (%p258) target = $region36
    $region35: #{conv_bn_relu.2} parent=5 // pred_region
      %s262 = ssub.s32 %s12, 1
      %s263 = smul.u32 40, %s22
      %s264 = ssub.s32 45, %s263
      %p265 = scmp.lt.s32.totalorder %s264, 40
      %s266 = scalar_select %p265, %s264, 40
      %s267 = smul.u32 128, %s266
      %p268 = scmp.lt.s32.totalorder %s21, 1
      %s269 = scalar_select %p268, %s21, 1
      %p270 = scmp.lt.s32.totalorder %s263, 44
      %s271 = scalar_select %p270, %s263, 44
      %s272 = smul.addr %s269, 45
      %s273 = sadd.s32 %s271, %s272
      %s274 = smul.addr %s273, 8
      %s275 = scalar_lea.vmem %s0, %s274
      %p276 = pneg %p52
      %p277 = pneg %p49
      %s278 = sadd.s32 %s22, 1
      %s279 = smul.u32 %s278, 8
      %s280 = smul.u32 5, %s279
      %p281 = scmp.lt.s32.totalorder %s21, 1
      %s282 = scalar_select %p281, %s21, 1
      %p283 = scmp.lt.s32.totalorder %s280, 44
      %s284 = scalar_select %p283, %s280, 44
      %s285 = smul.addr %s282, 45
      %s286 = sadd.s32 %s284, %s285
      %s287 = smul.addr %s286, 8
      %s288 = scalar_lea.vmem %s1, %s287
      %p289 = pneg %p84
      %p290 = pneg %p81
      %p291 = pneg %p105
      %p292 = pneg %p102
      %s293 = smul.u32 40, %s22
      %p294 = scmp.lt.s32.totalorder %s293, 39
      %s295 = scalar_select %p294, %s293, 39
      %s296 = smul.addr %s295, 8
      %s297 = scalar_lea.vmem %s3, %s296
      %p298 = pneg %p131
      %p299 = pneg %p128
      %p300 = pneg %p159
      %p301 = pneg %p156
      %s302 = smul.u32 40, %s22
      %p303 = scmp.lt.s32.totalorder %s21, 1
      %s304 = scalar_select %p303, %s21, 1
      %p305 = scmp.lt.s32.totalorder %s302, 39
      %s306 = scalar_select %p305, %s302, 39
      %s307 = smul.addr %s304, 40
      %s308 = sadd.s32 %s306, %s307
      %s309 = smul.addr %s308, 8
      %s310 = scalar_lea.vmem %s4, %s309
      %p311 = pneg %p187
      %p312 = pneg %p184
      %p313 = scmp.lt.s32.totalorder %s21, 1
      %s314 = scalar_select %p313, %s21, 1
      %p315 = scmp.lt.s32.totalorder %s22, 0
      %s316 = scalar_select %p315, %s22, 0
      %s317 = sadd.s32 %s316, %s314
      %s318 = smul.addr %s317, 8
      %s319 = scalar_lea.vmem %s5, %s318
      %s320 = smul.u32 40, %s22
      %s321 = ssub.s32 45, %s320
      %p322 = scmp.lt.s32.totalorder %s321, 40
      %s323 = scalar_select %p322, %s321, 40
      %s324 = smul.u32 128, %s323
      %p325 = scmp.lt.s32.totalorder %s21, 1
      %s326 = scalar_select %p325, %s21, 1
      %p327 = scmp.lt.s32.totalorder %s320, 44
      %s328 = scalar_select %p327, %s320, 44
      %s329 = smul.addr %s326, 45
      %s330 = sadd.s32 %s328, %s329
      %s331 = smul.addr %s330, 8
      %s332 = scalar_lea.vmem %s0, %s331
      %s333 = smul.u32 40, %s22
      %s334 = ssub.s32 45, %s333
      %p335 = scmp.lt.s32.totalorder %s334, 40
      %s336 = scalar_select %p335, %s334, 40
      %s337 = smul.u32 128, %s336
      %s338 = sadd.s32 %s22, 1
      %s339 = smul.u32 %s338, 8
      %s340 = smul.u32 5, %s339
      %p341 = scmp.lt.s32.totalorder %s21, 1
      %s342 = scalar_select %p341, %s21, 1
      %p343 = scmp.lt.s32.totalorder %s340, 44
      %s344 = scalar_select %p343, %s340, 44
      %s345 = smul.addr %s342, 45
      %s346 = sadd.s32 %s344, %s345
      %s347 = smul.addr %s346, 8
      %s348 = scalar_lea.vmem %s1, %s347
      %s349 = sadd.s32 %s22, 1
      %s350 = smul.u32 %s349, 8
      %s351 = smul.u32 5, %s350
      %s352 = smul.u32 40, %s22
      %p353 = scmp.lt.s32.totalorder %s352, 39
      %s354 = scalar_select %p353, %s352, 39
      %s355 = smul.addr %s354, 8
      %s356 = scalar_lea.vmem %s3, %s355
      %s357 = smul.u32 40, %s22
      %s358 = smul.u32 40, %s22
      %p359 = scmp.lt.s32.totalorder %s21, 1
      %s360 = scalar_select %p359, %s21, 1
      %p361 = scmp.lt.s32.totalorder %s358, 39
      %s362 = scalar_select %p361, %s358, 39
      %s363 = smul.addr %s360, 40
      %s364 = sadd.s32 %s362, %s363
      %s365 = smul.addr %s364, 8
      %s366 = scalar_lea.vmem %s4, %s365
      %s367 = smul.u32 40, %s22
      %p368 = scmp.lt.s32.totalorder %s21, 1
      %s369 = scalar_select %p368, %s21, 1
      %p370 = scmp.lt.s32.totalorder %s22, 0
      %s371 = scalar_select %p370, %s22, 0
      %s372 = sadd.s32 %s371, %s369
      %s373 = smul.addr %s372, 8
      %s374 = scalar_lea.vmem %s5, %s373
      %v375 = vld [vmem:[%s332] sm:$0xff]
      %v376 = vld [vmem:[%s332 + $0x8] sm:$0xff]
      %v377 = vld [vmem:[%s332 + $0x10] sm:$0xff]
      %v378 = vld [vmem:[%s332 + $0x18] sm:$0xff]
      %v379 = vld [vmem:[%s332 + $0x20] sm:$0xff]
      %v380 = vld [vmem:[%s332 + $0x28] sm:$0xff]
      %v381 = vld [vmem:[%s332 + $0x30] sm:$0xff]
      %v382 = vld [vmem:[%s332 + $0x38] sm:$0xff]
      %v383 = vld [vmem:[%s332 + $0x40] sm:$0xff]
      %v384 = vld [vmem:[%s332 + $0x48] sm:$0xff]
      %v385 = vld [vmem:[%s332 + $0x50] sm:$0xff]
      %v386 = vld [vmem:[%s332 + $0x58] sm:$0xff]
      %v387 = vld [vmem:[%s332 + $0x60] sm:$0xff]
      %v388 = vld [vmem:[%s332 + $0x68] sm:$0xff]
      %v389 = vld [vmem:[%s332 + $0x70] sm:$0xff]
      %v390 = vld [vmem:[%s332 + $0x78] sm:$0xff]
      %v391 = vld [vmem:[%s332 + $0x80] sm:$0xff]
      %v392 = vld [vmem:[%s332 + $0x88] sm:$0xff]
      %v393 = vld [vmem:[%s332 + $0x90] sm:$0xff]
      %v394 = vld [vmem:[%s332 + $0x98] sm:$0xff]
      %v395 = vld [vmem:[%s332 + $0xa0] sm:$0xff]
      %v396 = vld [vmem:[%s332 + $0xa8] sm:$0xff]
      %v397 = vld [vmem:[%s332 + $0xb0] sm:$0xff]
      %v398 = vld [vmem:[%s332 + $0xb8] sm:$0xff]
      %v399 = vld [vmem:[%s332 + $0xc0] sm:$0xff]
      %v400 = vld [vmem:[%s332 + $0xc8] sm:$0xff]
      %v401 = vld [vmem:[%s332 + $0xd0] sm:$0xff]
      %v402 = vld [vmem:[%s332 + $0xd8] sm:$0xff]
      %v403 = vld [vmem:[%s332 + $0xe0] sm:$0xff]
      %v404 = vld [vmem:[%s332 + $0xe8] sm:$0xff]
      %v405 = vld [vmem:[%s332 + $0xf0] sm:$0xff]
      %v406 = vld [vmem:[%s332 + $0xf8] sm:$0xff]
      %v407 = vld [vmem:[%s332 + $0x100] sm:$0xff]
      %v408 = vld [vmem:[%s332 + $0x108] sm:$0xff]
      %v409 = vld [vmem:[%s332 + $0x110] sm:$0xff]
      %v410 = vld [vmem:[%s332 + $0x118] sm:$0xff]
      %v411 = vld [vmem:[%s332 + $0x120] sm:$0xff]
      %v412 = vld [vmem:[%s332 + $0x128] sm:$0xff]
      %v413 = vld [vmem:[%s332 + $0x130] sm:$0xff]
      %v414 = vld [vmem:[%s332 + $0x138] sm:$0xff]
      %v415 = vld [vmem:[%s348] sm:$0xff]
      %v416 = vld [vmem:[%s348 + $0x8] sm:$0xff]
      %v417 = vld [vmem:[%s348 + $0x10] sm:$0xff]
      %v418 = vld [vmem:[%s348 + $0x18] sm:$0xff]
      %v419 = vld [vmem:[%s348 + $0x20] sm:$0xff]
      %v420 = vld [vmem:[%s2] sm:$0xff]
      %s421 = scalar_lea.vmem %s2, 8
      %v422 = vld [vmem:[%s421] sm:$0xff]
      %vm464 = vcmask 1046528
      %v465 = vrot.slane %v375, 1
      %v466 = vrot.slane %v376, 1
      %v467 = vsel %vm464, %v465, %v466
      %v468 = vrot.slane %v377, 1
      %v469 = vsel %vm464, %v466, %v468
      %v470 = vrot.slane %v378, 1
      %v471 = vsel %vm464, %v468, %v470
      %v472 = vrot.slane %v379, 1
      %v473 = vsel %vm464, %v470, %v472
      %v474 = vrot.slane %v380, 1
      %v475 = vsel %vm464, %v472, %v474
      %v476 = vrot.slane %v381, 1
      %v477 = vsel %vm464, %v474, %v476
      %v478 = vrot.slane %v382, 1
      %v479 = vsel %vm464, %v476, %v478
      %v480 = vrot.slane %v383, 1
      %v481 = vsel %vm464, %v478, %v480
      %v482 = vrot.slane %v384, 1
      %v483 = vsel %vm464, %v480, %v482
      %v484 = vrot.slane %v385, 1
      %v485 = vsel %vm464, %v482, %v484
      %v486 = vrot.slane %v386, 1
      %v487 = vsel %vm464, %v484, %v486
      %v488 = vrot.slane %v387, 1
      %v489 = vsel %vm464, %v486, %v488
      %v490 = vrot.slane %v388, 1
      %v491 = vsel %vm464, %v488, %v490
      %v492 = vrot.slane %v389, 1
      %v493 = vsel %vm464, %v490, %v492
      %v494 = vrot.slane %v390, 1
      %v495 = vsel %vm464, %v492, %v494
      %v496 = vrot.slane %v391, 1
      %v497 = vsel %vm464, %v494, %v496
      %v498 = vrot.slane %v392, 1
      %v499 = vsel %vm464, %v496, %v498
      %v500 = vrot.slane %v393, 1
      %v501 = vsel %vm464, %v498, %v500
      %v502 = vrot.slane %v394, 1
      %v503 = vsel %vm464, %v500, %v502
      %v504 = vrot.slane %v395, 1
      %v505 = vsel %vm464, %v502, %v504
      %v506 = vrot.slane %v396, 1
      %v507 = vsel %vm464, %v504, %v506
      %v508 = vrot.slane %v397, 1
      %v509 = vsel %vm464, %v506, %v508
      %v510 = vrot.slane %v398, 1
      %v511 = vsel %vm464, %v508, %v510
      %v512 = vrot.slane %v399, 1
      %v513 = vsel %vm464, %v510, %v512
      %v514 = vrot.slane %v400, 1
      %v515 = vsel %vm464, %v512, %v514
      %v516 = vrot.slane %v401, 1
      %v517 = vsel %vm464, %v514, %v516
      %v518 = vrot.slane %v402, 1
      %v519 = vsel %vm464, %v516, %v518
      %v520 = vrot.slane %v403, 1
      %v521 = vsel %vm464, %v518, %v520
      %v522 = vrot.slane %v404, 1
      %v523 = vsel %vm464, %v520, %v522
      %v524 = vrot.slane %v405, 1
      %v525 = vsel %vm464, %v522, %v524
      %v526 = vrot.slane %v406, 1
      %v527 = vsel %vm464, %v524, %v526
      %v528 = vrot.slane %v407, 1
      %v529 = vsel %vm464, %v526, %v528
      %v530 = vrot.slane %v408, 1
      %v531 = vsel %vm464, %v528, %v530
      %v532 = vrot.slane %v409, 1
      %v533 = vsel %vm464, %v530, %v532
      %v534 = vrot.slane %v410, 1
      %v535 = vsel %vm464, %v532, %v534
      %v536 = vrot.slane %v411, 1
      %v537 = vsel %vm464, %v534, %v536
      %v538 = vrot.slane %v412, 1
      %v539 = vsel %vm464, %v536, %v538
      %v540 = vrot.slane %v413, 1
      %v541 = vsel %vm464, %v538, %v540
      %v542 = vrot.slane %v414, 1
      %v543 = vsel %vm464, %v540, %v542
      %v544 = vrot.slane %v415, 1
      %v545 = vsel %vm464, %v542, %v544
      %vm546 = vcmask 64512
      %v547 = vsel %vm546, %v467, 0
      %v549 = vsel %vm546, %v469, 0
      %v551 = vsel %vm546, %v471, 0
      %v553 = vsel %vm546, %v473, 0
      %v555 = vsel %vm546, %v475, 0
      %v557 = vsel %vm546, %v477, 0
      %v559 = vsel %vm546, %v479, 0
      %v561 = vsel %vm546, %v481, 0
      %v563 = vsel %vm546, %v483, 0
      %v565 = vsel %vm546, %v485, 0
      %v567 = vsel %vm546, %v487, 0
      %v569 = vsel %vm546, %v489, 0
      %v571 = vsel %vm546, %v491, 0
      %v573 = vsel %vm546, %v493, 0
      %v575 = vsel %vm546, %v495, 0
      %v577 = vsel %vm546, %v497, 0
      %v579 = vsel %vm546, %v499, 0
      %v581 = vsel %vm546, %v501, 0
      %v583 = vsel %vm546, %v503, 0
      %v585 = vsel %vm546, %v505, 0
      %v587 = vsel %vm546, %v507, 0
      %v589 = vsel %vm546, %v509, 0
      %v591 = vsel %vm546, %v511, 0
      %v593 = vsel %vm546, %v513, 0
      %v595 = vsel %vm546, %v515, 0
      %v597 = vsel %vm546, %v517, 0
      %v599 = vsel %vm546, %v519, 0
      %v601 = vsel %vm546, %v521, 0
      %v603 = vsel %vm546, %v523, 0
      %v605 = vsel %vm546, %v525, 0
      %v607 = vsel %vm546, %v527, 0
      %v609 = vsel %vm546, %v529, 0
      %v611 = vsel %vm546, %v531, 0
      %v613 = vsel %vm546, %v533, 0
      %v615 = vsel %vm546, %v535, 0
      %v617 = vsel %vm546, %v537, 0
      %v619 = vsel %vm546, %v539, 0
      %v621 = vsel %vm546, %v541, 0
      %v623 = vsel %vm546, %v543, 0
      %v625 = vsel %vm546, %v545, 0
      %627 = vmatprep.subr.mxu0 0.0
      %628 = vmatpush1.msra.mxu0 %v422
      %629 = vmatprep.subr.mxu0 0.0
      %630 = vmatpush1.msra.mxu0 0.0
      %631 = vmatprep.subr.mxu0 0.0
      %632 = vmatpush1.msra.mxu0 0.0
      %633 = vmatprep.subr.mxu0 0.0
      %634 = vmatpush1.msra.mxu0 0.0
      %635 = vmatprep.subr.mxu0 0.0
      %636 = vmatpush1.msra.mxu0 0.0
      %637 = vmatprep.subr.mxu0 0.0
      %638 = vmatpush1.msra.mxu0 0.0
      %639 = vmatprep.subr.mxu0 0.0
      %640 = vmatpush1.msra.mxu0 0.0
      %641 = vmatprep.subr.mxu0 0.0
      %642 = vmatpush1.msra.mxu0 0.0
      %643 = vmatprep.subr.mxu0 0.0
      %644 = vmatpush1.msra.mxu0 0.0
      %645 = vmatprep.subr.mxu0 0.0
      %646 = vmatpush1.msra.mxu0 0.0
      %647 = vmatprep.subr.mxu0 0.0
      %648 = vmatpush1.msra.mxu0 0.0
      %649 = vmatprep.subr.mxu0 0.0
      %650 = vmatpush1.msra.mxu0 0.0
      %651 = vmatprep.subr.mxu0 0.0
      %652 = vmatpush1.msra.mxu0 0.0
      %653 = vmatprep.subr.mxu0 0.0
      %654 = vmatpush1.msra.mxu0 0.0
      %655 = vmatprep.subr.mxu0 0.0
      %656 = vmatpush1.msra.mxu0 0.0
      %657 = vmatprep.subr.mxu0 0.0
      %658 = vmatpush1.msra.mxu0 0.0
      %659 = vmatprep.subr.mxu0 0.0
      %660 = vmatpush1.msra.mxu0 0.0
      %661 = vmatprep.subr.mxu0 0.0
      %662 = vmatpush1.msra.mxu0 0.0
      %663 = vmatprep.subr.mxu0 0.0
      %664 = vmatpush1.msra.mxu0 0.0
      %665 = vmatprep.subr.mxu0 0.0
      %666 = vmatpush1.msra.mxu0 0.0
      %667 = vmatprep.subr.mxu0 0.0
      %668 = vmatpush1.msra.mxu0 0.0
      %669 = vmatprep.subr.mxu0 0.0
      %670 = vmatpush1.msra.mxu0 0.0
      %671 = vmatprep.subr.mxu0 0.0
      %672 = vmatpush1.msra.mxu0 0.0
      %673 = vmatprep.subr.mxu0 0.0
      %674 = vmatpush1.msra.mxu0 0.0
      %675 = vmatprep.subr.mxu0 0.0
      %676 = vmatpush1.msra.mxu0 0.0
      %677 = vmatprep.subr.mxu0 0.0
      %678 = vmatpush1.msra.mxu0 0.0
      %679 = vmatprep.subr.mxu0 0.0
      %680 = vmatpush1.msra.mxu0 0.0
      %681 = vmatprep.subr.mxu0 0.0
      %682 = vmatpush1.msra.mxu0 0.0
      %683 = vmatprep.subr.mxu0 0.0
      %684 = vmatpush1.msra.mxu0 0.0
      %685 = vmatprep.subr.mxu0 0.0
      %686 = vmatpush1.msra.mxu0 0.0
      %687 = vmatprep.subr.mxu0 0.0
      %688 = vmatpush1.msra.mxu0 0.0
      %689 = vmatprep.subr.mxu0 0.0
      %690 = vmatpush1.msra.mxu0 0.0
      %691 = vmatprep.mubr.f32.mxu0 0.0
      %692 = vmatmul.mubr.f32.gmra.mrb[0].mxu0 %v547
      %v693 = vpop.f32.mrb[0].mxu0
      %v694 = vadd.f32 0.0, %v693
      %v695 = vpop.f32.mrb[0].mxu0
      %696 = vmatprep.mubr.f32.mxu0 0.0
      %697 = vmatmul.mubr.f32.gmra.mrb[0].mxu0 %v549
      %v698 = vpop.f32.mrb[0].mxu0
      %v699 = vadd.f32 0.0, %v698
      %v700 = vpop.f32.mrb[0].mxu0
      %701 = vmatprep.mubr.f32.mxu0 0.0
      %702 = vmatmul.mubr.f32.gmra.mrb[0].mxu0 %v551
      %v703 = vpop.f32.mrb[0].mxu0
      %v704 = vadd.f32 0.0, %v703
      %v705 = vpop.f32.mrb[0].mxu0
      %706 = vmatprep.mubr.f32.mxu0 0.0
      %707 = vmatmul.mubr.f32.gmra.mrb[0].mxu0 %v553
      %v708 = vpop.f32.mrb[0].mxu0
      %v709 = vadd.f32 0.0, %v708
      %v710 = vpop.f32.mrb[0].mxu0
      %711 = vmatprep.mubr.f32.mxu0 0.0
      %712 = vmatmul.mubr.f32.gmra.mrb[0].mxu0 %v555
      %v713 = vpop.f32.mrb[0].mxu0
      %v714 = vadd.f32 0.0, %v713
      %v715 = vpop.f32.mrb[0].mxu0
      %716 = vmatprep.mubr.f32.mxu0 0.0
      %717 = vmatmul.mubr.f32.gmra.mrb[0].mxu0 %v557
      %v718 = vpop.f32.mrb[0].mxu0
      %v719 = vadd.f32 0.0, %v718
      %v720 = vpop.f32.mrb[0].mxu0
      %721 = vmatprep.mubr.f32.mxu0 0.0
      %722 = vmatmul.mubr.f32.gmra.mrb[0].mxu0 %v559
      %v723 = vpop.f32.mrb[0].mxu0
      %v724 = vadd.f32 0.0, %v723
      %v725 = vpop.f32.mrb[0].mxu0
      %726 = vmatprep.mubr.f32.mxu0 0.0
      %727 = vmatmul.mubr.f32.gmra.mrb[0].mxu0 %v561
      %v728 = vpop.f32.mrb[0].mxu0
      %v729 = vadd.f32 0.0, %v728
      %v730 = vpop.f32.mrb[0].mxu0
      %731 = vmatprep.mubr.f32.mxu0 0.0
      %732 = vmatmul.mubr.f32.gmra.mrb[0].mxu0 %v563
      %v733 = vpop.f32.mrb[0].mxu0
      %v734 = vadd.f32 0.0, %v733
      %v735 = vpop.f32.mrb[0].mxu0
      %736 = vmatprep.mubr.f32.mxu0 0.0
      %737 = vmatmul.mubr.f32.gmra.mrb[0].mxu0 %v565
      %v738 = vpop.f32.mrb[0].mxu0
      %v739 = vadd.f32 0.0, %v738
      %v740 = vpop.f32.mrb[0].mxu0
      %741 = vmatprep.mubr.f32.mxu0 0.0
      %742 = vmatmul.mubr.f32.gmra.mrb[0].mxu0 %v567
      %v743 = vpop.f32.mrb[0].mxu0
      %v744 = vadd.f32 0.0, %v743
      %v745 = vpop.f32.mrb[0].mxu0
      %746 = vmatprep.mubr.f32.mxu0 0.0
      %747 = vmatmul.mubr.f32.gmra.mrb[0].mxu0 %v569
      %v748 = vpop.f32.mrb[0].mxu0
      %v749 = vadd.f32 0.0, %v748
      %v750 = vpop.f32.mrb[0].mxu0
      %751 = vmatprep.mubr.f32.mxu0 0.0
      %752 = vmatmul.mubr.f32.gmra.mrb[0].mxu0 %v571
      %v753 = vpop.f32.mrb[0].mxu0
      %v754 = vadd.f32 0.0, %v753
      %v755 = vpop.f32.mrb[0].mxu0
      %756 = vmatprep.mubr.f32.mxu0 0.0
      %757 = vmatmul.mubr.f32.gmra.mrb[0].mxu0 %v573
      %v758 = vpop.f32.mrb[0].mxu0
      %v759 = vadd.f32 0.0, %v758
      %v760 = vpop.f32.mrb[0].mxu0
      %761 = vmatprep.mubr.f32.mxu0 0.0
      %762 = vmatmul.mubr.f32.gmra.mrb[0].mxu0 %v575
      %v763 = vpop.f32.mrb[0].mxu0
      %v764 = vadd.f32 0.0, %v763
      %v765 = vpop.f32.mrb[0].mxu0
      %766 = vmatprep.mubr.f32.mxu0 0.0
      %767 = vmatmul.mubr.f32.gmra.mrb[0].mxu0 %v577
      %v768 = vpop.f32.mrb[0].mxu0
      %v769 = vadd.f32 0.0, %v768
      %v770 = vpop.f32.mrb[0].mxu0
      %771 = vmatprep.mubr.f32.mxu0 0.0
      %772 = vmatmul.mubr.f32.gmra.mrb[0].mxu0 %v579
      %v773 = vpop.f32.mrb[0].mxu0
      %v774 = vadd.f32 0.0, %v773
      %v775 = vpop.f32.mrb[0].mxu0
      %776 = vmatprep.mubr.f32.mxu0 0.0
      %777 = vmatmul.mubr.f32.gmra.mrb[0].mxu0 %v581
      %v778 = vpop.f32.mrb[0].mxu0
      %v779 = vadd.f32 0.0, %v778
      %v780 = vpop.f32.mrb[0].mxu0
      %781 = vmatprep.mubr.f32.mxu0 0.0
      %782 = vmatmul.mubr.f32.gmra.mrb[0].mxu0 %v583
      %v783 = vpop.f32.mrb[0].mxu0
      %v784 = vadd.f32 0.0, %v783
      %v785 = vpop.f32.mrb[0].mxu0
      %786 = vmatprep.mubr.f32.mxu0 0.0
      %787 = vmatmul.mubr.f32.gmra.mrb[0].mxu0 %v585
      %v788 = vpop.f32.mrb[0].mxu0
      %v789 = vadd.f32 0.0, %v788
      %v790 = vpop.f32.mrb[0].mxu0
      %791 = vmatprep.mubr.f32.mxu0 0.0
      %792 = vmatmul.mubr.f32.gmra.mrb[0].mxu0 %v587
      %v793 = vpop.f32.mrb[0].mxu0
      %v794 = vadd.f32 0.0, %v793
      %v795 = vpop.f32.mrb[0].mxu0
      %796 = vmatprep.mubr.f32.mxu0 0.0
      %797 = vmatmul.mubr.f32.gmra.mrb[0].mxu0 %v589
      %v798 = vpop.f32.mrb[0].mxu0
      %v799 = vadd.f32 0.0, %v798
      %v800 = vpop.f32.mrb[0].mxu0
      %801 = vmatprep.mubr.f32.mxu0 0.0
      %802 = vmatmul.mubr.f32.gmra.mrb[0].mxu0 %v591
      %v803 = vpop.f32.mrb[0].mxu0
      %v804 = vadd.f32 0.0, %v803
      %v805 = vpop.f32.mrb[0].mxu0
      %806 = vmatprep.mubr.f32.mxu0 0.0
      %807 = vmatmul.mubr.f32.gmra.mrb[0].mxu0 %v593
      %v808 = vpop.f32.mrb[0].mxu0
      %v809 = vadd.f32 0.0, %v808
      %v810 = vpop.f32.mrb[0].mxu0
      %811 = vmatprep.mubr.f32.mxu0 0.0
      %812 = vmatmul.mubr.f32.gmra.mrb[0].mxu0 %v595
      %v813 = vpop.f32.mrb[0].mxu0
      %v814 = vadd.f32 0.0, %v813
      %v815 = vpop.f32.mrb[0].mxu0
      %816 = vmatprep.mubr.f32.mxu0 0.0
      %817 = vmatmul.mubr.f32.gmra.mrb[0].mxu0 %v597
      %v818 = vpop.f32.mrb[0].mxu0
      %v819 = vadd.f32 0.0, %v818
      %v820 = vpop.f32.mrb[0].mxu0
      %821 = vmatprep.mubr.f32.mxu0 0.0
      %822 = vmatmul.mubr.f32.gmra.mrb[0].mxu0 %v599
      %v823 = vpop.f32.mrb[0].mxu0
      %v824 = vadd.f32 0.0, %v823
      %v825 = vpop.f32.mrb[0].mxu0
      %826 = vmatprep.mubr.f32.mxu0 0.0
      %827 = vmatmul.mubr.f32.gmra.mrb[0].mxu0 %v601
      %v828 = vpop.f32.mrb[0].mxu0
      %v829 = vadd.f32 0.0, %v828
      %v830 = vpop.f32.mrb[0].mxu0
      %831 = vmatprep.mubr.f32.mxu0 0.0
      %832 = vmatmul.mubr.f32.gmra.mrb[0].mxu0 %v603
      %v833 = vpop.f32.mrb[0].mxu0
      %v834 = vadd.f32 0.0, %v833
      %v835 = vpop.f32.mrb[0].mxu0
      %836 = vmatprep.mubr.f32.mxu0 0.0
      %837 = vmatmul.mubr.f32.gmra.mrb[0].mxu0 %v605
      %v838 = vpop.f32.mrb[0].mxu0
      %v839 = vadd.f32 0.0, %v838
      %v840 = vpop.f32.mrb[0].mxu0
      %841 = vmatprep.mubr.f32.mxu0 0.0
      %842 = vmatmul.mubr.f32.gmra.mrb[0].mxu0 %v607
      %v843 = vpop.f32.mrb[0].mxu0
      %v844 = vadd.f32 0.0, %v843
      %v845 = vpop.f32.mrb[0].mxu0
      %846 = vmatprep.mubr.f32.mxu0 0.0
      %847 = vmatmul.mubr.f32.gmra.mrb[0].mxu0 %v609
      %v848 = vpop.f32.mrb[0].mxu0
      %v849 = vadd.f32 0.0, %v848
      %v850 = vpop.f32.mrb[0].mxu0
      %851 = vmatprep.mubr.f32.mxu0 0.0
      %852 = vmatmul.mubr.f32.gmra.mrb[0].mxu0 %v611
      %v853 = vpop.f32.mrb[0].mxu0
      %v854 = vadd.f32 0.0, %v853
      %v855 = vpop.f32.mrb[0].mxu0
      %856 = vmatprep.mubr.f32.mxu0 0.0
      %857 = vmatmul.mubr.f32.gmra.mrb[0].mxu0 %v613
      %v858 = vpop.f32.mrb[0].mxu0
      %v859 = vadd.f32 0.0, %v858
      %v860 = vpop.f32.mrb[0].mxu0
      %861 = vmatprep.mubr.f32.mxu0 0.0
      %862 = vmatmul.mubr.f32.gmra.mrb[0].mxu0 %v615
      %v863 = vpop.f32.mrb[0].mxu0
      %v864 = vadd.f32 0.0, %v863
      %v865 = vpop.f32.mrb[0].mxu0
      %866 = vmatprep.mubr.f32.mxu0 0.0
      %867 = vmatmul.mubr.f32.gmra.mrb[0].mxu0 %v617
      %v868 = vpop.f32.mrb[0].mxu0
      %v869 = vadd.f32 0.0, %v868
      %v870 = vpop.f32.mrb[0].mxu0
      %871 = vmatprep.mubr.f32.mxu0 0.0
      %872 = vmatmul.mubr.f32.gmra.mrb[0].mxu0 %v619
      %v873 = vpop.f32.mrb[0].mxu0
      %v874 = vadd.f32 0.0, %v873
      %v875 = vpop.f32.mrb[0].mxu0
      %876 = vmatprep.mubr.f32.mxu0 0.0
      %877 = vmatmul.mubr.f32.gmra.mrb[0].mxu0 %v621
      %v878 = vpop.f32.mrb[0].mxu0
      %v879 = vadd.f32 0.0, %v878
      %v880 = vpop.f32.mrb[0].mxu0
      %881 = vmatprep.mubr.f32.mxu0 0.0
      %882 = vmatmul.mubr.f32.gmra.mrb[0].mxu0 %v623
      %v883 = vpop.f32.mrb[0].mxu0
      %v884 = vadd.f32 0.0, %v883
      %v885 = vpop.f32.mrb[0].mxu0
      %886 = vmatprep.mubr.f32.mxu0 0.0
      %887 = vmatmul.mubr.f32.gmra.mrb[0].mxu0 %v625
      %v888 = vpop.f32.mrb[0].mxu0
      %v889 = vadd.f32 0.0, %v888
      %v890 = vpop.f32.mrb[0].mxu0
      %891 = vdwg.mxu0
      %v892 = vsel %vm546, %v375, 0
      %v894 = vsel %vm546, %v376, 0
      %v896 = vsel %vm546, %v377, 0
      %v898 = vsel %vm546, %v378, 0
      %v900 = vsel %vm546, %v379, 0
      %v902 = vsel %vm546, %v380, 0
      %v904 = vsel %vm546, %v381, 0
      %v906 = vsel %vm546, %v382, 0
      %v908 = vsel %vm546, %v383, 0
      %v910 = vsel %vm546, %v384, 0
      %v912 = vsel %vm546, %v385, 0
      %v914 = vsel %vm546, %v386, 0
      %v916 = vsel %vm546, %v387, 0
      %v918 = vsel %vm546, %v388, 0
      %v920 = vsel %vm546, %v389, 0
      %v922 = vsel %vm546, %v390, 0
      %v924 = vsel %vm546, %v391, 0
      %v926 = vsel %vm546, %v392, 0
      %v928 = vsel %vm546, %v393, 0
      %v930 = vsel %vm546, %v394, 0
      %v932 = vsel %vm546, %v395, 0
      %v934 = vsel %vm546, %v396, 0
      %v936 = vsel %vm546, %v397, 0
      %v938 = vsel %vm546, %v398, 0
      %v940 = vsel %vm546, %v399, 0
      %v942 = vsel %vm546, %v400, 0
      %v944 = vsel %vm546, %v401, 0
      %v946 = vsel %vm546, %v402, 0
      %v948 = vsel %vm546, %v403, 0
      %v950 = vsel %vm546, %v404, 0
      %v952 = vsel %vm546, %v405, 0
      %v954 = vsel %vm546, %v406, 0
      %v956 = vsel %vm546, %v407, 0
      %v958 = vsel %vm546, %v408, 0
      %v960 = vsel %vm546, %v409, 0
      %v962 = vsel %vm546, %v410, 0
      %v964 = vsel %vm546, %v411, 0
      %v966 = vsel %vm546, %v412, 0
      %v968 = vsel %vm546, %v413, 0
      %v970 = vsel %vm546, %v414, 0
      %972 = vmatprep.subr.mxu0 0.0
      %973 = vmatpush1.msra.mxu0 %v420
      %974 = vmatprep.subr.mxu0 0.0
      %975 = vmatpush1.msra.mxu0 0.0
      %976 = vmatprep.subr.mxu0 0.0
      %977 = vmatpush1.msra.mxu0 0.0
      %978 = vmatprep.subr.mxu0 0.0
      %979 = vmatpush1.msra.mxu0 0.0
      %980 = vmatprep.subr.mxu0 0.0
      %981 = vmatpush1.msra.mxu0 0.0
      %982 = vmatprep.subr.mxu0 0.0
      %983 = vmatpush1.msra.mxu0 0.0
      %984 = vmatprep.subr.mxu0 0.0
      %985 = vmatpush1.msra.mxu0 0.0
      %986 = vmatprep.subr.mxu0 0.0
      %987 = vmatpush1.msra.mxu0 0.0
      %988 = vmatprep.subr.mxu0 0.0
      %989 = vmatpush1.msra.mxu0 0.0
      %990 = vmatprep.subr.mxu0 0.0
      %991 = vmatpush1.msra.mxu0 0.0
      %992 = vmatprep.subr.mxu0 0.0
      %993 = vmatpush1.msra.mxu0 0.0
      %994 = vmatprep.subr.mxu0 0.0
      %995 = vmatpush1.msra.mxu0 0.0
      %996 = vmatprep.subr.mxu0 0.0
      %997 = vmatpush1.msra.mxu0 0.0
      %998 = vmatprep.subr.mxu0 0.0
      %999 = vmatpush1.msra.mxu0 0.0
      %1000 = vmatprep.subr.mxu0 0.0
      %1001 = vmatpush1.msra.mxu0 0.0
      %1002 = vmatprep.subr.mxu0 0.0
      %1003 = vmatpush1.msra.mxu0 0.0
      %1004 = vmatprep.subr.mxu0 0.0
      %1005 = vmatpush1.msra.mxu0 0.0
      %1006 = vmatprep.subr.mxu0 0.0
      %1007 = vmatpush1.msra.mxu0 0.0
      %1008 = vmatprep.subr.mxu0 0.0
      %1009 = vmatpush1.msra.mxu0 0.0
      %1010 = vmatprep.subr.mxu0 0.0
      %1011 = vmatpush1.msra.mxu0 0.0
      %1012 = vmatprep.subr.mxu0 0.0
      %1013 = vmatpush1.msra.mxu0 0.0
      %1014 = vmatprep.subr.mxu0 0.0
      %1015 = vmatpush1.msra.mxu0 0.0
      %1016 = vmatprep.subr.mxu0 0.0
      %1017 = vmatpush1.msra.mxu0 0.0
      %1018 = vmatprep.subr.mxu0 0.0
      %1019 = vmatpush1.msra.mxu0 0.0
      %1020 = vmatprep.subr.mxu0 0.0
      %1021 = vmatpush1.msra.mxu0 0.0
      %1022 = vmatprep.subr.mxu0 0.0
      %1023 = vmatpush1.msra.mxu0 0.0
      %1024 = vmatprep.subr.mxu0 0.0
      %1025 = vmatpush1.msra.mxu0 0.0
      %1026 = vmatprep.subr.mxu0 0.0
      %1027 = vmatpush1.msra.mxu0 0.0
      %1028 = vmatprep.subr.mxu0 0.0
      %1029 = vmatpush1.msra.mxu0 0.0
      %1030 = vmatprep.subr.mxu0 0.0
      %1031 = vmatpush1.msra.mxu0 0.0
      %1032 = vmatprep.subr.mxu0 0.0
      %1033 = vmatpush1.msra.mxu0 0.0
      %1034 = vmatprep.subr.mxu0 0.0
      %1035 = vmatpush1.msra.mxu0 0.0
      %1036 = vmatprep.mubr.f32.mxu0 0.0
      %1037 = vmatmul.mubr.f32.gmra.mrb[0].mxu0 %v892
      %v1038 = vpop.f32.mrb[0].mxu0
      %v1039 = vadd.f32 %v694, %v1038
      %v1040 = vpop.f32.mrb[0].mxu0
      %1041 = vmatprep.mubr.f32.mxu0 0.0
      %1042 = vmatmul.mubr.f32.gmra.mrb[0].mxu0 %v894
      %v1043 = vpop.f32.mrb[0].mxu0
      %v1044 = vadd.f32 %v699, %v1043
      %v1045 = vpop.f32.mrb[0].mxu0
      %1046 = vmatprep.mubr.f32.mxu0 0.0
      %1047 = vmatmul.mubr.f32.gmra.mrb[0].mxu0 %v896
      %v1048 = vpop.f32.mrb[0].mxu0
      %v1049 = vadd.f32 %v704, %v1048
      %v1050 = vpop.f32.mrb[0].mxu0
      %1051 = vmatprep.mubr.f32.mxu0 0.0
      %1052 = vmatmul.mubr.f32.gmra.mrb[0].mxu0 %v898
      %v1053 = vpop.f32.mrb[0].mxu0
      %v1054 = vadd.f32 %v709, %v1053
      %v1055 = vpop.f32.mrb[0].mxu0
      %1056 = vmatprep.mubr.f32.mxu0 0.0
      %1057 = vmatmul.mubr.f32.gmra.mrb[0].mxu0 %v900
      %v1058 = vpop.f32.mrb[0].mxu0
      %v1059 = vadd.f32 %v714, %v1058
      %v1060 = vpop.f32.mrb[0].mxu0
      %1061 = vmatprep.mubr.f32.mxu0 0.0
      %1062 = vmatmul.mubr.f32.gmra.mrb[0].mxu0 %v902
      %v1063 = vpop.f32.mrb[0].mxu0
      %v1064 = vadd.f32 %v719, %v1063
      %v1065 = vpop.f32.mrb[0].mxu0
      %1066 = vmatprep.mubr.f32.mxu0 0.0
      %1067 = vmatmul.mubr.f32.gmra.mrb[0].mxu0 %v904
      %v1068 = vpop.f32.mrb[0].mxu0
      %v1069 = vadd.f32 %v724, %v1068
      %v1070 = vpop.f32.mrb[0].mxu0
      %1071 = vmatprep.mubr.f32.mxu0 0.0
      %1072 = vmatmul.mubr.f32.gmra.mrb[0].mxu0 %v906
      %v1073 = vpop.f32.mrb[0].mxu0
      %v1074 = vadd.f32 %v729, %v1073
      %v1075 = vpop.f32.mrb[0].mxu0
      %1076 = vmatprep.mubr.f32.mxu0 0.0
      %1077 = vmatmul.mubr.f32.gmra.mrb[0].mxu0 %v908
      %v1078 = vpop.f32.mrb[0].mxu0
      %v1079 = vadd.f32 %v734, %v1078
      %v1080 = vpop.f32.mrb[0].mxu0
      %1081 = vmatprep.mubr.f32.mxu0 0.0
      %1082 = vmatmul.mubr.f32.gmra.mrb[0].mxu0 %v910
      %v1083 = vpop.f32.mrb[0].mxu0
      %v1084 = vadd.f32 %v739, %v1083
      %v1085 = vpop.f32.mrb[0].mxu0
      %1086 = vmatprep.mubr.f32.mxu0 0.0
      %1087 = vmatmul.mubr.f32.gmra.mrb[0].mxu0 %v912
      %v1088 = vpop.f32.mrb[0].mxu0
      %v1089 = vadd.f32 %v744, %v1088
      %v1090 = vpop.f32.mrb[0].mxu0
      %1091 = vmatprep.mubr.f32.mxu0 0.0
      %1092 = vmatmul.mubr.f32.gmra.mrb[0].mxu0 %v914
      %v1093 = vpop.f32.mrb[0].mxu0
      %v1094 = vadd.f32 %v749, %v1093
      %v1095 = vpop.f32.mrb[0].mxu0
      %1096 = vmatprep.mubr.f32.mxu0 0.0
      %1097 = vmatmul.mubr.f32.gmra.mrb[0].mxu0 %v916
      %v1098 = vpop.f32.mrb[0].mxu0
      %v1099 = vadd.f32 %v754, %v1098
      %v1100 = vpop.f32.mrb[0].mxu0
      %1101 = vmatprep.mubr.f32.mxu0 0.0
      %1102 = vmatmul.mubr.f32.gmra.mrb[0].mxu0 %v918
      %v1103 = vpop.f32.mrb[0].mxu0
      %v1104 = vadd.f32 %v759, %v1103
      %v1105 = vpop.f32.mrb[0].mxu0
      %1106 = vmatprep.mubr.f32.mxu0 0.0
      %1107 = vmatmul.mubr.f32.gmra.mrb[0].mxu0 %v920
      %v1108 = vpop.f32.mrb[0].mxu0
      %v1109 = vadd.f32 %v764, %v1108
      %v1110 = vpop.f32.mrb[0].mxu0
      %1111 = vmatprep.mubr.f32.mxu0 0.0
      %1112 = vmatmul.mubr.f32.gmra.mrb[0].mxu0 %v922
      %v1113 = vpop.f32.mrb[0].mxu0
      %v1114 = vadd.f32 %v769, %v1113
      %v1115 = vpop.f32.mrb[0].mxu0
      %1116 = vmatprep.mubr.f32.mxu0 0.0
      %1117 = vmatmul.mubr.f32.gmra.mrb[0].mxu0 %v924
      %v1118 = vpop.f32.mrb[0].mxu0
      %v1119 = vadd.f32 %v774, %v1118
      %v1120 = vpop.f32.mrb[0].mxu0
      %1121 = vmatprep.mubr.f32.mxu0 0.0
      %1122 = vmatmul.mubr.f32.gmra.mrb[0].mxu0 %v926
      %v1123 = vpop.f32.mrb[0].mxu0
      %v1124 = vadd.f32 %v779, %v1123
      %v1125 = vpop.f32.mrb[0].mxu0
      %1126 = vmatprep.mubr.f32.mxu0 0.0
      %1127 = vmatmul.mubr.f32.gmra.mrb[0].mxu0 %v928
      %v1128 = vpop.f32.mrb[0].mxu0
      %v1129 = vadd.f32 %v784, %v1128
      %v1130 = vpop.f32.mrb[0].mxu0
      %1131 = vmatprep.mubr.f32.mxu0 0.0
      %1132 = vmatmul.mubr.f32.gmra.mrb[0].mxu0 %v930
      %v1133 = vpop.f32.mrb[0].mxu0
      %v1134 = vadd.f32 %v789, %v1133
      %v1135 = vpop.f32.mrb[0].mxu0
      %1136 = vmatprep.mubr.f32.mxu0 0.0
      %1137 = vmatmul.mubr.f32.gmra.mrb[0].mxu0 %v932
      %v1138 = vpop.f32.mrb[0].mxu0
      %v1139 = vadd.f32 %v794, %v1138
      %v1140 = vpop.f32.mrb[0].mxu0
      %1141 = vmatprep.mubr.f32.mxu0 0.0
      %1142 = vmatmul.mubr.f32.gmra.mrb[0].mxu0 %v934
      %v1143 = vpop.f32.mrb[0].mxu0
      %v1144 = vadd.f32 %v799, %v1143
      %v1145 = vpop.f32.mrb[0].mxu0
      %1146 = vmatprep.mubr.f32.mxu0 0.0
      %1147 = vmatmul.mubr.f32.gmra.mrb[0].mxu0 %v936
      %v1148 = vpop.f32.mrb[0].mxu0
      %v1149 = vadd.f32 %v804, %v1148
      %v1150 = vpop.f32.mrb[0].mxu0
      %1151 = vmatprep.mubr.f32.mxu0 0.0
      %1152 = vmatmul.mubr.f32.gmra.mrb[0].mxu0 %v938
      %v1153 = vpop.f32.mrb[0].mxu0
      %v1154 = vadd.f32 %v809, %v1153
      %v1155 = vpop.f32.mrb[0].mxu0
      %1156 = vmatprep.mubr.f32.mxu0 0.0
      %1157 = vmatmul.mubr.f32.gmra.mrb[0].mxu0 %v940
      %v1158 = vpop.f32.mrb[0].mxu0
      %v1159 = vadd.f32 %v814, %v1158
      %v1160 = vpop.f32.mrb[0].mxu0
      %1161 = vmatprep.mubr.f32.mxu0 0.0
      %1162 = vmatmul.mubr.f32.gmra.mrb[0].mxu0 %v942
      %v1163 = vpop.f32.mrb[0].mxu0
      %v1164 = vadd.f32 %v819, %v1163
      %v1165 = vpop.f32.mrb[0].mxu0
      %1166 = vmatprep.mubr.f32.mxu0 0.0
      %1167 = vmatmul.mubr.f32.gmra.mrb[0].mxu0 %v944
      %v1168 = vpop.f32.mrb[0].mxu0
      %v1169 = vadd.f32 %v824, %v1168
      %v1170 = vpop.f32.mrb[0].mxu0
      %1171 = vmatprep.mubr.f32.mxu0 0.0
      %1172 = vmatmul.mubr.f32.gmra.mrb[0].mxu0 %v946
      %v1173 = vpop.f32.mrb[0].mxu0
      %v1174 = vadd.f32 %v829, %v1173
      %v1175 = vpop.f32.mrb[0].mxu0
      %1176 = vmatprep.mubr.f32.mxu0 0.0
      %1177 = vmatmul.mubr.f32.gmra.mrb[0].mxu0 %v948
      %v1178 = vpop.f32.mrb[0].mxu0
      %v1179 = vadd.f32 %v834, %v1178
      %v1180 = vpop.f32.mrb[0].mxu0
      %1181 = vmatprep.mubr.f32.mxu0 0.0
      %1182 = vmatmul.mubr.f32.gmra.mrb[0].mxu0 %v950
      %v1183 = vpop.f32.mrb[0].mxu0
      %v1184 = vadd.f32 %v839, %v1183
      %v1185 = vpop.f32.mrb[0].mxu0
      %1186 = vmatprep.mubr.f32.mxu0 0.0
      %1187 = vmatmul.mubr.f32.gmra.mrb[0].mxu0 %v952
      %v1188 = vpop.f32.mrb[0].mxu0
      %v1189 = vadd.f32 %v844, %v1188
      %v1190 = vpop.f32.mrb[0].mxu0
      %1191 = vmatprep.mubr.f32.mxu0 0.0
      %1192 = vmatmul.mubr.f32.gmra.mrb[0].mxu0 %v954
      %v1193 = vpop.f32.mrb[0].mxu0
      %v1194 = vadd.f32 %v849, %v1193
      %v1195 = vpop.f32.mrb[0].mxu0
      %1196 = vmatprep.mubr.f32.mxu0 0.0
      %1197 = vmatmul.mubr.f32.gmra.mrb[0].mxu0 %v956
      %v1198 = vpop.f32.mrb[0].mxu0
      %v1199 = vadd.f32 %v854, %v1198
      %v1200 = vpop.f32.mrb[0].mxu0
      %1201 = vmatprep.mubr.f32.mxu0 0.0
      %1202 = vmatmul.mubr.f32.gmra.mrb[0].mxu0 %v958
      %v1203 = vpop.f32.mrb[0].mxu0
      %v1204 = vadd.f32 %v859, %v1203
      %v1205 = vpop.f32.mrb[0].mxu0
      %1206 = vmatprep.mubr.f32.mxu0 0.0
      %1207 = vmatmul.mubr.f32.gmra.mrb[0].mxu0 %v960
      %v1208 = vpop.f32.mrb[0].mxu0
      %v1209 = vadd.f32 %v864, %v1208
      %v1210 = vpop.f32.mrb[0].mxu0
      %1211 = vmatprep.mubr.f32.mxu0 0.0
      %1212 = vmatmul.mubr.f32.gmra.mrb[0].mxu0 %v962
      %v1213 = vpop.f32.mrb[0].mxu0
      %v1214 = vadd.f32 %v869, %v1213
      %v1215 = vpop.f32.mrb[0].mxu0
      %1216 = vmatprep.mubr.f32.mxu0 0.0
      %1217 = vmatmul.mubr.f32.gmra.mrb[0].mxu0 %v964
      %v1218 = vpop.f32.mrb[0].mxu0
      %v1219 = vadd.f32 %v874, %v1218
      %v1220 = vpop.f32.mrb[0].mxu0
      %1221 = vmatprep.mubr.f32.mxu0 0.0
      %1222 = vmatmul.mubr.f32.gmra.mrb[0].mxu0 %v966
      %v1223 = vpop.f32.mrb[0].mxu0
      %v1224 = vadd.f32 %v879, %v1223
      %v1225 = vpop.f32.mrb[0].mxu0
      %1226 = vmatprep.mubr.f32.mxu0 0.0
      %1227 = vmatmul.mubr.f32.gmra.mrb[0].mxu0 %v968
      %v1228 = vpop.f32.mrb[0].mxu0
      %v1229 = vadd.f32 %v884, %v1228
      %v1230 = vpop.f32.mrb[0].mxu0
      %1231 = vmatprep.mubr.f32.mxu0 0.0
      %1232 = vmatmul.mubr.f32.gmra.mrb[0].mxu0 %v970
      %v1233 = vpop.f32.mrb[0].mxu0
      %v1234 = vadd.f32 %v889, %v1233
      %v1235 = vpop.f32.mrb[0].mxu0
      %1236 = vdwg.mxu0
      %s1237 = scalar_lea.vmem %s2, 16
      %v1238 = vld [vmem:[%s1237] sm:$0xff]
      %vm1239 = vcmask 1045504
      %v1240 = vrot.slane %v375, 2
      %v1241 = vrot.slane %v376, 2
      %v1242 = vsel %vm1239, %v1240, %v1241
      %v1243 = vrot.slane %v377, 2
      %v1244 = vsel %vm1239, %v1241, %v1243
      %v1245 = vrot.slane %v378, 2
      %v1246 = vsel %vm1239, %v1243, %v1245
      %v1247 = vrot.slane %v379, 2
      %v1248 = vsel %vm1239, %v1245, %v1247
      %v1249 = vrot.slane %v380, 2
      %v1250 = vsel %vm1239, %v1247, %v1249
      %v1251 = vrot.slane %v381, 2
      %v1252 = vsel %vm1239, %v1249, %v1251
      %v1253 = vrot.slane %v382, 2
      %v1254 = vsel %vm1239, %v1251, %v1253
      %v1255 = vrot.slane %v383, 2
      %v1256 = vsel %vm1239, %v1253, %v1255
      %v1257 = vrot.slane %v384, 2
      %v1258 = vsel %vm1239, %v1255, %v1257
      %v1259 = vrot.slane %v385, 2
      %v1260 = vsel %vm1239, %v1257, %v1259
      %v1261 = vrot.slane %v386, 2
      %v1262 = vsel %vm1239, %v1259, %v1261
      %v1263 = vrot.slane %v387, 2
      %v1264 = vsel %vm1239, %v1261, %v1263
      %v1265 = vrot.slane %v388, 2
      %v1266 = vsel %vm1239, %v1263, %v1265
      %v1267 = vrot.slane %v389, 2
      %v1268 = vsel %vm1239, %v1265, %v1267
      %v1269 = vrot.slane %v390, 2
      %v1270 = vsel %vm1239, %v1267, %v1269
      %v1271 = vrot.slane %v391, 2
      %v1272 = vsel %vm1239, %v1269, %v1271
      %v1273 = vrot.slane %v392, 2
      %v1274 = vsel %vm1239, %v1271, %v1273
      %v1275 = vrot.slane %v393, 2
      %v1276 = vsel %vm1239, %v1273, %v1275
      %v1277 = vrot.slane %v394, 2
      %v1278 = vsel %vm1239, %v1275, %v1277
      %v1279 = vrot.slane %v395, 2
      %v1280 = vsel %vm1239, %v1277, %v1279
      %v1281 = vrot.slane %v396, 2
      %v1282 = vsel %vm1239, %v1279, %v1281
      %v1283 = vrot.slane %v397, 2
      %v1284 = vsel %vm1239, %v1281, %v1283
      %v1285 = vrot.slane %v398, 2
      %v1286 = vsel %vm1239, %v1283, %v1285
      %v1287 = vrot.slane %v399, 2
      %v1288 = vsel %vm1239, %v1285, %v1287
      %v1289 = vrot.slane %v400, 2
      %v1290 = vsel %vm1239, %v1287, %v1289
      %v1291 = vrot.slane %v401, 2
      %v1292 = vsel %vm1239, %v1289, %v1291
      %v1293 = vrot.slane %v402, 2
      %v1294 = vsel %vm1239, %v1291, %v1293
      %v1295 = vrot.slane %v403, 2
      %v1296 = vsel %vm1239, %v1293, %v1295
      %v1297 = vrot.slane %v404, 2
      %v1298 = vsel %vm1239, %v1295, %v1297
      %v1299 = vrot.slane %v405, 2
      %v1300 = vsel %vm1239, %v1297, %v1299
      %v1301 = vrot.slane %v406, 2
      %v1302 = vsel %vm1239, %v1299, %v1301
      %v1303 = vrot.slane %v407, 2
      %v1304 = vsel %vm1239, %v1301, %v1303
      %v1305 = vrot.slane %v408, 2
      %v1306 = vsel %vm1239, %v1303, %v1305
      %v1307 = vrot.slane %v409, 2
      %v1308 = vsel %vm1239, %v1305, %v1307
      %v1309 = vrot.slane %v410, 2
      %v1310 = vsel %vm1239, %v1307, %v1309
      %v1311 = vrot.slane %v411, 2
      %v1312 = vsel %vm1239, %v1309, %v1311
      %v1313 = vrot.slane %v412, 2
      %v1314 = vsel %vm1239, %v1311, %v1313
      %v1315 = vrot.slane %v413, 2
      %v1316 = vsel %vm1239, %v1313, %v1315
      %v1317 = vrot.slane %v414, 2
      %v1318 = vsel %vm1239, %v1315, %v1317
      %v1319 = vrot.slane %v415, 2
      %v1320 = vsel %vm1239, %v1317, %v1319
      %v1321 = vsel %vm546, %v1242, 0
      %v1323 = vsel %vm546, %v1244, 0
      %v1325 = vsel %vm546, %v1246, 0
      %v1327 = vsel %vm546, %v1248, 0
      %v1329 = vsel %vm546, %v1250, 0
      %v1331 = vsel %vm546, %v1252, 0
      %v1333 = vsel %vm546, %v1254, 0
      %v1335 = vsel %vm546, %v1256, 0
      %v1337 = vsel %vm546, %v1258, 0
      %v1339 = vsel %vm546, %v1260, 0
      %v1341 = vsel %vm546, %v1262, 0
      %v1343 = vsel %vm546, %v1264, 0
      %v1345 = vsel %vm546, %v1266, 0
      %v1347 = vsel %vm546, %v1268, 0
      %v1349 = vsel %vm546, %v1270, 0
      %v1351 = vsel %vm546, %v1272, 0
      %v1353 = vsel %vm546, %v1274, 0
      %v1355 = vsel %vm546, %v1276, 0
      %v1357 = vsel %vm546, %v1278, 0
      %v1359 = vsel %vm546, %v1280, 0
      %v1361 = vsel %vm546, %v1282, 0
      %v1363 = vsel %vm546, %v1284, 0
      %v1365 = vsel %vm546, %v1286, 0
      %v1367 = vsel %vm546, %v1288, 0
      %v1369 = vsel %vm546, %v1290, 0
      %v1371 = vsel %vm546, %v1292, 0
      %v1373 = vsel %vm546, %v1294, 0
      %v1375 = vsel %vm546, %v1296, 0
      %v1377 = vsel %vm546, %v1298, 0
      %v1379 = vsel %vm546, %v1300, 0
      %v1381 = vsel %vm546, %v1302, 0
      %v1383 = vsel %vm546, %v1304, 0
      %v1385 = vsel %vm546, %v1306, 0
      %v1387 = vsel %vm546, %v1308, 0
      %v1389 = vsel %vm546, %v1310, 0
      %v1391 = vsel %vm546, %v1312, 0
      %v1393 = vsel %vm546, %v1314, 0
      %v1395 = vsel %vm546, %v1316, 0
      %v1397 = vsel %vm546, %v1318, 0
      %v1399 = vsel %vm546, %v1320, 0
      %1401 = vmatprep.subr.mxu0 0.0
      %1402 = vmatpush1.msra.mxu0 %v1238
      %1403 = vmatprep.subr.mxu0 0.0
      %1404 = vmatpush1.msra.mxu0 0.0
      %1405 = vmatprep.subr.mxu0 0.0
      %1406 = vmatpush1.msra.mxu0 0.0
      %1407 = vmatprep.subr.mxu0 0.0
      %1408 = vmatpush1.msra.mxu0 0.0
      %1409 = vmatprep.subr.mxu0 0.0
      %1410 = vmatpush1.msra.mxu0 0.0
      %1411 = vmatprep.subr.mxu0 0.0
      %1412 = vmatpush1.msra.mxu0 0.0
      %1413 = vmatprep.subr.mxu0 0.0
      %1414 = vmatpush1.msra.mxu0 0.0
      %1415 = vmatprep.subr.mxu0 0.0
      %1416 = vmatpush1.msra.mxu0 0.0
      %1417 = vmatprep.subr.mxu0 0.0
      %1418 = vmatpush1.msra.mxu0 0.0
      %1419 = vmatprep.subr.mxu0 0.0
      %1420 = vmatpush1.msra.mxu0 0.0
      %1421 = vmatprep.subr.mxu0 0.0
      %1422 = vmatpush1.msra.mxu0 0.0
      %1423 = vmatprep.subr.mxu0 0.0
      %1424 = vmatpush1.msra.mxu0 0.0
      %1425 = vmatprep.subr.mxu0 0.0
      %1426 = vmatpush1.msra.mxu0 0.0
      %1427 = vmatprep.subr.mxu0 0.0
      %1428 = vmatpush1.msra.mxu0 0.0
      %1429 = vmatprep.subr.mxu0 0.0
      %1430 = vmatpush1.msra.mxu0 0.0
      %1431 = vmatprep.subr.mxu0 0.0
      %1432 = vmatpush1.msra.mxu0 0.0
      %1433 = vmatprep.subr.mxu0 0.0
      %1434 = vmatpush1.msra.mxu0 0.0
      %1435 = vmatprep.subr.mxu0 0.0
      %1436 = vmatpush1.msra.mxu0 0.0
      %1437 = vmatprep.subr.mxu0 0.0
      %1438 = vmatpush1.msra.mxu0 0.0
      %1439 = vmatprep.subr.mxu0 0.0
      %1440 = vmatpush1.msra.mxu0 0.0
      %1441 = vmatprep.subr.mxu0 0.0
      %1442 = vmatpush1.msra.mxu0 0.0
      %1443 = vmatprep.subr.mxu0 0.0
      %1444 = vmatpush1.msra.mxu0 0.0
      %1445 = vmatprep.subr.mxu0 0.0
      %1446 = vmatpush1.msra.mxu0 0.0
      %1447 = vmatprep.subr.mxu0 0.0
      %1448 = vmatpush1.msra.mxu0 0.0
      %1449 = vmatprep.subr.mxu0 0.0
      %1450 = vmatpush1.msra.mxu0 0.0
      %1451 = vmatprep.subr.mxu0 0.0
      %1452 = vmatpush1.msra.mxu0 0.0
      %1453 = vmatprep.subr.mxu0 0.0
      %1454 = vmatpush1.msra.mxu0 0.0
      %1455 = vmatprep.subr.mxu0 0.0
      %1456 = vmatpush1.msra.mxu0 0.0
      %1457 = vmatprep.subr.mxu0 0.0
      %1458 = vmatpush1.msra.mxu0 0.0
      %1459 = vmatprep.subr.mxu0 0.0
      %1460 = vmatpush1.msra.mxu0 0.0
      %1461 = vmatprep.subr.mxu0 0.0
      %1462 = vmatpush1.msra.mxu0 0.0
      %1463 = vmatprep.subr.mxu0 0.0
      %1464 = vmatpush1.msra.mxu0 0.0
      %1465 = vmatprep.mubr.f32.mxu0 0.0
      %1466 = vmatmul.mubr.f32.gmra.mrb[0].mxu0 %v1321
      %v1467 = vpop.f32.mrb[0].mxu0
      %v1468 = vadd.f32 0.0, %v1467
      %v1469 = vpop.f32.mrb[0].mxu0
      %1470 = vmatprep.mubr.f32.mxu0 0.0
      %1471 = vmatmul.mubr.f32.gmra.mrb[0].mxu0 %v1323
      %v1472 = vpop.f32.mrb[0].mxu0
      %v1473 = vadd.f32 0.0, %v1472
      %v1474 = vpop.f32.mrb[0].mxu0
      %1475 = vmatprep.mubr.f32.mxu0 0.0
      %1476 = vmatmul.mubr.f32.gmra.mrb[0].mxu0 %v1325
      %v1477 = vpop.f32.mrb[0].mxu0
      %v1478 = vadd.f32 0.0, %v1477
      %v1479 = vpop.f32.mrb[0].mxu0
      %1480 = vmatprep.mubr.f32.mxu0 0.0
      %1481 = vmatmul.mubr.f32.gmra.mrb[0].mxu0 %v1327
      %v1482 = vpop.f32.mrb[0].mxu0
      %v1483 = vadd.f32 0.0, %v1482
      %v1484 = vpop.f32.mrb[0].mxu0
      %1485 = vmatprep.mubr.f32.mxu0 0.0
      %1486 = vmatmul.mubr.f32.gmra.mrb[0].mxu0 %v1329
      %v1487 = vpop.f32.mrb[0].mxu0
      %v1488 = vadd.f32 0.0, %v1487
      %v1489 = vpop.f32.mrb[0].mxu0
      %1490 = vmatprep.mubr.f32.mxu0 0.0
      %1491 = vmatmul.mubr.f32.gmra.mrb[0].mxu0 %v1331
      %v1492 = vpop.f32.mrb[0].mxu0
      %v1493 = vadd.f32 0.0, %v1492
      %v1494 = vpop.f32.mrb[0].mxu0
      %1495 = vmatprep.mubr.f32.mxu0 0.0
      %1496 = vmatmul.mubr.f32.gmra.mrb[0].mxu0 %v1333
      %v1497 = vpop.f32.mrb[0].mxu0
      %v1498 = vadd.f32 0.0, %v1497
      %v1499 = vpop.f32.mrb[0].mxu0
      %1500 = vmatprep.mubr.f32.mxu0 0.0
      %1501 = vmatmul.mubr.f32.gmra.mrb[0].mxu0 %v1335
      %v1502 = vpop.f32.mrb[0].mxu0
      %v1503 = vadd.f32 0.0, %v1502
      %v1504 = vpop.f32.mrb[0].mxu0
      %1505 = vmatprep.mubr.f32.mxu0 0.0
      %1506 = vmatmul.mubr.f32.gmra.mrb[0].mxu0 %v1337
      %v1507 = vpop.f32.mrb[0].mxu0
      %v1508 = vadd.f32 0.0, %v1507
      %v1509 = vpop.f32.mrb[0].mxu0
      %1510 = vmatprep.mubr.f32.mxu0 0.0
      %1511 = vmatmul.mubr.f32.gmra.mrb[0].mxu0 %v1339
      %v1512 = vpop.f32.mrb[0].mxu0
      %v1513 = vadd.f32 0.0, %v1512
      %v1514 = vpop.f32.mrb[0].mxu0
      %1515 = vmatprep.mubr.f32.mxu0 0.0
      %1516 = vmatmul.mubr.f32.gmra.mrb[0].mxu0 %v1341
      %v1517 = vpop.f32.mrb[0].mxu0
      %v1518 = vadd.f32 0.0, %v1517
      %v1519 = vpop.f32.mrb[0].mxu0
      %1520 = vmatprep.mubr.f32.mxu0 0.0
      %1521 = vmatmul.mubr.f32.gmra.mrb[0].mxu0 %v1343
      %v1522 = vpop.f32.mrb[0].mxu0
      %v1523 = vadd.f32 0.0, %v1522
      %v1524 = vpop.f32.mrb[0].mxu0
      %1525 = vmatprep.mubr.f32.mxu0 0.0
      %1526 = vmatmul.mubr.f32.gmra.mrb[0].mxu0 %v1345
      %v1527 = vpop.f32.mrb[0].mxu0
      %v1528 = vadd.f32 0.0, %v1527
      %v1529 = vpop.f32.mrb[0].mxu0
      %1530 = vmatprep.mubr.f32.mxu0 0.0
      %1531 = vmatmul.mubr.f32.gmra.mrb[0].mxu0 %v1347
      %v1532 = vpop.f32.mrb[0].mxu0
      %v1533 = vadd.f32 0.0, %v1532
      %v1534 = vpop.f32.mrb[0].mxu0
      %1535 = vmatprep.mubr.f32.mxu0 0.0
      %1536 = vmatmul.mubr.f32.gmra.mrb[0].mxu0 %v1349
      %v1537 = vpop.f32.mrb[0].mxu0
      %v1538 = vadd.f32 0.0, %v1537
      %v1539 = vpop.f32.mrb[0].mxu0
      %1540 = vmatprep.mubr.f32.mxu0 0.0
      %1541 = vmatmul.mubr.f32.gmra.mrb[0].mxu0 %v1351
      %v1542 = vpop.f32.mrb[0].mxu0
      %v1543 = vadd.f32 0.0, %v1542
      %v1544 = vpop.f32.mrb[0].mxu0
      %1545 = vmatprep.mubr.f32.mxu0 0.0
      %1546 = vmatmul.mubr.f32.gmra.mrb[0].mxu0 %v1353
      %v1547 = vpop.f32.mrb[0].mxu0
      %v1548 = vadd.f32 0.0, %v1547
      %v1549 = vpop.f32.mrb[0].mxu0
      %1550 = vmatprep.mubr.f32.mxu0 0.0
      %1551 = vmatmul.mubr.f32.gmra.mrb[0].mxu0 %v1355
      %v1552 = vpop.f32.mrb[0].mxu0
      %v1553 = vadd.f32 0.0, %v1552
      %v1554 = vpop.f32.mrb[0].mxu0
      %1555 = vmatprep.mubr.f32.mxu0 0.0
      %1556 = vmatmul.mubr.f32.gmra.mrb[0].mxu0 %v1357
      %v1557 = vpop.f32.mrb[0].mxu0
      %v1558 = vadd.f32 0.0, %v1557
      %v1559 = vpop.f32.mrb[0].mxu0
      %1560 = vmatprep.mubr.f32.mxu0 0.0
      %1561 = vmatmul.mubr.f32.gmra.mrb[0].mxu0 %v1359
      %v1562 = vpop.f32.mrb[0].mxu0
      %v1563 = vadd.f32 0.0, %v1562
      %v1564 = vpop.f32.mrb[0].mxu0
      %1565 = vmatprep.mubr.f32.mxu0 0.0
      %1566 = vmatmul.mubr.f32.gmra.mrb[0].mxu0 %v1361
      %v1567 = vpop.f32.mrb[0].mxu0
      %v1568 = vadd.f32 0.0, %v1567
      %v1569 = vpop.f32.mrb[0].mxu0
      %1570 = vmatprep.mubr.f32.mxu0 0.0
      %1571 = vmatmul.mubr.f32.gmra.mrb[0].mxu0 %v1363
      %v1572 = vpop.f32.mrb[0].mxu0
      %v1573 = vadd.f32 0.0, %v1572
      %v1574 = vpop.f32.mrb[0].mxu0
      %1575 = vmatprep.mubr.f32.mxu0 0.0
      %1576 = vmatmul.mubr.f32.gmra.mrb[0].mxu0 %v1365
      %v1577 = vpop.f32.mrb[0].mxu0
      %v1578 = vadd.f32 0.0, %v1577
      %v1579 = vpop.f32.mrb[0].mxu0
      %1580 = vmatprep.mubr.f32.mxu0 0.0
      %1581 = vmatmul.mubr.f32.gmra.mrb[0].mxu0 %v1367
      %v1582 = vpop.f32.mrb[0].mxu0
      %v1583 = vadd.f32 0.0, %v1582
      %v1584 = vpop.f32.mrb[0].mxu0
      %1585 = vmatprep.mubr.f32.mxu0 0.0
      %1586 = vmatmul.mubr.f32.gmra.mrb[0].mxu0 %v1369
      %v1587 = vpop.f32.mrb[0].mxu0
      %v1588 = vadd.f32 0.0, %v1587
      %v1589 = vpop.f32.mrb[0].mxu0
      %1590 = vmatprep.mubr.f32.mxu0 0.0
      %1591 = vmatmul.mubr.f32.gmra.mrb[0].mxu0 %v1371
      %v1592 = vpop.f32.mrb[0].mxu0
      %v1593 = vadd.f32 0.0, %v1592
      %v1594 = vpop.f32.mrb[0].mxu0
      %1595 = vmatprep.mubr.f32.mxu0 0.0
      %1596 = vmatmul.mubr.f32.gmra.mrb[0].mxu0 %v1373
      %v1597 = vpop.f32.mrb[0].mxu0
      %v1598 = vadd.f32 0.0, %v1597
      %v1599 = vpop.f32.mrb[0].mxu0
      %1600 = vmatprep.mubr.f32.mxu0 0.0
      %1601 = vmatmul.mubr.f32.gmra.mrb[0].mxu0 %v1375
      %v1602 = vpop.f32.mrb[0].mxu0
      %v1603 = vadd.f32 0.0, %v1602
      %v1604 = vpop.f32.mrb[0].mxu0
      %1605 = vmatprep.mubr.f32.mxu0 0.0
      %1606 = vmatmul.mubr.f32.gmra.mrb[0].mxu0 %v1377
      %v1607 = vpop.f32.mrb[0].mxu0
      %v1608 = vadd.f32 0.0, %v1607
      %v1609 = vpop.f32.mrb[0].mxu0
      %1610 = vmatprep.mubr.f32.mxu0 0.0
      %1611 = vmatmul.mubr.f32.gmra.mrb[0].mxu0 %v1379
      %v1612 = vpop.f32.mrb[0].mxu0
      %v1613 = vadd.f32 0.0, %v1612
      %v1614 = vpop.f32.mrb[0].mxu0
      %1615 = vmatprep.mubr.f32.mxu0 0.0
      %1616 = vmatmul.mubr.f32.gmra.mrb[0].mxu0 %v1381
      %v1617 = vpop.f32.mrb[0].mxu0
      %v1618 = vadd.f32 0.0, %v1617
      %v1619 = vpop.f32.mrb[0].mxu0
      %1620 = vmatprep.mubr.f32.mxu0 0.0
      %1621 = vmatmul.mubr.f32.gmra.mrb[0].mxu0 %v1383
      %v1622 = vpop.f32.mrb[0].mxu0
      %v1623 = vadd.f32 0.0, %v1622
      %v1624 = vpop.f32.mrb[0].mxu0
      %1625 = vmatprep.mubr.f32.mxu0 0.0
      %1626 = vmatmul.mubr.f32.gmra.mrb[0].mxu0 %v1385
      %v1627 = vpop.f32.mrb[0].mxu0
      %v1628 = vadd.f32 0.0, %v1627
      %v1629 = vpop.f32.mrb[0].mxu0
      %1630 = vmatprep.mubr.f32.mxu0 0.0
      %1631 = vmatmul.mubr.f32.gmra.mrb[0].mxu0 %v1387
      %v1632 = vpop.f32.mrb[0].mxu0
      %v1633 = vadd.f32 0.0, %v1632
      %v1634 = vpop.f32.mrb[0].mxu0
      %1635 = vmatprep.mubr.f32.mxu0 0.0
      %1636 = vmatmul.mubr.f32.gmra.mrb[0].mxu0 %v1389
      %v1637 = vpop.f32.mrb[0].mxu0
      %v1638 = vadd.f32 0.0, %v1637
      %v1639 = vpop.f32.mrb[0].mxu0
      %1640 = vmatprep.mubr.f32.mxu0 0.0
      %1641 = vmatmul.mubr.f32.gmra.mrb[0].mxu0 %v1391
      %v1642 = vpop.f32.mrb[0].mxu0
      %v1643 = vadd.f32 0.0, %v1642
      %v1644 = vpop.f32.mrb[0].mxu0
      %1645 = vmatprep.mubr.f32.mxu0 0.0
      %1646 = vmatmul.mubr.f32.gmra.mrb[0].mxu0 %v1393
      %v1647 = vpop.f32.mrb[0].mxu0
      %v1648 = vadd.f32 0.0, %v1647
      %v1649 = vpop.f32.mrb[0].mxu0
      %1650 = vmatprep.mubr.f32.mxu0 0.0
      %1651 = vmatmul.mubr.f32.gmra.mrb[0].mxu0 %v1395
      %v1652 = vpop.f32.mrb[0].mxu0
      %v1653 = vadd.f32 0.0, %v1652
      %v1654 = vpop.f32.mrb[0].mxu0
      %1655 = vmatprep.mubr.f32.mxu0 0.0
      %1656 = vmatmul.mubr.f32.gmra.mrb[0].mxu0 %v1397
      %v1657 = vpop.f32.mrb[0].mxu0
      %v1658 = vadd.f32 0.0, %v1657
      %v1659 = vpop.f32.mrb[0].mxu0
      %1660 = vmatprep.mubr.f32.mxu0 0.0
      %1661 = vmatmul.mubr.f32.gmra.mrb[0].mxu0 %v1399
      %v1662 = vpop.f32.mrb[0].mxu0
      %v1663 = vadd.f32 0.0, %v1662
      %v1664 = vpop.f32.mrb[0].mxu0
      %1665 = vdwg.mxu0
      %v1666 = vadd.f32 %v1039, %v1468
      %v1667 = vadd.f32 %v1044, %v1473
      %v1668 = vadd.f32 %v1049, %v1478
      %v1669 = vadd.f32 %v1054, %v1483
      %v1670 = vadd.f32 %v1059, %v1488
      %v1671 = vadd.f32 %v1064, %v1493
      %v1672 = vadd.f32 %v1069, %v1498
      %v1673 = vadd.f32 %v1074, %v1503
      %v1674 = vadd.f32 %v1079, %v1508
      %v1675 = vadd.f32 %v1084, %v1513
      %v1676 = vadd.f32 %v1089, %v1518
      %v1677 = vadd.f32 %v1094, %v1523
      %v1678 = vadd.f32 %v1099, %v1528
      %v1679 = vadd.f32 %v1104, %v1533
      %v1680 = vadd.f32 %v1109, %v1538
      %v1681 = vadd.f32 %v1114, %v1543
      %v1682 = vadd.f32 %v1119, %v1548
      %v1683 = vadd.f32 %v1124, %v1553
      %v1684 = vadd.f32 %v1129, %v1558
      %v1685 = vadd.f32 %v1134, %v1563
      %v1686 = vadd.f32 %v1139, %v1568
      %v1687 = vadd.f32 %v1144, %v1573
      %v1688 = vadd.f32 %v1149, %v1578
      %v1689 = vadd.f32 %v1154, %v1583
      %v1690 = vadd.f32 %v1159, %v1588
      %v1691 = vadd.f32 %v1164, %v1593
      %v1692 = vadd.f32 %v1169, %v1598
      %v1693 = vadd.f32 %v1174, %v1603
      %v1694 = vadd.f32 %v1179, %v1608
      %v1695 = vadd.f32 %v1184, %v1613
      %v1696 = vadd.f32 %v1189, %v1618
      %v1697 = vadd.f32 %v1194, %v1623
      %v1698 = vadd.f32 %v1199, %v1628
      %v1699 = vadd.f32 %v1204, %v1633
      %v1700 = vadd.f32 %v1209, %v1638
      %v1701 = vadd.f32 %v1214, %v1643
      %v1702 = vadd.f32 %v1219, %v1648
      %v1703 = vadd.f32 %v1224, %v1653
      %v1704 = vadd.f32 %v1229, %v1658
      %v1705 = vadd.f32 %v1234, %v1663
      %s1706 = scalar_lea.vmem %s2, 24
      %v1707 = vld [vmem:[%s1706] sm:$0xff]
      %v1710 = vrot.slane %v416, 2
      %v1711 = vsel %vm1239, %v1319, %v1710
      %v1712 = vrot.slane %v417, 2
      %v1713 = vsel %vm1239, %v1710, %v1712
      %v1714 = vsel %vm546, %v1711, 0
      %v1716 = vsel %vm546, %v1713, 0
      %1718 = vmatprep.subr.mxu0 0.0
      %1719 = vmatpush1.msra.mxu0 %v1707
      %1720 = vmatprep.subr.mxu0 0.0
      %1721 = vmatpush1.msra.mxu0 0.0
      %1722 = vmatprep.subr.mxu0 0.0
      %1723 = vmatpush1.msra.mxu0 0.0
      %1724 = vmatprep.subr.mxu0 0.0
      %1725 = vmatpush1.msra.mxu0 0.0
      %1726 = vmatprep.subr.mxu0 0.0
      %1727 = vmatpush1.msra.mxu0 0.0
      %1728 = vmatprep.subr.mxu0 0.0
      %1729 = vmatpush1.msra.mxu0 0.0
      %1730 = vmatprep.subr.mxu0 0.0
      %1731 = vmatpush1.msra.mxu0 0.0
      %1732 = vmatprep.subr.mxu0 0.0
      %1733 = vmatpush1.msra.mxu0 0.0
      %1734 = vmatprep.subr.mxu0 0.0
      %1735 = vmatpush1.msra.mxu0 0.0
      %1736 = vmatprep.subr.mxu0 0.0
      %1737 = vmatpush1.msra.mxu0 0.0
      %1738 = vmatprep.subr.mxu0 0.0
      %1739 = vmatpush1.msra.mxu0 0.0
      %1740 = vmatprep.subr.mxu0 0.0
      %1741 = vmatpush1.msra.mxu0 0.0
      %1742 = vmatprep.subr.mxu0 0.0
      %1743 = vmatpush1.msra.mxu0 0.0
      %1744 = vmatprep.subr.mxu0 0.0
      %1745 = vmatpush1.msra.mxu0 0.0
      %1746 = vmatprep.subr.mxu0 0.0
      %1747 = vmatpush1.msra.mxu0 0.0
      %1748 = vmatprep.subr.mxu0 0.0
      %1749 = vmatpush1.msra.mxu0 0.0
      %1750 = vmatprep.subr.mxu0 0.0
      %1751 = vmatpush1.msra.mxu0 0.0
      %1752 = vmatprep.subr.mxu0 0.0
      %1753 = vmatpush1.msra.mxu0 0.0
      %1754 = vmatprep.subr.mxu0 0.0
      %1755 = vmatpush1.msra.mxu0 0.0
      %1756 = vmatprep.subr.mxu0 0.0
      %1757 = vmatpush1.msra.mxu0 0.0
      %1758 = vmatprep.subr.mxu0 0.0
      %1759 = vmatpush1.msra.mxu0 0.0
      %1760 = vmatprep.subr.mxu0 0.0
      %1761 = vmatpush1.msra.mxu0 0.0
      %1762 = vmatprep.subr.mxu0 0.0
      %1763 = vmatpush1.msra.mxu0 0.0
      %1764 = vmatprep.subr.mxu0 0.0
      %1765 = vmatpush1.msra.mxu0 0.0
      %1766 = vmatprep.subr.mxu0 0.0
      %1767 = vmatpush1.msra.mxu0 0.0
      %1768 = vmatprep.subr.mxu0 0.0
      %1769 = vmatpush1.msra.mxu0 0.0
      %1770 = vmatprep.subr.mxu0 0.0
      %1771 = vmatpush1.msra.mxu0 0.0
      %1772 = vmatprep.subr.mxu0 0.0
      %1773 = vmatpush1.msra.mxu0 0.0
      %1774 = vmatprep.subr.mxu0 0.0
      %1775 = vmatpush1.msra.mxu0 0.0
      %1776 = vmatprep.subr.mxu0 0.0
      %1777 = vmatpush1.msra.mxu0 0.0
      %1778 = vmatprep.subr.mxu0 0.0
      %1779 = vmatpush1.msra.mxu0 0.0
      %1780 = vmatprep.subr.mxu0 0.0
      %1781 = vmatpush1.msra.mxu0 0.0
      %1782 = vmatprep.mubr.f32.mxu0 0.0
      %1783 = vmatmul.mubr.f32.gmra.mrb[0].mxu0 %v1325
      %v1784 = vpop.f32.mrb[0].mxu0
      %v1785 = vadd.f32 0.0, %v1784
      %v1786 = vpop.f32.mrb[0].mxu0
      %1787 = vmatprep.mubr.f32.mxu0 0.0
      %1788 = vmatmul.mubr.f32.gmra.mrb[0].mxu0 %v1327
      %v1789 = vpop.f32.mrb[0].mxu0
      %v1790 = vadd.f32 0.0, %v1789
      %v1791 = vpop.f32.mrb[0].mxu0
      %1792 = vmatprep.mubr.f32.mxu0 0.0
      %1793 = vmatmul.mubr.f32.gmra.mrb[0].mxu0 %v1329
      %v1794 = vpop.f32.mrb[0].mxu0
      %v1795 = vadd.f32 0.0, %v1794
      %v1796 = vpop.f32.mrb[0].mxu0
      %1797 = vmatprep.mubr.f32.mxu0 0.0
      %1798 = vmatmul.mubr.f32.gmra.mrb[0].mxu0 %v1331
      %v1799 = vpop.f32.mrb[0].mxu0
      %v1800 = vadd.f32 0.0, %v1799
      %v1801 = vpop.f32.mrb[0].mxu0
      %1802 = vmatprep.mubr.f32.mxu0 0.0
      %1803 = vmatmul.mubr.f32.gmra.mrb[0].mxu0 %v1333
      %v1804 = vpop.f32.mrb[0].mxu0
      %v1805 = vadd.f32 0.0, %v1804
      %v1806 = vpop.f32.mrb[0].mxu0
      %1807 = vmatprep.mubr.f32.mxu0 0.0
      %1808 = vmatmul.mubr.f32.gmra.mrb[0].mxu0 %v1335
      %v1809 = vpop.f32.mrb[0].mxu0
      %v1810 = vadd.f32 0.0, %v1809
      %v1811 = vpop.f32.mrb[0].mxu0
      %1812 = vmatprep.mubr.f32.mxu0 0.0
      %1813 = vmatmul.mubr.f32.gmra.mrb[0].mxu0 %v1337
      %v1814 = vpop.f32.mrb[0].mxu0
      %v1815 = vadd.f32 0.0, %v1814
      %v1816 = vpop.f32.mrb[0].mxu0
      %1817 = vmatprep.mubr.f32.mxu0 0.0
      %1818 = vmatmul.mubr.f32.gmra.mrb[0].mxu0 %v1339
      %v1819 = vpop.f32.mrb[0].mxu0
      %v1820 = vadd.f32 0.0, %v1819
      %v1821 = vpop.f32.mrb[0].mxu0
      %1822 = vmatprep.mubr.f32.mxu0 0.0
      %1823 = vmatmul.mubr.f32.gmra.mrb[0].mxu0 %v1341
      %v1824 = vpop.f32.mrb[0].mxu0
      %v1825 = vadd.f32 0.0, %v1824
      %v1826 = vpop.f32.mrb[0].mxu0
      %1827 = vmatprep.mubr.f32.mxu0 0.0
      %1828 = vmatmul.mubr.f32.gmra.mrb[0].mxu0 %v1343
      %v1829 = vpop.f32.mrb[0].mxu0
      %v1830 = vadd.f32 0.0, %v1829
      %v1831 = vpop.f32.mrb[0].mxu0
      %1832 = vmatprep.mubr.f32.mxu0 0.0
      %1833 = vmatmul.mubr.f32.gmra.mrb[0].mxu0 %v1345
      %v1834 = vpop.f32.mrb[0].mxu0
      %v1835 = vadd.f32 0.0, %v1834
      %v1836 = vpop.f32.mrb[0].mxu0
      %1837 = vmatprep.mubr.f32.mxu0 0.0
      %1838 = vmatmul.mubr.f32.gmra.mrb[0].mxu0 %v1347
      %v1839 = vpop.f32.mrb[0].mxu0
      %v1840 = vadd.f32 0.0, %v1839
      %v1841 = vpop.f32.mrb[0].mxu0
      %1842 = vmatprep.mubr.f32.mxu0 0.0
      %1843 = vmatmul.mubr.f32.gmra.mrb[0].mxu0 %v1349
      %v1844 = vpop.f32.mrb[0].mxu0
      %v1845 = vadd.f32 0.0, %v1844
      %v1846 = vpop.f32.mrb[0].mxu0
      %1847 = vmatprep.mubr.f32.mxu0 0.0
      %1848 = vmatmul.mubr.f32.gmra.mrb[0].mxu0 %v1351
      %v1849 = vpop.f32.mrb[0].mxu0
      %v1850 = vadd.f32 0.0, %v1849
      %v1851 = vpop.f32.mrb[0].mxu0
      %1852 = vmatprep.mubr.f32.mxu0 0.0
      %1853 = vmatmul.mubr.f32.gmra.mrb[0].mxu0 %v1353
      %v1854 = vpop.f32.mrb[0].mxu0
      %v1855 = vadd.f32 0.0, %v1854
      %v1856 = vpop.f32.mrb[0].mxu0
      %1857 = vmatprep.mubr.f32.mxu0 0.0
      %1858 = vmatmul.mubr.f32.gmra.mrb[0].mxu0 %v1355
      %v1859 = vpop.f32.mrb[0].mxu0
      %v1860 = vadd.f32 0.0, %v1859
      %v1861 = vpop.f32.mrb[0].mxu0
      %1862 = vmatprep.mubr.f32.mxu0 0.0
      %1863 = vmatmul.mubr.f32.gmra.mrb[0].mxu0 %v1357
      %v1864 = vpop.f32.mrb[0].mxu0
      %v1865 = vadd.f32 0.0, %v1864
      %v1866 = vpop.f32.mrb[0].mxu0
      %1867 = vmatprep.mubr.f32.mxu0 0.0
      %1868 = vmatmul.mubr.f32.gmra.mrb[0].mxu0 %v1359
      %v1869 = vpop.f32.mrb[0].mxu0
      %v1870 = vadd.f32 0.0, %v1869
      %v1871 = vpop.f32.mrb[0].mxu0
      %1872 = vmatprep.mubr.f32.mxu0 0.0
      %1873 = vmatmul.mubr.f32.gmra.mrb[0].mxu0 %v1361
      %v1874 = vpop.f32.mrb[0].mxu0
      %v1875 = vadd.f32 0.0, %v1874
      %v1876 = vpop.f32.mrb[0].mxu0
      %1877 = vmatprep.mubr.f32.mxu0 0.0
      %1878 = vmatmul.mubr.f32.gmra.mrb[0].mxu0 %v1363
      %v1879 = vpop.f32.mrb[0].mxu0
      %v1880 = vadd.f32 0.0, %v1879
      %v1881 = vpop.f32.mrb[0].mxu0
      %1882 = vmatprep.mubr.f32.mxu0 0.0
      %1883 = vmatmul.mubr.f32.gmra.mrb[0].mxu0 %v1365
      %v1884 = vpop.f32.mrb[0].mxu0
      %v1885 = vadd.f32 0.0, %v1884
      %v1886 = vpop.f32.mrb[0].mxu0
      %1887 = vmatprep.mubr.f32.mxu0 0.0
      %1888 = vmatmul.mubr.f32.gmra.mrb[0].mxu0 %v1367
      %v1889 = vpop.f32.mrb[0].mxu0
      %v1890 = vadd.f32 0.0, %v1889
      %v1891 = vpop.f32.mrb[0].mxu0
      %1892 = vmatprep.mubr.f32.mxu0 0.0
      %1893 = vmatmul.mubr.f32.gmra.mrb[0].mxu0 %v1369
      %v1894 = vpop.f32.mrb[0].mxu0
      %v1895 = vadd.f32 0.0, %v1894
      %v1896 = vpop.f32.mrb[0].mxu0
      %1897 = vmatprep.mubr.f32.mxu0 0.0
      %1898 = vmatmul.mubr.f32.gmra.mrb[0].mxu0 %v1371
      %v1899 = vpop.f32.mrb[0].mxu0
      %v1900 = vadd.f32 0.0, %v1899
      %v1901 = vpop.f32.mrb[0].mxu0
      %1902 = vmatprep.mubr.f32.mxu0 0.0
      %1903 = vmatmul.mubr.f32.gmra.mrb[0].mxu0 %v1373
      %v1904 = vpop.f32.mrb[0].mxu0
      %v1905 = vadd.f32 0.0, %v1904
      %v1906 = vpop.f32.mrb[0].mxu0
      %1907 = vmatprep.mubr.f32.mxu0 0.0
      %1908 = vmatmul.mubr.f32.gmra.mrb[0].mxu0 %v1375
      %v1909 = vpop.f32.mrb[0].mxu0
      %v1910 = vadd.f32 0.0, %v1909
      %v1911 = vpop.f32.mrb[0].mxu0
      %1912 = vmatprep.mubr.f32.mxu0 0.0
      %1913 = vmatmul.mubr.f32.gmra.mrb[0].mxu0 %v1377
      %v1914 = vpop.f32.mrb[0].mxu0
      %v1915 = vadd.f32 0.0, %v1914
      %v1916 = vpop.f32.mrb[0].mxu0
      %1917 = vmatprep.mubr.f32.mxu0 0.0
      %1918 = vmatmul.mubr.f32.gmra.mrb[0].mxu0 %v1379
      %v1919 = vpop.f32.mrb[0].mxu0
      %v1920 = vadd.f32 0.0, %v1919
      %v1921 = vpop.f32.mrb[0].mxu0
      %1922 = vmatprep.mubr.f32.mxu0 0.0
      %1923 = vmatmul.mubr.f32.gmra.mrb[0].mxu0 %v1381
      %v1924 = vpop.f32.mrb[0].mxu0
      %v1925 = vadd.f32 0.0, %v1924
      %v1926 = vpop.f32.mrb[0].mxu0
      %1927 = vmatprep.mubr.f32.mxu0 0.0
      %1928 = vmatmul.mubr.f32.gmra.mrb[0].mxu0 %v1383
      %v1929 = vpop.f32.mrb[0].mxu0
      %v1930 = vadd.f32 0.0, %v1929
      %v1931 = vpop.f32.mrb[0].mxu0
      %1932 = vmatprep.mubr.f32.mxu0 0.0
      %1933 = vmatmul.mubr.f32.gmra.mrb[0].mxu0 %v1385
      %v1934 = vpop.f32.mrb[0].mxu0
      %v1935 = vadd.f32 0.0, %v1934
      %v1936 = vpop.f32.mrb[0].mxu0
      %1937 = vmatprep.mubr.f32.mxu0 0.0
      %1938 = vmatmul.mubr.f32.gmra.mrb[0].mxu0 %v1387
      %v1939 = vpop.f32.mrb[0].mxu0
      %v1940 = vadd.f32 0.0, %v1939
      %v1941 = vpop.f32.mrb[0].mxu0
      %1942 = vmatprep.mubr.f32.mxu0 0.0
      %1943 = vmatmul.mubr.f32.gmra.mrb[0].mxu0 %v1389
      %v1944 = vpop.f32.mrb[0].mxu0
      %v1945 = vadd.f32 0.0, %v1944
      %v1946 = vpop.f32.mrb[0].mxu0
      %1947 = vmatprep.mubr.f32.mxu0 0.0
      %1948 = vmatmul.mubr.f32.gmra.mrb[0].mxu0 %v1391
      %v1949 = vpop.f32.mrb[0].mxu0
      %v1950 = vadd.f32 0.0, %v1949
      %v1951 = vpop.f32.mrb[0].mxu0
      %1952 = vmatprep.mubr.f32.mxu0 0.0
      %1953 = vmatmul.mubr.f32.gmra.mrb[0].mxu0 %v1393
      %v1954 = vpop.f32.mrb[0].mxu0
      %v1955 = vadd.f32 0.0, %v1954
      %v1956 = vpop.f32.mrb[0].mxu0
      %1957 = vmatprep.mubr.f32.mxu0 0.0
      %1958 = vmatmul.mubr.f32.gmra.mrb[0].mxu0 %v1395
      %v1959 = vpop.f32.mrb[0].mxu0
      %v1960 = vadd.f32 0.0, %v1959
      %v1961 = vpop.f32.mrb[0].mxu0
      %1962 = vmatprep.mubr.f32.mxu0 0.0
      %1963 = vmatmul.mubr.f32.gmra.mrb[0].mxu0 %v1397
      %v1964 = vpop.f32.mrb[0].mxu0
      %v1965 = vadd.f32 0.0, %v1964
      %v1966 = vpop.f32.mrb[0].mxu0
      %1967 = vmatprep.mubr.f32.mxu0 0.0
      %1968 = vmatmul.mubr.f32.gmra.mrb[0].mxu0 %v1399
      %v1969 = vpop.f32.mrb[0].mxu0
      %v1970 = vadd.f32 0.0, %v1969
      %v1971 = vpop.f32.mrb[0].mxu0
      %1972 = vmatprep.mubr.f32.mxu0 0.0
      %1973 = vmatmul.mubr.f32.gmra.mrb[0].mxu0 %v1714
      %v1974 = vpop.f32.mrb[0].mxu0
      %v1975 = vadd.f32 0.0, %v1974
      %v1976 = vpop.f32.mrb[0].mxu0
      %1977 = vmatprep.mubr.f32.mxu0 0.0
      %1978 = vmatmul.mubr.f32.gmra.mrb[0].mxu0 %v1716
      %v1979 = vpop.f32.mrb[0].mxu0
      %v1980 = vadd.f32 0.0, %v1979
      %v1981 = vpop.f32.mrb[0].mxu0
      %1982 = vdwg.mxu0
      %v1983 = vadd.f32 %v1666, %v1785
      %v1984 = vadd.f32 %v1667, %v1790
      %v1985 = vadd.f32 %v1668, %v1795
      %v1986 = vadd.f32 %v1669, %v1800
      %v1987 = vadd.f32 %v1670, %v1805
      %v1988 = vadd.f32 %v1671, %v1810
      %v1989 = vadd.f32 %v1672, %v1815
      %v1990 = vadd.f32 %v1673, %v1820
      %v1991 = vadd.f32 %v1674, %v1825
      %v1992 = vadd.f32 %v1675, %v1830
      %v1993 = vadd.f32 %v1676, %v1835
      %v1994 = vadd.f32 %v1677, %v1840
      %v1995 = vadd.f32 %v1678, %v1845
      %v1996 = vadd.f32 %v1679, %v1850
      %v1997 = vadd.f32 %v1680, %v1855
      %v1998 = vadd.f32 %v1681, %v1860
      %v1999 = vadd.f32 %v1682, %v1865
      %v2000 = vadd.f32 %v1683, %v1870
      %v2001 = vadd.f32 %v1684, %v1875
      %v2002 = vadd.f32 %v1685, %v1880
      %v2003 = vadd.f32 %v1686, %v1885
      %v2004 = vadd.f32 %v1687, %v1890
      %v2005 = vadd.f32 %v1688, %v1895
      %v2006 = vadd.f32 %v1689, %v1900
      %v2007 = vadd.f32 %v1690, %v1905
      %v2008 = vadd.f32 %v1691, %v1910
      %v2009 = vadd.f32 %v1692, %v1915
      %v2010 = vadd.f32 %v1693, %v1920
      %v2011 = vadd.f32 %v1694, %v1925
      %v2012 = vadd.f32 %v1695, %v1930
      %v2013 = vadd.f32 %v1696, %v1935
      %v2014 = vadd.f32 %v1697, %v1940
      %v2015 = vadd.f32 %v1698, %v1945
      %v2016 = vadd.f32 %v1699, %v1950
      %v2017 = vadd.f32 %v1700, %v1955
      %v2018 = vadd.f32 %v1701, %v1960
      %v2019 = vadd.f32 %v1702, %v1965
      %v2020 = vadd.f32 %v1703, %v1970
      %v2021 = vadd.f32 %v1704, %v1975
      %v2022 = vadd.f32 %v1705, %v1980
      %s2023 = scalar_lea.vmem %s2, 32
      %v2024 = vld [vmem:[%s2023] sm:$0xff]
      %vm2025 = vcmask 1044480
      %v2026 = vrot.slane %v377, 3
      %v2027 = vrot.slane %v378, 3
      %v2028 = vsel %vm2025, %v2026, %v2027
      %v2029 = vrot.slane %v379, 3
      %v2030 = vsel %vm2025, %v2027, %v2029
      %v2031 = vrot.slane %v380, 3
      %v2032 = vsel %vm2025, %v2029, %v2031
      %v2033 = vrot.slane %v381, 3
      %v2034 = vsel %vm2025, %v2031, %v2033
      %v2035 = vrot.slane %v382, 3
      %v2036 = vsel %vm2025, %v2033, %v2035
      %v2037 = vrot.slane %v383, 3
      %v2038 = vsel %vm2025, %v2035, %v2037
      %v2039 = vrot.slane %v384, 3
      %v2040 = vsel %vm2025, %v2037, %v2039
      %v2041 = vrot.slane %v385, 3
      %v2042 = vsel %vm2025, %v2039, %v2041
      %v2043 = vrot.slane %v386, 3
      %v2044 = vsel %vm2025, %v2041, %v2043
      %v2045 = vrot.slane %v387, 3
      %v2046 = vsel %vm2025, %v2043, %v2045
      %v2047 = vrot.slane %v388, 3
      %v2048 = vsel %vm2025, %v2045, %v2047
      %v2049 = vrot.slane %v389, 3
      %v2050 = vsel %vm2025, %v2047, %v2049
      %v2051 = vrot.slane %v390, 3
      %v2052 = vsel %vm2025, %v2049, %v2051
      %v2053 = vrot.slane %v391, 3
      %v2054 = vsel %vm2025, %v2051, %v2053
      %v2055 = vrot.slane %v392, 3
      %v2056 = vsel %vm2025, %v2053, %v2055
      %v2057 = vrot.slane %v393, 3
      %v2058 = vsel %vm2025, %v2055, %v2057
      %v2059 = vrot.slane %v394, 3
      %v2060 = vsel %vm2025, %v2057, %v2059
      %v2061 = vrot.slane %v395, 3
      %v2062 = vsel %vm2025, %v2059, %v2061
      %v2063 = vrot.slane %v396, 3
      %v2064 = vsel %vm2025, %v2061, %v2063
      %v2065 = vrot.slane %v397, 3
      %v2066 = vsel %vm2025, %v2063, %v2065
      %v2067 = vrot.slane %v398, 3
      %v2068 = vsel %vm2025, %v2065, %v2067
      %v2069 = vrot.slane %v399, 3
      %v2070 = vsel %vm2025, %v2067, %v2069
      %v2071 = vrot.slane %v400, 3
      %v2072 = vsel %vm2025, %v2069, %v2071
      %v2073 = vrot.slane %v401, 3
      %v2074 = vsel %vm2025, %v2071, %v2073
      %v2075 = vrot.slane %v402, 3
      %v2076 = vsel %vm2025, %v2073, %v2075
      %v2077 = vrot.slane %v403, 3
      %v2078 = vsel %vm2025, %v2075, %v2077
      %v2079 = vrot.slane %v404, 3
      %v2080 = vsel %vm2025, %v2077, %v2079
      %v2081 = vrot.slane %v405, 3
      %v2082 = vsel %vm2025, %v2079, %v2081
      %v2083 = vrot.slane %v406, 3
      %v2084 = vsel %vm2025, %v2081, %v2083
      %v2085 = vrot.slane %v407, 3
      %v2086 = vsel %vm2025, %v2083, %v2085
      %v2087 = vrot.slane %v408, 3
      %v2088 = vsel %vm2025, %v2085, %v2087
      %v2089 = vrot.slane %v409, 3
      %v2090 = vsel %vm2025, %v2087, %v2089
      %v2091 = vrot.slane %v410, 3
      %v2092 = vsel %vm2025, %v2089, %v2091
      %v2093 = vrot.slane %v411, 3
      %v2094 = vsel %vm2025, %v2091, %v2093
      %v2095 = vrot.slane %v412, 3
      %v2096 = vsel %vm2025, %v2093, %v2095
      %v2097 = vrot.slane %v413, 3
      %v2098 = vsel %vm2025, %v2095, %v2097
      %v2099 = vrot.slane %v414, 3
      %v2100 = vsel %vm2025, %v2097, %v2099
      %v2101 = vrot.slane %v415, 3
      %v2102 = vsel %vm2025, %v2099, %v2101
      %v2103 = vrot.slane %v416, 3
      %v2104 = vsel %vm2025, %v2101, %v2103
      %v2105 = vrot.slane %v417, 3
      %v2106 = vsel %vm2025, %v2103, %v2105
      %v2107 = vsel %vm546, %v2028, 0
      %v2109 = vsel %vm546, %v2030, 0
      %v2111 = vsel %vm546, %v2032, 0
      %v2113 = vsel %vm546, %v2034, 0
      %v2115 = vsel %vm546, %v2036, 0
      %v2117 = vsel %vm546, %v2038, 0
      %v2119 = vsel %vm546, %v2040, 0
      %v2121 = vsel %vm546, %v2042, 0
      %v2123 = vsel %vm546, %v2044, 0
      %v2125 = vsel %vm546, %v2046, 0
      %v2127 = vsel %vm546, %v2048, 0
      %v2129 = vsel %vm546, %v2050, 0
      %v2131 = vsel %vm546, %v2052, 0
      %v2133 = vsel %vm546, %v2054, 0
      %v2135 = vsel %vm546, %v2056, 0
      %v2137 = vsel %vm546, %v2058, 0
      %v2139 = vsel %vm546, %v2060, 0
      %v2141 = vsel %vm546, %v2062, 0
      %v2143 = vsel %vm546, %v2064, 0
      %v2145 = vsel %vm546, %v2066, 0
      %v2147 = vsel %vm546, %v2068, 0
      %v2149 = vsel %vm546, %v2070, 0
      %v2151 = vsel %vm546, %v2072, 0
      %v2153 = vsel %vm546, %v2074, 0
      %v2155 = vsel %vm546, %v2076, 0
      %v2157 = vsel %vm546, %v2078, 0
      %v2159 = vsel %vm546, %v2080, 0
      %v2161 = vsel %vm546, %v2082, 0
      %v2163 = vsel %vm546, %v2084, 0
      %v2165 = vsel %vm546, %v2086, 0
      %v2167 = vsel %vm546, %v2088, 0
      %v2169 = vsel %vm546, %v2090, 0
      %v2171 = vsel %vm546, %v2092, 0
      %v2173 = vsel %vm546, %v2094, 0
      %v2175 = vsel %vm546, %v2096, 0
      %v2177 = vsel %vm546, %v2098, 0
      %v2179 = vsel %vm546, %v2100, 0
      %v2181 = vsel %vm546, %v2102, 0
      %v2183 = vsel %vm546, %v2104, 0
      %v2185 = vsel %vm546, %v2106, 0
      %2187 = vmatprep.subr.mxu0 0.0
      %2188 = vmatpush1.msra.mxu0 %v2024
      %2189 = vmatprep.subr.mxu0 0.0
      %2190 = vmatpush1.msra.mxu0 0.0
      %2191 = vmatprep.subr.mxu0 0.0
      %2192 = vmatpush1.msra.mxu0 0.0
      %2193 = vmatprep.subr.mxu0 0.0
      %2194 = vmatpush1.msra.mxu0 0.0
      %2195 = vmatprep.subr.mxu0 0.0
      %2196 = vmatpush1.msra.mxu0 0.0
      %2197 = vmatprep.subr.mxu0 0.0
      %2198 = vmatpush1.msra.mxu0 0.0
      %2199 = vmatprep.subr.mxu0 0.0
      %2200 = vmatpush1.msra.mxu0 0.0
      %2201 = vmatprep.subr.mxu0 0.0
      %2202 = vmatpush1.msra.mxu0 0.0
      %2203 = vmatprep.subr.mxu0 0.0
      %2204 = vmatpush1.msra.mxu0 0.0
      %2205 = vmatprep.subr.mxu0 0.0
      %2206 = vmatpush1.msra.mxu0 0.0
      %2207 = vmatprep.subr.mxu0 0.0
      %2208 = vmatpush1.msra.mxu0 0.0
      %2209 = vmatprep.subr.mxu0 0.0
      %2210 = vmatpush1.msra.mxu0 0.0
      %2211 = vmatprep.subr.mxu0 0.0
      %2212 = vmatpush1.msra.mxu0 0.0
      %2213 = vmatprep.subr.mxu0 0.0
      %2214 = vmatpush1.msra.mxu0 0.0
      %2215 = vmatprep.subr.mxu0 0.0
      %2216 = vmatpush1.msra.mxu0 0.0
      %2217 = vmatprep.subr.mxu0 0.0
      %2218 = vmatpush1.msra.mxu0 0.0
      %2219 = vmatprep.subr.mxu0 0.0
      %2220 = vmatpush1.msra.mxu0 0.0
      %2221 = vmatprep.subr.mxu0 0.0
      %2222 = vmatpush1.msra.mxu0 0.0
      %2223 = vmatprep.subr.mxu0 0.0
      %2224 = vmatpush1.msra.mxu0 0.0
      %2225 = vmatprep.subr.mxu0 0.0
      %2226 = vmatpush1.msra.mxu0 0.0
      %2227 = vmatprep.subr.mxu0 0.0
      %2228 = vmatpush1.msra.mxu0 0.0
      %2229 = vmatprep.subr.mxu0 0.0
      %2230 = vmatpush1.msra.mxu0 0.0
      %2231 = vmatprep.subr.mxu0 0.0
      %2232 = vmatpush1.msra.mxu0 0.0
      %2233 = vmatprep.subr.mxu0 0.0
      %2234 = vmatpush1.msra.mxu0 0.0
      %2235 = vmatprep.subr.mxu0 0.0
      %2236 = vmatpush1.msra.mxu0 0.0
      %2237 = vmatprep.subr.mxu0 0.0
      %2238 = vmatpush1.msra.mxu0 0.0
      %2239 = vmatprep.subr.mxu0 0.0
      %2240 = vmatpush1.msra.mxu0 0.0
      %2241 = vmatprep.subr.mxu0 0.0
      %2242 = vmatpush1.msra.mxu0 0.0
      %2243 = vmatprep.subr.mxu0 0.0
      %2244 = vmatpush1.msra.mxu0 0.0
      %2245 = vmatprep.subr.mxu0 0.0
      %2246 = vmatpush1.msra.mxu0 0.0
      %2247 = vmatprep.subr.mxu0 0.0
      %2248 = vmatpush1.msra.mxu0 0.0
      %2249 = vmatprep.subr.mxu0 0.0
      %2250 = vmatpush1.msra.mxu0 0.0
      %2251 = vmatprep.mubr.f32.mxu0 0.0
      %2252 = vmatmul.mubr.f32.gmra.mrb[0].mxu0 %v2107
      %v2253 = vpop.f32.mrb[0].mxu0
      %v2254 = vadd.f32 0.0, %v2253
      %v2255 = vpop.f32.mrb[0].mxu0
      %2256 = vmatprep.mubr.f32.mxu0 0.0
      %2257 = vmatmul.mubr.f32.gmra.mrb[0].mxu0 %v2109
      %v2258 = vpop.f32.mrb[0].mxu0
      %v2259 = vadd.f32 0.0, %v2258
      %v2260 = vpop.f32.mrb[0].mxu0
      %2261 = vmatprep.mubr.f32.mxu0 0.0
      %2262 = vmatmul.mubr.f32.gmra.mrb[0].mxu0 %v2111
      %v2263 = vpop.f32.mrb[0].mxu0
      %v2264 = vadd.f32 0.0, %v2263
      %v2265 = vpop.f32.mrb[0].mxu0
      %2266 = vmatprep.mubr.f32.mxu0 0.0
      %2267 = vmatmul.mubr.f32.gmra.mrb[0].mxu0 %v2113
      %v2268 = vpop.f32.mrb[0].mxu0
      %v2269 = vadd.f32 0.0, %v2268
      %v2270 = vpop.f32.mrb[0].mxu0
      %2271 = vmatprep.mubr.f32.mxu0 0.0
      %2272 = vmatmul.mubr.f32.gmra.mrb[0].mxu0 %v2115
      %v2273 = vpop.f32.mrb[0].mxu0
      %v2274 = vadd.f32 0.0, %v2273
      %v2275 = vpop.f32.mrb[0].mxu0
      %2276 = vmatprep.mubr.f32.mxu0 0.0
      %2277 = vmatmul.mubr.f32.gmra.mrb[0].mxu0 %v2117
      %v2278 = vpop.f32.mrb[0].mxu0
      %v2279 = vadd.f32 0.0, %v2278
      %v2280 = vpop.f32.mrb[0].mxu0
      %2281 = vmatprep.mubr.f32.mxu0 0.0
      %2282 = vmatmul.mubr.f32.gmra.mrb[0].mxu0 %v2119
      %v2283 = vpop.f32.mrb[0].mxu0
      %v2284 = vadd.f32 0.0, %v2283
      %v2285 = vpop.f32.mrb[0].mxu0
      %2286 = vmatprep.mubr.f32.mxu0 0.0
      %2287 = vmatmul.mubr.f32.gmra.mrb[0].mxu0 %v2121
      %v2288 = vpop.f32.mrb[0].mxu0
      %v2289 = vadd.f32 0.0, %v2288
      %v2290 = vpop.f32.mrb[0].mxu0
      %2291 = vmatprep.mubr.f32.mxu0 0.0
      %2292 = vmatmul.mubr.f32.gmra.mrb[0].mxu0 %v2123
      %v2293 = vpop.f32.mrb[0].mxu0
      %v2294 = vadd.f32 0.0, %v2293
      %v2295 = vpop.f32.mrb[0].mxu0
      %2296 = vmatprep.mubr.f32.mxu0 0.0
      %2297 = vmatmul.mubr.f32.gmra.mrb[0].mxu0 %v2125
      %v2298 = vpop.f32.mrb[0].mxu0
      %v2299 = vadd.f32 0.0, %v2298
      %v2300 = vpop.f32.mrb[0].mxu0
      %2301 = vmatprep.mubr.f32.mxu0 0.0
      %2302 = vmatmul.mubr.f32.gmra.mrb[0].mxu0 %v2127
      %v2303 = vpop.f32.mrb[0].mxu0
      %v2304 = vadd.f32 0.0, %v2303
      %v2305 = vpop.f32.mrb[0].mxu0
      %2306 = vmatprep.mubr.f32.mxu0 0.0
      %2307 = vmatmul.mubr.f32.gmra.mrb[0].mxu0 %v2129
      %v2308 = vpop.f32.mrb[0].mxu0
      %v2309 = vadd.f32 0.0, %v2308
      %v2310 = vpop.f32.mrb[0].mxu0
      %2311 = vmatprep.mubr.f32.mxu0 0.0
      %2312 = vmatmul.mubr.f32.gmra.mrb[0].mxu0 %v2131
      %v2313 = vpop.f32.mrb[0].mxu0
      %v2314 = vadd.f32 0.0, %v2313
      %v2315 = vpop.f32.mrb[0].mxu0
      %2316 = vmatprep.mubr.f32.mxu0 0.0
      %2317 = vmatmul.mubr.f32.gmra.mrb[0].mxu0 %v2133
      %v2318 = vpop.f32.mrb[0].mxu0
      %v2319 = vadd.f32 0.0, %v2318
      %v2320 = vpop.f32.mrb[0].mxu0
      %2321 = vmatprep.mubr.f32.mxu0 0.0
      %2322 = vmatmul.mubr.f32.gmra.mrb[0].mxu0 %v2135
      %v2323 = vpop.f32.mrb[0].mxu0
      %v2324 = vadd.f32 0.0, %v2323
      %v2325 = vpop.f32.mrb[0].mxu0
      %2326 = vmatprep.mubr.f32.mxu0 0.0
      %2327 = vmatmul.mubr.f32.gmra.mrb[0].mxu0 %v2137
      %v2328 = vpop.f32.mrb[0].mxu0
      %v2329 = vadd.f32 0.0, %v2328
      %v2330 = vpop.f32.mrb[0].mxu0
      %2331 = vmatprep.mubr.f32.mxu0 0.0
      %2332 = vmatmul.mubr.f32.gmra.mrb[0].mxu0 %v2139
      %v2333 = vpop.f32.mrb[0].mxu0
      %v2334 = vadd.f32 0.0, %v2333
      %v2335 = vpop.f32.mrb[0].mxu0
      %2336 = vmatprep.mubr.f32.mxu0 0.0
      %2337 = vmatmul.mubr.f32.gmra.mrb[0].mxu0 %v2141
      %v2338 = vpop.f32.mrb[0].mxu0
      %v2339 = vadd.f32 0.0, %v2338
      %v2340 = vpop.f32.mrb[0].mxu0
      %2341 = vmatprep.mubr.f32.mxu0 0.0
      %2342 = vmatmul.mubr.f32.gmra.mrb[0].mxu0 %v2143
      %v2343 = vpop.f32.mrb[0].mxu0
      %v2344 = vadd.f32 0.0, %v2343
      %v2345 = vpop.f32.mrb[0].mxu0
      %2346 = vmatprep.mubr.f32.mxu0 0.0
      %2347 = vmatmul.mubr.f32.gmra.mrb[0].mxu0 %v2145
      %v2348 = vpop.f32.mrb[0].mxu0
      %v2349 = vadd.f32 0.0, %v2348
      %v2350 = vpop.f32.mrb[0].mxu0
      %2351 = vmatprep.mubr.f32.mxu0 0.0
      %2352 = vmatmul.mubr.f32.gmra.mrb[0].mxu0 %v2147
      %v2353 = vpop.f32.mrb[0].mxu0
      %v2354 = vadd.f32 0.0, %v2353
      %v2355 = vpop.f32.mrb[0].mxu0
      %2356 = vmatprep.mubr.f32.mxu0 0.0
      %2357 = vmatmul.mubr.f32.gmra.mrb[0].mxu0 %v2149
      %v2358 = vpop.f32.mrb[0].mxu0
      %v2359 = vadd.f32 0.0, %v2358
      %v2360 = vpop.f32.mrb[0].mxu0
      %2361 = vmatprep.mubr.f32.mxu0 0.0
      %2362 = vmatmul.mubr.f32.gmra.mrb[0].mxu0 %v2151
      %v2363 = vpop.f32.mrb[0].mxu0
      %v2364 = vadd.f32 0.0, %v2363
      %v2365 = vpop.f32.mrb[0].mxu0
      %2366 = vmatprep.mubr.f32.mxu0 0.0
      %2367 = vmatmul.mubr.f32.gmra.mrb[0].mxu0 %v2153
      %v2368 = vpop.f32.mrb[0].mxu0
      %v2369 = vadd.f32 0.0, %v2368
      %v2370 = vpop.f32.mrb[0].mxu0
      %2371 = vmatprep.mubr.f32.mxu0 0.0
      %2372 = vmatmul.mubr.f32.gmra.mrb[0].mxu0 %v2155
      %v2373 = vpop.f32.mrb[0].mxu0
      %v2374 = vadd.f32 0.0, %v2373
      %v2375 = vpop.f32.mrb[0].mxu0
      %2376 = vmatprep.mubr.f32.mxu0 0.0
      %2377 = vmatmul.mubr.f32.gmra.mrb[0].mxu0 %v2157
      %v2378 = vpop.f32.mrb[0].mxu0
      %v2379 = vadd.f32 0.0, %v2378
      %v2380 = vpop.f32.mrb[0].mxu0
      %2381 = vmatprep.mubr.f32.mxu0 0.0
      %2382 = vmatmul.mubr.f32.gmra.mrb[0].mxu0 %v2159
      %v2383 = vpop.f32.mrb[0].mxu0
      %v2384 = vadd.f32 0.0, %v2383
      %v2385 = vpop.f32.mrb[0].mxu0
      %2386 = vmatprep.mubr.f32.mxu0 0.0
      %2387 = vmatmul.mubr.f32.gmra.mrb[0].mxu0 %v2161
      %v2388 = vpop.f32.mrb[0].mxu0
      %v2389 = vadd.f32 0.0, %v2388
      %v2390 = vpop.f32.mrb[0].mxu0
      %2391 = vmatprep.mubr.f32.mxu0 0.0
      %2392 = vmatmul.mubr.f32.gmra.mrb[0].mxu0 %v2163
      %v2393 = vpop.f32.mrb[0].mxu0
      %v2394 = vadd.f32 0.0, %v2393
      %v2395 = vpop.f32.mrb[0].mxu0
      %2396 = vmatprep.mubr.f32.mxu0 0.0
      %2397 = vmatmul.mubr.f32.gmra.mrb[0].mxu0 %v2165
      %v2398 = vpop.f32.mrb[0].mxu0
      %v2399 = vadd.f32 0.0, %v2398
      %v2400 = vpop.f32.mrb[0].mxu0
      %2401 = vmatprep.mubr.f32.mxu0 0.0
      %2402 = vmatmul.mubr.f32.gmra.mrb[0].mxu0 %v2167
      %v2403 = vpop.f32.mrb[0].mxu0
      %v2404 = vadd.f32 0.0, %v2403
      %v2405 = vpop.f32.mrb[0].mxu0
      %2406 = vmatprep.mubr.f32.mxu0 0.0
      %2407 = vmatmul.mubr.f32.gmra.mrb[0].mxu0 %v2169
      %v2408 = vpop.f32.mrb[0].mxu0
      %v2409 = vadd.f32 0.0, %v2408
      %v2410 = vpop.f32.mrb[0].mxu0
      %2411 = vmatprep.mubr.f32.mxu0 0.0
      %2412 = vmatmul.mubr.f32.gmra.mrb[0].mxu0 %v2171
      %v2413 = vpop.f32.mrb[0].mxu0
      %v2414 = vadd.f32 0.0, %v2413
      %v2415 = vpop.f32.mrb[0].mxu0
      %2416 = vmatprep.mubr.f32.mxu0 0.0
      %2417 = vmatmul.mubr.f32.gmra.mrb[0].mxu0 %v2173
      %v2418 = vpop.f32.mrb[0].mxu0
      %v2419 = vadd.f32 0.0, %v2418
      %v2420 = vpop.f32.mrb[0].mxu0
      %2421 = vmatprep.mubr.f32.mxu0 0.0
      %2422 = vmatmul.mubr.f32.gmra.mrb[0].mxu0 %v2175
      %v2423 = vpop.f32.mrb[0].mxu0
      %v2424 = vadd.f32 0.0, %v2423
      %v2425 = vpop.f32.mrb[0].mxu0
      %2426 = vmatprep.mubr.f32.mxu0 0.0
      %2427 = vmatmul.mubr.f32.gmra.mrb[0].mxu0 %v2177
      %v2428 = vpop.f32.mrb[0].mxu0
      %v2429 = vadd.f32 0.0, %v2428
      %v2430 = vpop.f32.mrb[0].mxu0
      %2431 = vmatprep.mubr.f32.mxu0 0.0
      %2432 = vmatmul.mubr.f32.gmra.mrb[0].mxu0 %v2179
      %v2433 = vpop.f32.mrb[0].mxu0
      %v2434 = vadd.f32 0.0, %v2433
      %v2435 = vpop.f32.mrb[0].mxu0
      %2436 = vmatprep.mubr.f32.mxu0 0.0
      %2437 = vmatmul.mubr.f32.gmra.mrb[0].mxu0 %v2181
      %v2438 = vpop.f32.mrb[0].mxu0
      %v2439 = vadd.f32 0.0, %v2438
      %v2440 = vpop.f32.mrb[0].mxu0
      %2441 = vmatprep.mubr.f32.mxu0 0.0
      %2442 = vmatmul.mubr.f32.gmra.mrb[0].mxu0 %v2183
      %v2443 = vpop.f32.mrb[0].mxu0
      %v2444 = vadd.f32 0.0, %v2443
      %v2445 = vpop.f32.mrb[0].mxu0
      %2446 = vmatprep.mubr.f32.mxu0 0.0
      %2447 = vmatmul.mubr.f32.gmra.mrb[0].mxu0 %v2185
      %v2448 = vpop.f32.mrb[0].mxu0
      %v2449 = vadd.f32 0.0, %v2448
      %v2450 = vpop.f32.mrb[0].mxu0
      %2451 = vdwg.mxu0
      %v2452 = vadd.f32 %v1983, %v2254
      %v2453 = vadd.f32 %v1984, %v2259
      %v2454 = vadd.f32 %v1985, %v2264
      %v2455 = vadd.f32 %v1986, %v2269
      %v2456 = vadd.f32 %v1987, %v2274
      %v2457 = vadd.f32 %v1988, %v2279
      %v2458 = vadd.f32 %v1989, %v2284
      %v2459 = vadd.f32 %v1990, %v2289
      %v2460 = vadd.f32 %v1991, %v2294
      %v2461 = vadd.f32 %v1992, %v2299
      %v2462 = vadd.f32 %v1993, %v2304
      %v2463 = vadd.f32 %v1994, %v2309
      %v2464 = vadd.f32 %v1995, %v2314
      %v2465 = vadd.f32 %v1996, %v2319
      %v2466 = vadd.f32 %v1997, %v2324
      %v2467 = vadd.f32 %v1998, %v2329
      %v2468 = vadd.f32 %v1999, %v2334
      %v2469 = vadd.f32 %v2000, %v2339
      %v2470 = vadd.f32 %v2001, %v2344
      %v2471 = vadd.f32 %v2002, %v2349
      %v2472 = vadd.f32 %v2003, %v2354
      %v2473 = vadd.f32 %v2004, %v2359
      %v2474 = vadd.f32 %v2005, %v2364
      %v2475 = vadd.f32 %v2006, %v2369
      %v2476 = vadd.f32 %v2007, %v2374
      %v2477 = vadd.f32 %v2008, %v2379
      %v2478 = vadd.f32 %v2009, %v2384
      %v2479 = vadd.f32 %v2010, %v2389
      %v2480 = vadd.f32 %v2011, %v2394
      %v2481 = vadd.f32 %v2012, %v2399
      %v2482 = vadd.f32 %v2013, %v2404
      %v2483 = vadd.f32 %v2014, %v2409
      %v2484 = vadd.f32 %v2015, %v2414
      %v2485 = vadd.f32 %v2016, %v2419
      %v2486 = vadd.f32 %v2017, %v2424
      %v2487 = vadd.f32 %v2018, %v2429
      %v2488 = vadd.f32 %v2019, %v2434
      %v2489 = vadd.f32 %v2020, %v2439
      %v2490 = vadd.f32 %v2021, %v2444
      %v2491 = vadd.f32 %v2022, %v2449
      %s2492 = scalar_lea.vmem %s2, 40
      %v2493 = vld [vmem:[%s2492] sm:$0xff]
      %vm2494 = vcmask 1043456
      %v2495 = vrot.slane %v377, 4
      %v2496 = vrot.slane %v378, 4
      %v2497 = vsel %vm2494, %v2495, %v2496
      %v2498 = vrot.slane %v379, 4
      %v2499 = vsel %vm2494, %v2496, %v2498
      %v2500 = vrot.slane %v380, 4
      %v2501 = vsel %vm2494, %v2498, %v2500
      %v2502 = vrot.slane %v381, 4
      %v2503 = vsel %vm2494, %v2500, %v2502
      %v2504 = vrot.slane %v382, 4
      %v2505 = vsel %vm2494, %v2502, %v2504
      %v2506 = vrot.slane %v383, 4
      %v2507 = vsel %vm2494, %v2504, %v2506
      %v2508 = vrot.slane %v384, 4
      %v2509 = vsel %vm2494, %v2506, %v2508
      %v2510 = vrot.slane %v385, 4
      %v2511 = vsel %vm2494, %v2508, %v2510
      %v2512 = vrot.slane %v386, 4
      %v2513 = vsel %vm2494, %v2510, %v2512
      %v2514 = vrot.slane %v387, 4
      %v2515 = vsel %vm2494, %v2512, %v2514
      %v2516 = vrot.slane %v388, 4
      %v2517 = vsel %vm2494, %v2514, %v2516
      %v2518 = vrot.slane %v389, 4
      %v2519 = vsel %vm2494, %v2516, %v2518
      %v2520 = vrot.slane %v390, 4
      %v2521 = vsel %vm2494, %v2518, %v2520
      %v2522 = vrot.slane %v391, 4
      %v2523 = vsel %vm2494, %v2520, %v2522
      %v2524 = vrot.slane %v392, 4
      %v2525 = vsel %vm2494, %v2522, %v2524
      %v2526 = vrot.slane %v393, 4
      %v2527 = vsel %vm2494, %v2524, %v2526
      %v2528 = vrot.slane %v394, 4
      %v2529 = vsel %vm2494, %v2526, %v2528
      %v2530 = vrot.slane %v395, 4
      %v2531 = vsel %vm2494, %v2528, %v2530
      %v2532 = vrot.slane %v396, 4
      %v2533 = vsel %vm2494, %v2530, %v2532
      %v2534 = vrot.slane %v397, 4
      %v2535 = vsel %vm2494, %v2532, %v2534
      %v2536 = vrot.slane %v398, 4
      %v2537 = vsel %vm2494, %v2534, %v2536
      %v2538 = vrot.slane %v399, 4
      %v2539 = vsel %vm2494, %v2536, %v2538
      %v2540 = vrot.slane %v400, 4
      %v2541 = vsel %vm2494, %v2538, %v2540
      %v2542 = vrot.slane %v401, 4
      %v2543 = vsel %vm2494, %v2540, %v2542
      %v2544 = vrot.slane %v402, 4
      %v2545 = vsel %vm2494, %v2542, %v2544
      %v2546 = vrot.slane %v403, 4
      %v2547 = vsel %vm2494, %v2544, %v2546
      %v2548 = vrot.slane %v404, 4
      %v2549 = vsel %vm2494, %v2546, %v2548
      %v2550 = vrot.slane %v405, 4
      %v2551 = vsel %vm2494, %v2548, %v2550
      %v2552 = vrot.slane %v406, 4
      %v2553 = vsel %vm2494, %v2550, %v2552
      %v2554 = vrot.slane %v407, 4
      %v2555 = vsel %vm2494, %v2552, %v2554
      %v2556 = vrot.slane %v408, 4
      %v2557 = vsel %vm2494, %v2554, %v2556
      %v2558 = vrot.slane %v409, 4
      %v2559 = vsel %vm2494, %v2556, %v2558
      %v2560 = vrot.slane %v410, 4
      %v2561 = vsel %vm2494, %v2558, %v2560
      %v2562 = vrot.slane %v411, 4
      %v2563 = vsel %vm2494, %v2560, %v2562
      %v2564 = vrot.slane %v412, 4
      %v2565 = vsel %vm2494, %v2562, %v2564
      %v2566 = vrot.slane %v413, 4
      %v2567 = vsel %vm2494, %v2564, %v2566
      %v2568 = vrot.slane %v414, 4
      %v2569 = vsel %vm2494, %v2566, %v2568
      %v2570 = vrot.slane %v415, 4
      %v2571 = vsel %vm2494, %v2568, %v2570
      %v2572 = vrot.slane %v416, 4
      %v2573 = vsel %vm2494, %v2570, %v2572
      %v2574 = vrot.slane %v417, 4
      %v2575 = vsel %vm2494, %v2572, %v2574
      %v2576 = vsel %vm546, %v2497, 0
      %v2578 = vsel %vm546, %v2499, 0
      %v2580 = vsel %vm546, %v2501, 0
      %v2582 = vsel %vm546, %v2503, 0
      %v2584 = vsel %vm546, %v2505, 0
      %v2586 = vsel %vm546, %v2507, 0
      %v2588 = vsel %vm546, %v2509, 0
      %v2590 = vsel %vm546, %v2511, 0
      %v2592 = vsel %vm546, %v2513, 0
      %v2594 = vsel %vm546, %v2515, 0
      %v2596 = vsel %vm546, %v2517, 0
      %v2598 = vsel %vm546, %v2519, 0
      %v2600 = vsel %vm546, %v2521, 0
      %v2602 = vsel %vm546, %v2523, 0
      %v2604 = vsel %vm546, %v2525, 0
      %v2606 = vsel %vm546, %v2527, 0
      %v2608 = vsel %vm546, %v2529, 0
      %v2610 = vsel %vm546, %v2531, 0
      %v2612 = vsel %vm546, %v2533, 0
      %v2614 = vsel %vm546, %v2535, 0
      %v2616 = vsel %vm546, %v2537, 0
      %v2618 = vsel %vm546, %v2539, 0
      %v2620 = vsel %vm546, %v2541, 0
      %v2622 = vsel %vm546, %v2543, 0
      %v2624 = vsel %vm546, %v2545, 0
      %v2626 = vsel %vm546, %v2547, 0
      %v2628 = vsel %vm546, %v2549, 0
      %v2630 = vsel %vm546, %v2551, 0
      %v2632 = vsel %vm546, %v2553, 0
      %v2634 = vsel %vm546, %v2555, 0
      %v2636 = vsel %vm546, %v2557, 0
      %v2638 = vsel %vm546, %v2559, 0
      %v2640 = vsel %vm546, %v2561, 0
      %v2642 = vsel %vm546, %v2563, 0
      %v2644 = vsel %vm546, %v2565, 0
      %v2646 = vsel %vm546, %v2567, 0
      %v2648 = vsel %vm546, %v2569, 0
      %v2650 = vsel %vm546, %v2571, 0
      %v2652 = vsel %vm546, %v2573, 0
      %v2654 = vsel %vm546, %v2575, 0
      %2656 = vmatprep.subr.mxu0 0.0
      %2657 = vmatpush1.msra.mxu0 %v2493
      %2658 = vmatprep.subr.mxu0 0.0
      %2659 = vmatpush1.msra.mxu0 0.0
      %2660 = vmatprep.subr.mxu0 0.0
      %2661 = vmatpush1.msra.mxu0 0.0
      %2662 = vmatprep.subr.mxu0 0.0
      %2663 = vmatpush1.msra.mxu0 0.0
      %2664 = vmatprep.subr.mxu0 0.0
      %2665 = vmatpush1.msra.mxu0 0.0
      %2666 = vmatprep.subr.mxu0 0.0
      %2667 = vmatpush1.msra.mxu0 0.0
      %2668 = vmatprep.subr.mxu0 0.0
      %2669 = vmatpush1.msra.mxu0 0.0
      %2670 = vmatprep.subr.mxu0 0.0
      %2671 = vmatpush1.msra.mxu0 0.0
      %2672 = vmatprep.subr.mxu0 0.0
      %2673 = vmatpush1.msra.mxu0 0.0
      %2674 = vmatprep.subr.mxu0 0.0
      %2675 = vmatpush1.msra.mxu0 0.0
      %2676 = vmatprep.subr.mxu0 0.0
      %2677 = vmatpush1.msra.mxu0 0.0
      %2678 = vmatprep.subr.mxu0 0.0
      %2679 = vmatpush1.msra.mxu0 0.0
      %2680 = vmatprep.subr.mxu0 0.0
      %2681 = vmatpush1.msra.mxu0 0.0
      %2682 = vmatprep.subr.mxu0 0.0
      %2683 = vmatpush1.msra.mxu0 0.0
      %2684 = vmatprep.subr.mxu0 0.0
      %2685 = vmatpush1.msra.mxu0 0.0
      %2686 = vmatprep.subr.mxu0 0.0
      %2687 = vmatpush1.msra.mxu0 0.0
      %2688 = vmatprep.subr.mxu0 0.0
      %2689 = vmatpush1.msra.mxu0 0.0
      %2690 = vmatprep.subr.mxu0 0.0
      %2691 = vmatpush1.msra.mxu0 0.0
      %2692 = vmatprep.subr.mxu0 0.0
      %2693 = vmatpush1.msra.mxu0 0.0
      %2694 = vmatprep.subr.mxu0 0.0
      %2695 = vmatpush1.msra.mxu0 0.0
      %2696 = vmatprep.subr.mxu0 0.0
      %2697 = vmatpush1.msra.mxu0 0.0
      %2698 = vmatprep.subr.mxu0 0.0
      %2699 = vmatpush1.msra.mxu0 0.0
      %2700 = vmatprep.subr.mxu0 0.0
      %2701 = vmatpush1.msra.mxu0 0.0
      %2702 = vmatprep.subr.mxu0 0.0
      %2703 = vmatpush1.msra.mxu0 0.0
      %2704 = vmatprep.subr.mxu0 0.0
      %2705 = vmatpush1.msra.mxu0 0.0
      %2706 = vmatprep.subr.mxu0 0.0
      %2707 = vmatpush1.msra.mxu0 0.0
      %2708 = vmatprep.subr.mxu0 0.0
      %2709 = vmatpush1.msra.mxu0 0.0
      %2710 = vmatprep.subr.mxu0 0.0
      %2711 = vmatpush1.msra.mxu0 0.0
      %2712 = vmatprep.subr.mxu0 0.0
      %2713 = vmatpush1.msra.mxu0 0.0
      %2714 = vmatprep.subr.mxu0 0.0
      %2715 = vmatpush1.msra.mxu0 0.0
      %2716 = vmatprep.subr.mxu0 0.0
      %2717 = vmatpush1.msra.mxu0 0.0
      %2718 = vmatprep.subr.mxu0 0.0
      %2719 = vmatpush1.msra.mxu0 0.0
      %2720 = vmatprep.mubr.f32.mxu0 0.0
      %2721 = vmatmul.mubr.f32.gmra.mrb[0].mxu0 %v2576
      %v2722 = vpop.f32.mrb[0].mxu0
      %v2723 = vadd.f32 0.0, %v2722
      %v2724 = vpop.f32.mrb[0].mxu0
      %2725 = vmatprep.mubr.f32.mxu0 0.0
      %2726 = vmatmul.mubr.f32.gmra.mrb[0].mxu0 %v2578
      %v2727 = vpop.f32.mrb[0].mxu0
      %v2728 = vadd.f32 0.0, %v2727
      %v2729 = vpop.f32.mrb[0].mxu0
      %2730 = vmatprep.mubr.f32.mxu0 0.0
      %2731 = vmatmul.mubr.f32.gmra.mrb[0].mxu0 %v2580
      %v2732 = vpop.f32.mrb[0].mxu0
      %v2733 = vadd.f32 0.0, %v2732
      %v2734 = vpop.f32.mrb[0].mxu0
      %2735 = vmatprep.mubr.f32.mxu0 0.0
      %2736 = vmatmul.mubr.f32.gmra.mrb[0].mxu0 %v2582
      %v2737 = vpop.f32.mrb[0].mxu0
      %v2738 = vadd.f32 0.0, %v2737
      %v2739 = vpop.f32.mrb[0].mxu0
      %2740 = vmatprep.mubr.f32.mxu0 0.0
      %2741 = vmatmul.mubr.f32.gmra.mrb[0].mxu0 %v2584
      %v2742 = vpop.f32.mrb[0].mxu0
      %v2743 = vadd.f32 0.0, %v2742
      %v2744 = vpop.f32.mrb[0].mxu0
      %2745 = vmatprep.mubr.f32.mxu0 0.0
      %2746 = vmatmul.mubr.f32.gmra.mrb[0].mxu0 %v2586
      %v2747 = vpop.f32.mrb[0].mxu0
      %v2748 = vadd.f32 0.0, %v2747
      %v2749 = vpop.f32.mrb[0].mxu0
      %2750 = vmatprep.mubr.f32.mxu0 0.0
      %2751 = vmatmul.mubr.f32.gmra.mrb[0].mxu0 %v2588
      %v2752 = vpop.f32.mrb[0].mxu0
      %v2753 = vadd.f32 0.0, %v2752
      %v2754 = vpop.f32.mrb[0].mxu0
      %2755 = vmatprep.mubr.f32.mxu0 0.0
      %2756 = vmatmul.mubr.f32.gmra.mrb[0].mxu0 %v2590
      %v2757 = vpop.f32.mrb[0].mxu0
      %v2758 = vadd.f32 0.0, %v2757
      %v2759 = vpop.f32.mrb[0].mxu0
      %2760 = vmatprep.mubr.f32.mxu0 0.0
      %2761 = vmatmul.mubr.f32.gmra.mrb[0].mxu0 %v2592
      %v2762 = vpop.f32.mrb[0].mxu0
      %v2763 = vadd.f32 0.0, %v2762
      %v2764 = vpop.f32.mrb[0].mxu0
      %2765 = vmatprep.mubr.f32.mxu0 0.0
      %2766 = vmatmul.mubr.f32.gmra.mrb[0].mxu0 %v2594
      %v2767 = vpop.f32.mrb[0].mxu0
      %v2768 = vadd.f32 0.0, %v2767
      %v2769 = vpop.f32.mrb[0].mxu0
      %2770 = vmatprep.mubr.f32.mxu0 0.0
      %2771 = vmatmul.mubr.f32.gmra.mrb[0].mxu0 %v2596
      %v2772 = vpop.f32.mrb[0].mxu0
      %v2773 = vadd.f32 0.0, %v2772
      %v2774 = vpop.f32.mrb[0].mxu0
      %2775 = vmatprep.mubr.f32.mxu0 0.0
      %2776 = vmatmul.mubr.f32.gmra.mrb[0].mxu0 %v2598
      %v2777 = vpop.f32.mrb[0].mxu0
      %v2778 = vadd.f32 0.0, %v2777
      %v2779 = vpop.f32.mrb[0].mxu0
      %2780 = vmatprep.mubr.f32.mxu0 0.0
      %2781 = vmatmul.mubr.f32.gmra.mrb[0].mxu0 %v2600
      %v2782 = vpop.f32.mrb[0].mxu0
      %v2783 = vadd.f32 0.0, %v2782
      %v2784 = vpop.f32.mrb[0].mxu0
      %2785 = vmatprep.mubr.f32.mxu0 0.0
      %2786 = vmatmul.mubr.f32.gmra.mrb[0].mxu0 %v2602
      %v2787 = vpop.f32.mrb[0].mxu0
      %v2788 = vadd.f32 0.0, %v2787
      %v2789 = vpop.f32.mrb[0].mxu0
      %2790 = vmatprep.mubr.f32.mxu0 0.0
      %2791 = vmatmul.mubr.f32.gmra.mrb[0].mxu0 %v2604
      %v2792 = vpop.f32.mrb[0].mxu0
      %v2793 = vadd.f32 0.0, %v2792
      %v2794 = vpop.f32.mrb[0].mxu0
      %2795 = vmatprep.mubr.f32.mxu0 0.0
      %2796 = vmatmul.mubr.f32.gmra.mrb[0].mxu0 %v2606
      %v2797 = vpop.f32.mrb[0].mxu0
      %v2798 = vadd.f32 0.0, %v2797
      %v2799 = vpop.f32.mrb[0].mxu0
      %2800 = vmatprep.mubr.f32.mxu0 0.0
      %2801 = vmatmul.mubr.f32.gmra.mrb[0].mxu0 %v2608
      %v2802 = vpop.f32.mrb[0].mxu0
      %v2803 = vadd.f32 0.0, %v2802
      %v2804 = vpop.f32.mrb[0].mxu0
      %2805 = vmatprep.mubr.f32.mxu0 0.0
      %2806 = vmatmul.mubr.f32.gmra.mrb[0].mxu0 %v2610
      %v2807 = vpop.f32.mrb[0].mxu0
      %v2808 = vadd.f32 0.0, %v2807
      %v2809 = vpop.f32.mrb[0].mxu0
      %2810 = vmatprep.mubr.f32.mxu0 0.0
      %2811 = vmatmul.mubr.f32.gmra.mrb[0].mxu0 %v2612
      %v2812 = vpop.f32.mrb[0].mxu0
      %v2813 = vadd.f32 0.0, %v2812
      %v2814 = vpop.f32.mrb[0].mxu0
      %2815 = vmatprep.mubr.f32.mxu0 0.0
      %2816 = vmatmul.mubr.f32.gmra.mrb[0].mxu0 %v2614
      %v2817 = vpop.f32.mrb[0].mxu0
      %v2818 = vadd.f32 0.0, %v2817
      %v2819 = vpop.f32.mrb[0].mxu0
      %2820 = vmatprep.mubr.f32.mxu0 0.0
      %2821 = vmatmul.mubr.f32.gmra.mrb[0].mxu0 %v2616
      %v2822 = vpop.f32.mrb[0].mxu0
      %v2823 = vadd.f32 0.0, %v2822
      %v2824 = vpop.f32.mrb[0].mxu0
      %2825 = vmatprep.mubr.f32.mxu0 0.0
      %2826 = vmatmul.mubr.f32.gmra.mrb[0].mxu0 %v2618
      %v2827 = vpop.f32.mrb[0].mxu0
      %v2828 = vadd.f32 0.0, %v2827
      %v2829 = vpop.f32.mrb[0].mxu0
      %2830 = vmatprep.mubr.f32.mxu0 0.0
      %2831 = vmatmul.mubr.f32.gmra.mrb[0].mxu0 %v2620
      %v2832 = vpop.f32.mrb[0].mxu0
      %v2833 = vadd.f32 0.0, %v2832
      %v2834 = vpop.f32.mrb[0].mxu0
      %2835 = vmatprep.mubr.f32.mxu0 0.0
      %2836 = vmatmul.mubr.f32.gmra.mrb[0].mxu0 %v2622
      %v2837 = vpop.f32.mrb[0].mxu0
      %v2838 = vadd.f32 0.0, %v2837
      %v2839 = vpop.f32.mrb[0].mxu0
      %2840 = vmatprep.mubr.f32.mxu0 0.0
      %2841 = vmatmul.mubr.f32.gmra.mrb[0].mxu0 %v2624
      %v2842 = vpop.f32.mrb[0].mxu0
      %v2843 = vadd.f32 0.0, %v2842
      %v2844 = vpop.f32.mrb[0].mxu0
      %2845 = vmatprep.mubr.f32.mxu0 0.0
      %2846 = vmatmul.mubr.f32.gmra.mrb[0].mxu0 %v2626
      %v2847 = vpop.f32.mrb[0].mxu0
      %v2848 = vadd.f32 0.0, %v2847
      %v2849 = vpop.f32.mrb[0].mxu0
      %2850 = vmatprep.mubr.f32.mxu0 0.0
      %2851 = vmatmul.mubr.f32.gmra.mrb[0].mxu0 %v2628
      %v2852 = vpop.f32.mrb[0].mxu0
      %v2853 = vadd.f32 0.0, %v2852
      %v2854 = vpop.f32.mrb[0].mxu0
      %2855 = vmatprep.mubr.f32.mxu0 0.0
      %2856 = vmatmul.mubr.f32.gmra.mrb[0].mxu0 %v2630
      %v2857 = vpop.f32.mrb[0].mxu0
      %v2858 = vadd.f32 0.0, %v2857
      %v2859 = vpop.f32.mrb[0].mxu0
      %2860 = vmatprep.mubr.f32.mxu0 0.0
      %2861 = vmatmul.mubr.f32.gmra.mrb[0].mxu0 %v2632
      %v2862 = vpop.f32.mrb[0].mxu0
      %v2863 = vadd.f32 0.0, %v2862
      %v2864 = vpop.f32.mrb[0].mxu0
      %2865 = vmatprep.mubr.f32.mxu0 0.0
      %2866 = vmatmul.mubr.f32.gmra.mrb[0].mxu0 %v2634
      %v2867 = vpop.f32.mrb[0].mxu0
      %v2868 = vadd.f32 0.0, %v2867
      %v2869 = vpop.f32.mrb[0].mxu0
      %2870 = vmatprep.mubr.f32.mxu0 0.0
      %2871 = vmatmul.mubr.f32.gmra.mrb[0].mxu0 %v2636
      %v2872 = vpop.f32.mrb[0].mxu0
      %v2873 = vadd.f32 0.0, %v2872
      %v2874 = vpop.f32.mrb[0].mxu0
      %2875 = vmatprep.mubr.f32.mxu0 0.0
      %2876 = vmatmul.mubr.f32.gmra.mrb[0].mxu0 %v2638
      %v2877 = vpop.f32.mrb[0].mxu0
      %v2878 = vadd.f32 0.0, %v2877
      %v2879 = vpop.f32.mrb[0].mxu0
      %2880 = vmatprep.mubr.f32.mxu0 0.0
      %2881 = vmatmul.mubr.f32.gmra.mrb[0].mxu0 %v2640
      %v2882 = vpop.f32.mrb[0].mxu0
      %v2883 = vadd.f32 0.0, %v2882
      %v2884 = vpop.f32.mrb[0].mxu0
      %2885 = vmatprep.mubr.f32.mxu0 0.0
      %2886 = vmatmul.mubr.f32.gmra.mrb[0].mxu0 %v2642
      %v2887 = vpop.f32.mrb[0].mxu0
      %v2888 = vadd.f32 0.0, %v2887
      %v2889 = vpop.f32.mrb[0].mxu0
      %2890 = vmatprep.mubr.f32.mxu0 0.0
      %2891 = vmatmul.mubr.f32.gmra.mrb[0].mxu0 %v2644
      %v2892 = vpop.f32.mrb[0].mxu0
      %v2893 = vadd.f32 0.0, %v2892
      %v2894 = vpop.f32.mrb[0].mxu0
      %2895 = vmatprep.mubr.f32.mxu0 0.0
      %2896 = vmatmul.mubr.f32.gmra.mrb[0].mxu0 %v2646
      %v2897 = vpop.f32.mrb[0].mxu0
      %v2898 = vadd.f32 0.0, %v2897
      %v2899 = vpop.f32.mrb[0].mxu0
      %2900 = vmatprep.mubr.f32.mxu0 0.0
      %2901 = vmatmul.mubr.f32.gmra.mrb[0].mxu0 %v2648
      %v2902 = vpop.f32.mrb[0].mxu0
      %v2903 = vadd.f32 0.0, %v2902
      %v2904 = vpop.f32.mrb[0].mxu0
      %2905 = vmatprep.mubr.f32.mxu0 0.0
      %2906 = vmatmul.mubr.f32.gmra.mrb[0].mxu0 %v2650
      %v2907 = vpop.f32.mrb[0].mxu0
      %v2908 = vadd.f32 0.0, %v2907
      %v2909 = vpop.f32.mrb[0].mxu0
      %2910 = vmatprep.mubr.f32.mxu0 0.0
      %2911 = vmatmul.mubr.f32.gmra.mrb[0].mxu0 %v2652
      %v2912 = vpop.f32.mrb[0].mxu0
      %v2913 = vadd.f32 0.0, %v2912
      %v2914 = vpop.f32.mrb[0].mxu0
      %2915 = vmatprep.mubr.f32.mxu0 0.0
      %2916 = vmatmul.mubr.f32.gmra.mrb[0].mxu0 %v2654
      %v2917 = vpop.f32.mrb[0].mxu0
      %v2918 = vadd.f32 0.0, %v2917
      %v2919 = vpop.f32.mrb[0].mxu0
      %2920 = vdwg.mxu0
      %v2921 = vadd.f32 %v2452, %v2723
      %v2922 = vadd.f32 %v2453, %v2728
      %v2923 = vadd.f32 %v2454, %v2733
      %v2924 = vadd.f32 %v2455, %v2738
      %v2925 = vadd.f32 %v2456, %v2743
      %v2926 = vadd.f32 %v2457, %v2748
      %v2927 = vadd.f32 %v2458, %v2753
      %v2928 = vadd.f32 %v2459, %v2758
      %v2929 = vadd.f32 %v2460, %v2763
      %v2930 = vadd.f32 %v2461, %v2768
      %v2931 = vadd.f32 %v2462, %v2773
      %v2932 = vadd.f32 %v2463, %v2778
      %v2933 = vadd.f32 %v2464, %v2783
      %v2934 = vadd.f32 %v2465, %v2788
      %v2935 = vadd.f32 %v2466, %v2793
      %v2936 = vadd.f32 %v2467, %v2798
      %v2937 = vadd.f32 %v2468, %v2803
      %v2938 = vadd.f32 %v2469, %v2808
      %v2939 = vadd.f32 %v2470, %v2813
      %v2940 = vadd.f32 %v2471, %v2818
      %v2941 = vadd.f32 %v2472, %v2823
      %v2942 = vadd.f32 %v2473, %v2828
      %v2943 = vadd.f32 %v2474, %v2833
      %v2944 = vadd.f32 %v2475, %v2838
      %v2945 = vadd.f32 %v2476, %v2843
      %v2946 = vadd.f32 %v2477, %v2848
      %v2947 = vadd.f32 %v2478, %v2853
      %v2948 = vadd.f32 %v2479, %v2858
      %v2949 = vadd.f32 %v2480, %v2863
      %v2950 = vadd.f32 %v2481, %v2868
      %v2951 = vadd.f32 %v2482, %v2873
      %v2952 = vadd.f32 %v2483, %v2878
      %v2953 = vadd.f32 %v2484, %v2883
      %v2954 = vadd.f32 %v2485, %v2888
      %v2955 = vadd.f32 %v2486, %v2893
      %v2956 = vadd.f32 %v2487, %v2898
      %v2957 = vadd.f32 %v2488, %v2903
      %v2958 = vadd.f32 %v2489, %v2908
      %v2959 = vadd.f32 %v2490, %v2913
      %v2960 = vadd.f32 %v2491, %v2918
      %s2961 = scalar_lea.vmem %s2, 48
      %v2962 = vld [vmem:[%s2961] sm:$0xff]
      %v2965 = vrot.slane %v418, 4
      %v2966 = vsel %vm2494, %v2574, %v2965
      %v2967 = vrot.slane %v419, 4
      %v2968 = vsel %vm2494, %v2965, %v2967
      %v2969 = vsel %vm546, %v2966, 0
      %v2971 = vsel %vm546, %v2968, 0
      %2973 = vmatprep.subr.mxu0 0.0
      %2974 = vmatpush1.msra.mxu0 %v2962
      %2975 = vmatprep.subr.mxu0 0.0
      %2976 = vmatpush1.msra.mxu0 0.0
      %2977 = vmatprep.subr.mxu0 0.0
      %2978 = vmatpush1.msra.mxu0 0.0
      %2979 = vmatprep.subr.mxu0 0.0
      %2980 = vmatpush1.msra.mxu0 0.0
      %2981 = vmatprep.subr.mxu0 0.0
      %2982 = vmatpush1.msra.mxu0 0.0
      %2983 = vmatprep.subr.mxu0 0.0
      %2984 = vmatpush1.msra.mxu0 0.0
      %2985 = vmatprep.subr.mxu0 0.0
      %2986 = vmatpush1.msra.mxu0 0.0
      %2987 = vmatprep.subr.mxu0 0.0
      %2988 = vmatpush1.msra.mxu0 0.0
      %2989 = vmatprep.subr.mxu0 0.0
      %2990 = vmatpush1.msra.mxu0 0.0
      %2991 = vmatprep.subr.mxu0 0.0
      %2992 = vmatpush1.msra.mxu0 0.0
      %2993 = vmatprep.subr.mxu0 0.0
      %2994 = vmatpush1.msra.mxu0 0.0
      %2995 = vmatprep.subr.mxu0 0.0
      %2996 = vmatpush1.msra.mxu0 0.0
      %2997 = vmatprep.subr.mxu0 0.0
      %2998 = vmatpush1.msra.mxu0 0.0
      %2999 = vmatprep.subr.mxu0 0.0
      %3000 = vmatpush1.msra.mxu0 0.0
      %3001 = vmatprep.subr.mxu0 0.0
      %3002 = vmatpush1.msra.mxu0 0.0
      %3003 = vmatprep.subr.mxu0 0.0
      %3004 = vmatpush1.msra.mxu0 0.0
      %3005 = vmatprep.subr.mxu0 0.0
      %3006 = vmatpush1.msra.mxu0 0.0
      %3007 = vmatprep.subr.mxu0 0.0
      %3008 = vmatpush1.msra.mxu0 0.0
      %3009 = vmatprep.subr.mxu0 0.0
      %3010 = vmatpush1.msra.mxu0 0.0
      %3011 = vmatprep.subr.mxu0 0.0
      %3012 = vmatpush1.msra.mxu0 0.0
      %3013 = vmatprep.subr.mxu0 0.0
      %3014 = vmatpush1.msra.mxu0 0.0
      %3015 = vmatprep.subr.mxu0 0.0
      %3016 = vmatpush1.msra.mxu0 0.0
      %3017 = vmatprep.subr.mxu0 0.0
      %3018 = vmatpush1.msra.mxu0 0.0
      %3019 = vmatprep.subr.mxu0 0.0
      %3020 = vmatpush1.msra.mxu0 0.0
      %3021 = vmatprep.subr.mxu0 0.0
      %3022 = vmatpush1.msra.mxu0 0.0
      %3023 = vmatprep.subr.mxu0 0.0
      %3024 = vmatpush1.msra.mxu0 0.0
      %3025 = vmatprep.subr.mxu0 0.0
      %3026 = vmatpush1.msra.mxu0 0.0
      %3027 = vmatprep.subr.mxu0 0.0
      %3028 = vmatpush1.msra.mxu0 0.0
      %3029 = vmatprep.subr.mxu0 0.0
      %3030 = vmatpush1.msra.mxu0 0.0
      %3031 = vmatprep.subr.mxu0 0.0
      %3032 = vmatpush1.msra.mxu0 0.0
      %3033 = vmatprep.subr.mxu0 0.0
      %3034 = vmatpush1.msra.mxu0 0.0
      %3035 = vmatprep.subr.mxu0 0.0
      %3036 = vmatpush1.msra.mxu0 0.0
      %3037 = vmatprep.mubr.f32.mxu0 0.0
      %3038 = vmatmul.mubr.f32.gmra.mrb[0].mxu0 %v2580
      %v3039 = vpop.f32.mrb[0].mxu0
      %v3040 = vadd.f32 0.0, %v3039
      %v3041 = vpop.f32.mrb[0].mxu0
      %3042 = vmatprep.mubr.f32.mxu0 0.0
      %3043 = vmatmul.mubr.f32.gmra.mrb[0].mxu0 %v2582
      %v3044 = vpop.f32.mrb[0].mxu0
      %v3045 = vadd.f32 0.0, %v3044
      %v3046 = vpop.f32.mrb[0].mxu0
      %3047 = vmatprep.mubr.f32.mxu0 0.0
      %3048 = vmatmul.mubr.f32.gmra.mrb[0].mxu0 %v2584
      %v3049 = vpop.f32.mrb[0].mxu0
      %v3050 = vadd.f32 0.0, %v3049
      %v3051 = vpop.f32.mrb[0].mxu0
      %3052 = vmatprep.mubr.f32.mxu0 0.0
      %3053 = vmatmul.mubr.f32.gmra.mrb[0].mxu0 %v2586
      %v3054 = vpop.f32.mrb[0].mxu0
      %v3055 = vadd.f32 0.0, %v3054
      %v3056 = vpop.f32.mrb[0].mxu0
      %3057 = vmatprep.mubr.f32.mxu0 0.0
      %3058 = vmatmul.mubr.f32.gmra.mrb[0].mxu0 %v2588
      %v3059 = vpop.f32.mrb[0].mxu0
      %v3060 = vadd.f32 0.0, %v3059
      %v3061 = vpop.f32.mrb[0].mxu0
      %3062 = vmatprep.mubr.f32.mxu0 0.0
      %3063 = vmatmul.mubr.f32.gmra.mrb[0].mxu0 %v2590
      %v3064 = vpop.f32.mrb[0].mxu0
      %v3065 = vadd.f32 0.0, %v3064
      %v3066 = vpop.f32.mrb[0].mxu0
      %3067 = vmatprep.mubr.f32.mxu0 0.0
      %3068 = vmatmul.mubr.f32.gmra.mrb[0].mxu0 %v2592
      %v3069 = vpop.f32.mrb[0].mxu0
      %v3070 = vadd.f32 0.0, %v3069
      %v3071 = vpop.f32.mrb[0].mxu0
      %3072 = vmatprep.mubr.f32.mxu0 0.0
      %3073 = vmatmul.mubr.f32.gmra.mrb[0].mxu0 %v2594
      %v3074 = vpop.f32.mrb[0].mxu0
      %v3075 = vadd.f32 0.0, %v3074
      %v3076 = vpop.f32.mrb[0].mxu0
      %3077 = vmatprep.mubr.f32.mxu0 0.0
      %3078 = vmatmul.mubr.f32.gmra.mrb[0].mxu0 %v2596
      %v3079 = vpop.f32.mrb[0].mxu0
      %v3080 = vadd.f32 0.0, %v3079
      %v3081 = vpop.f32.mrb[0].mxu0
      %3082 = vmatprep.mubr.f32.mxu0 0.0
      %3083 = vmatmul.mubr.f32.gmra.mrb[0].mxu0 %v2598
      %v3084 = vpop.f32.mrb[0].mxu0
      %v3085 = vadd.f32 0.0, %v3084
      %v3086 = vpop.f32.mrb[0].mxu0
      %3087 = vmatprep.mubr.f32.mxu0 0.0
      %3088 = vmatmul.mubr.f32.gmra.mrb[0].mxu0 %v2600
      %v3089 = vpop.f32.mrb[0].mxu0
      %v3090 = vadd.f32 0.0, %v3089
      %v3091 = vpop.f32.mrb[0].mxu0
      %3092 = vmatprep.mubr.f32.mxu0 0.0
      %3093 = vmatmul.mubr.f32.gmra.mrb[0].mxu0 %v2602
      %v3094 = vpop.f32.mrb[0].mxu0
      %v3095 = vadd.f32 0.0, %v3094
      %v3096 = vpop.f32.mrb[0].mxu0
      %3097 = vmatprep.mubr.f32.mxu0 0.0
      %3098 = vmatmul.mubr.f32.gmra.mrb[0].mxu0 %v2604
      %v3099 = vpop.f32.mrb[0].mxu0
      %v3100 = vadd.f32 0.0, %v3099
      %v3101 = vpop.f32.mrb[0].mxu0
      %3102 = vmatprep.mubr.f32.mxu0 0.0
      %3103 = vmatmul.mubr.f32.gmra.mrb[0].mxu0 %v2606
      %v3104 = vpop.f32.mrb[0].mxu0
      %v3105 = vadd.f32 0.0, %v3104
      %v3106 = vpop.f32.mrb[0].mxu0
      %3107 = vmatprep.mubr.f32.mxu0 0.0
      %3108 = vmatmul.mubr.f32.gmra.mrb[0].mxu0 %v2608
      %v3109 = vpop.f32.mrb[0].mxu0
      %v3110 = vadd.f32 0.0, %v3109
      %v3111 = vpop.f32.mrb[0].mxu0
      %3112 = vmatprep.mubr.f32.mxu0 0.0
      %3113 = vmatmul.mubr.f32.gmra.mrb[0].mxu0 %v2610
      %v3114 = vpop.f32.mrb[0].mxu0
      %v3115 = vadd.f32 0.0, %v3114
      %v3116 = vpop.f32.mrb[0].mxu0
      %3117 = vmatprep.mubr.f32.mxu0 0.0
      %3118 = vmatmul.mubr.f32.gmra.mrb[0].mxu0 %v2612
      %v3119 = vpop.f32.mrb[0].mxu0
      %v3120 = vadd.f32 0.0, %v3119
      %v3121 = vpop.f32.mrb[0].mxu0
      %3122 = vmatprep.mubr.f32.mxu0 0.0
      %3123 = vmatmul.mubr.f32.gmra.mrb[0].mxu0 %v2614
      %v3124 = vpop.f32.mrb[0].mxu0
      %v3125 = vadd.f32 0.0, %v3124
      %v3126 = vpop.f32.mrb[0].mxu0
      %3127 = vmatprep.mubr.f32.mxu0 0.0
      %3128 = vmatmul.mubr.f32.gmra.mrb[0].mxu0 %v2616
      %v3129 = vpop.f32.mrb[0].mxu0
      %v3130 = vadd.f32 0.0, %v3129
      %v3131 = vpop.f32.mrb[0].mxu0
      %3132 = vmatprep.mubr.f32.mxu0 0.0
      %3133 = vmatmul.mubr.f32.gmra.mrb[0].mxu0 %v2618
      %v3134 = vpop.f32.mrb[0].mxu0
      %v3135 = vadd.f32 0.0, %v3134
      %v3136 = vpop.f32.mrb[0].mxu0
      %3137 = vmatprep.mubr.f32.mxu0 0.0
      %3138 = vmatmul.mubr.f32.gmra.mrb[0].mxu0 %v2620
      %v3139 = vpop.f32.mrb[0].mxu0
      %v3140 = vadd.f32 0.0, %v3139
      %v3141 = vpop.f32.mrb[0].mxu0
      %3142 = vmatprep.mubr.f32.mxu0 0.0
      %3143 = vmatmul.mubr.f32.gmra.mrb[0].mxu0 %v2622
      %v3144 = vpop.f32.mrb[0].mxu0
      %v3145 = vadd.f32 0.0, %v3144
      %v3146 = vpop.f32.mrb[0].mxu0
      %3147 = vmatprep.mubr.f32.mxu0 0.0
      %3148 = vmatmul.mubr.f32.gmra.mrb[0].mxu0 %v2624
      %v3149 = vpop.f32.mrb[0].mxu0
      %v3150 = vadd.f32 0.0, %v3149
      %v3151 = vpop.f32.mrb[0].mxu0
      %3152 = vmatprep.mubr.f32.mxu0 0.0
      %3153 = vmatmul.mubr.f32.gmra.mrb[0].mxu0 %v2626
      %v3154 = vpop.f32.mrb[0].mxu0
      %v3155 = vadd.f32 0.0, %v3154
      %v3156 = vpop.f32.mrb[0].mxu0
      %3157 = vmatprep.mubr.f32.mxu0 0.0
      %3158 = vmatmul.mubr.f32.gmra.mrb[0].mxu0 %v2628
      %v3159 = vpop.f32.mrb[0].mxu0
      %v3160 = vadd.f32 0.0, %v3159
      %v3161 = vpop.f32.mrb[0].mxu0
      %3162 = vmatprep.mubr.f32.mxu0 0.0
      %3163 = vmatmul.mubr.f32.gmra.mrb[0].mxu0 %v2630
      %v3164 = vpop.f32.mrb[0].mxu0
      %v3165 = vadd.f32 0.0, %v3164
      %v3166 = vpop.f32.mrb[0].mxu0
      %3167 = vmatprep.mubr.f32.mxu0 0.0
      %3168 = vmatmul.mubr.f32.gmra.mrb[0].mxu0 %v2632
      %v3169 = vpop.f32.mrb[0].mxu0
      %v3170 = vadd.f32 0.0, %v3169
      %v3171 = vpop.f32.mrb[0].mxu0
      %3172 = vmatprep.mubr.f32.mxu0 0.0
      %3173 = vmatmul.mubr.f32.gmra.mrb[0].mxu0 %v2634
      %v3174 = vpop.f32.mrb[0].mxu0
      %v3175 = vadd.f32 0.0, %v3174
      %v3176 = vpop.f32.mrb[0].mxu0
      %3177 = vmatprep.mubr.f32.mxu0 0.0
      %3178 = vmatmul.mubr.f32.gmra.mrb[0].mxu0 %v2636
      %v3179 = vpop.f32.mrb[0].mxu0
      %v3180 = vadd.f32 0.0, %v3179
      %v3181 = vpop.f32.mrb[0].mxu0
      %3182 = vmatprep.mubr.f32.mxu0 0.0
      %3183 = vmatmul.mubr.f32.gmra.mrb[0].mxu0 %v2638
      %v3184 = vpop.f32.mrb[0].mxu0
      %v3185 = vadd.f32 0.0, %v3184
      %v3186 = vpop.f32.mrb[0].mxu0
      %3187 = vmatprep.mubr.f32.mxu0 0.0
      %3188 = vmatmul.mubr.f32.gmra.mrb[0].mxu0 %v2640
      %v3189 = vpop.f32.mrb[0].mxu0
      %v3190 = vadd.f32 0.0, %v3189
      %v3191 = vpop.f32.mrb[0].mxu0
      %3192 = vmatprep.mubr.f32.mxu0 0.0
      %3193 = vmatmul.mubr.f32.gmra.mrb[0].mxu0 %v2642
      %v3194 = vpop.f32.mrb[0].mxu0
      %v3195 = vadd.f32 0.0, %v3194
      %v3196 = vpop.f32.mrb[0].mxu0
      %3197 = vmatprep.mubr.f32.mxu0 0.0
      %3198 = vmatmul.mubr.f32.gmra.mrb[0].mxu0 %v2644
      %v3199 = vpop.f32.mrb[0].mxu0
      %v3200 = vadd.f32 0.0, %v3199
      %v3201 = vpop.f32.mrb[0].mxu0
      %3202 = vmatprep.mubr.f32.mxu0 0.0
      %3203 = vmatmul.mubr.f32.gmra.mrb[0].mxu0 %v2646
      %v3204 = vpop.f32.mrb[0].mxu0
      %v3205 = vadd.f32 0.0, %v3204
      %v3206 = vpop.f32.mrb[0].mxu0
      %3207 = vmatprep.mubr.f32.mxu0 0.0
      %3208 = vmatmul.mubr.f32.gmra.mrb[0].mxu0 %v2648
      %v3209 = vpop.f32.mrb[0].mxu0
      %v3210 = vadd.f32 0.0, %v3209
      %v3211 = vpop.f32.mrb[0].mxu0
      %3212 = vmatprep.mubr.f32.mxu0 0.0
      %3213 = vmatmul.mubr.f32.gmra.mrb[0].mxu0 %v2650
      %v3214 = vpop.f32.mrb[0].mxu0
      %v3215 = vadd.f32 0.0, %v3214
      %v3216 = vpop.f32.mrb[0].mxu0
      %3217 = vmatprep.mubr.f32.mxu0 0.0
      %3218 = vmatmul.mubr.f32.gmra.mrb[0].mxu0 %v2652
      %v3219 = vpop.f32.mrb[0].mxu0
      %v3220 = vadd.f32 0.0, %v3219
      %v3221 = vpop.f32.mrb[0].mxu0
      %3222 = vmatprep.mubr.f32.mxu0 0.0
      %3223 = vmatmul.mubr.f32.gmra.mrb[0].mxu0 %v2654
      %v3224 = vpop.f32.mrb[0].mxu0
      %v3225 = vadd.f32 0.0, %v3224
      %v3226 = vpop.f32.mrb[0].mxu0
      %3227 = vmatprep.mubr.f32.mxu0 0.0
      %3228 = vmatmul.mubr.f32.gmra.mrb[0].mxu0 %v2969
      %v3229 = vpop.f32.mrb[0].mxu0
      %v3230 = vadd.f32 0.0, %v3229
      %v3231 = vpop.f32.mrb[0].mxu0
      %3232 = vmatprep.mubr.f32.mxu0 0.0
      %3233 = vmatmul.mubr.f32.gmra.mrb[0].mxu0 %v2971
      %v3234 = vpop.f32.mrb[0].mxu0
      %v3235 = vadd.f32 0.0, %v3234
      %v3236 = vpop.f32.mrb[0].mxu0
      %3237 = vdwg.mxu0
      %v3238 = vadd.f32 %v2921, %v3040
      %v3239 = vadd.f32 %v2922, %v3045
      %v3240 = vadd.f32 %v2923, %v3050
      %v3241 = vadd.f32 %v2924, %v3055
      %v3242 = vadd.f32 %v2925, %v3060
      %v3243 = vadd.f32 %v2926, %v3065
      %v3244 = vadd.f32 %v2927, %v3070
      %v3245 = vadd.f32 %v2928, %v3075
      %v3246 = vadd.f32 %v2929, %v3080
      %v3247 = vadd.f32 %v2930, %v3085
      %v3248 = vadd.f32 %v2931, %v3090
      %v3249 = vadd.f32 %v2932, %v3095
      %v3250 = vadd.f32 %v2933, %v3100
      %v3251 = vadd.f32 %v2934, %v3105
      %v3252 = vadd.f32 %v2935, %v3110
      %v3253 = vadd.f32 %v2936, %v3115
      %v3254 = vadd.f32 %v2937, %v3120
      %v3255 = vadd.f32 %v2938, %v3125
      %v3256 = vadd.f32 %v2939, %v3130
      %v3257 = vadd.f32 %v2940, %v3135
      %v3258 = vadd.f32 %v2941, %v3140
      %v3259 = vadd.f32 %v2942, %v3145
      %v3260 = vadd.f32 %v2943, %v3150
      %v3261 = vadd.f32 %v2944, %v3155
      %v3262 = vadd.f32 %v2945, %v3160
      %v3263 = vadd.f32 %v2946, %v3165
      %v3264 = vadd.f32 %v2947, %v3170
      %v3265 = vadd.f32 %v2948, %v3175
      %v3266 = vadd.f32 %v2949, %v3180
      %v3267 = vadd.f32 %v2950, %v3185
      %v3268 = vadd.f32 %v2951, %v3190
      %v3269 = vadd.f32 %v2952, %v3195
      %v3270 = vadd.f32 %v2953, %v3200
      %v3271 = vadd.f32 %v2954, %v3205
      %v3272 = vadd.f32 %v2955, %v3210
      %v3273 = vadd.f32 %v2956, %v3215
      %v3274 = vadd.f32 %v2957, %v3220
      %v3275 = vadd.f32 %v2958, %v3225
      %v3276 = vadd.f32 %v2959, %v3230
      %v3277 = vadd.f32 %v2960, %v3235
      %s3278 = scalar_lea.vmem %s2, 56
      %v3279 = vld [vmem:[%s3278] sm:$0xff]
      %vm3280 = vcmask 1042432
      %v3281 = vrot.slane %v379, 5
      %v3282 = vrot.slane %v380, 5
      %v3283 = vsel %vm3280, %v3281, %v3282
      %v3284 = vrot.slane %v381, 5
      %v3285 = vsel %vm3280, %v3282, %v3284
      %v3286 = vrot.slane %v382, 5
      %v3287 = vsel %vm3280, %v3284, %v3286
      %v3288 = vrot.slane %v383, 5
      %v3289 = vsel %vm3280, %v3286, %v3288
      %v3290 = vrot.slane %v384, 5
      %v3291 = vsel %vm3280, %v3288, %v3290
      %v3292 = vrot.slane %v385, 5
      %v3293 = vsel %vm3280, %v3290, %v3292
      %v3294 = vrot.slane %v386, 5
      %v3295 = vsel %vm3280, %v3292, %v3294
      %v3296 = vrot.slane %v387, 5
      %v3297 = vsel %vm3280, %v3294, %v3296
      %v3298 = vrot.slane %v388, 5
      %v3299 = vsel %vm3280, %v3296, %v3298
      %v3300 = vrot.slane %v389, 5
      %v3301 = vsel %vm3280, %v3298, %v3300
      %v3302 = vrot.slane %v390, 5
      %v3303 = vsel %vm3280, %v3300, %v3302
      %v3304 = vrot.slane %v391, 5
      %v3305 = vsel %vm3280, %v3302, %v3304
      %v3306 = vrot.slane %v392, 5
      %v3307 = vsel %vm3280, %v3304, %v3306
      %v3308 = vrot.slane %v393, 5
      %v3309 = vsel %vm3280, %v3306, %v3308
      %v3310 = vrot.slane %v394, 5
      %v3311 = vsel %vm3280, %v3308, %v3310
      %v3312 = vrot.slane %v395, 5
      %v3313 = vsel %vm3280, %v3310, %v3312
      %v3314 = vrot.slane %v396, 5
      %v3315 = vsel %vm3280, %v3312, %v3314
      %v3316 = vrot.slane %v397, 5
      %v3317 = vsel %vm3280, %v3314, %v3316
      %v3318 = vrot.slane %v398, 5
      %v3319 = vsel %vm3280, %v3316, %v3318
      %v3320 = vrot.slane %v399, 5
      %v3321 = vsel %vm3280, %v3318, %v3320
      %v3322 = vrot.slane %v400, 5
      %v3323 = vsel %vm3280, %v3320, %v3322
      %v3324 = vrot.slane %v401, 5
      %v3325 = vsel %vm3280, %v3322, %v3324
      %v3326 = vrot.slane %v402, 5
      %v3327 = vsel %vm3280, %v3324, %v3326
      %v3328 = vrot.slane %v403, 5
      %v3329 = vsel %vm3280, %v3326, %v3328
      %v3330 = vrot.slane %v404, 5
      %v3331 = vsel %vm3280, %v3328, %v3330
      %v3332 = vrot.slane %v405, 5
      %v3333 = vsel %vm3280, %v3330, %v3332
      %v3334 = vrot.slane %v406, 5
      %v3335 = vsel %vm3280, %v3332, %v3334
      %v3336 = vrot.slane %v407, 5
      %v3337 = vsel %vm3280, %v3334, %v3336
      %v3338 = vrot.slane %v408, 5
      %v3339 = vsel %vm3280, %v3336, %v3338
      %v3340 = vrot.slane %v409, 5
      %v3341 = vsel %vm3280, %v3338, %v3340
      %v3342 = vrot.slane %v410, 5
      %v3343 = vsel %vm3280, %v3340, %v3342
      %v3344 = vrot.slane %v411, 5
      %v3345 = vsel %vm3280, %v3342, %v3344
      %v3346 = vrot.slane %v412, 5
      %v3347 = vsel %vm3280, %v3344, %v3346
      %v3348 = vrot.slane %v413, 5
      %v3349 = vsel %vm3280, %v3346, %v3348
      %v3350 = vrot.slane %v414, 5
      %v3351 = vsel %vm3280, %v3348, %v3350
      %v3352 = vrot.slane %v415, 5
      %v3353 = vsel %vm3280, %v3350, %v3352
      %v3354 = vrot.slane %v416, 5
      %v3355 = vsel %vm3280, %v3352, %v3354
      %v3356 = vrot.slane %v417, 5
      %v3357 = vsel %vm3280, %v3354, %v3356
      %v3358 = vrot.slane %v418, 5
      %v3359 = vsel %vm3280, %v3356, %v3358
      %v3360 = vrot.slane %v419, 5
      %v3361 = vsel %vm3280, %v3358, %v3360
      %v3362 = vsel %vm546, %v3283, 0
      %v3364 = vsel %vm546, %v3285, 0
      %v3366 = vsel %vm546, %v3287, 0
      %v3368 = vsel %vm546, %v3289, 0
      %v3370 = vsel %vm546, %v3291, 0
      %v3372 = vsel %vm546, %v3293, 0
      %v3374 = vsel %vm546, %v3295, 0
      %v3376 = vsel %vm546, %v3297, 0
      %v3378 = vsel %vm546, %v3299, 0
      %v3380 = vsel %vm546, %v3301, 0
      %v3382 = vsel %vm546, %v3303, 0
      %v3384 = vsel %vm546, %v3305, 0
      %v3386 = vsel %vm546, %v3307, 0
      %v3388 = vsel %vm546, %v3309, 0
      %v3390 = vsel %vm546, %v3311, 0
      %v3392 = vsel %vm546, %v3313, 0
      %v3394 = vsel %vm546, %v3315, 0
      %v3396 = vsel %vm546, %v3317, 0
      %v3398 = vsel %vm546, %v3319, 0
      %v3400 = vsel %vm546, %v3321, 0
      %v3402 = vsel %vm546, %v3323, 0
      %v3404 = vsel %vm546, %v3325, 0
      %v3406 = vsel %vm546, %v3327, 0
      %v3408 = vsel %vm546, %v3329, 0
      %v3410 = vsel %vm546, %v3331, 0
      %v3412 = vsel %vm546, %v3333, 0
      %v3414 = vsel %vm546, %v3335, 0
      %v3416 = vsel %vm546, %v3337, 0
      %v3418 = vsel %vm546, %v3339, 0
      %v3420 = vsel %vm546, %v3341, 0
      %v3422 = vsel %vm546, %v3343, 0
      %v3424 = vsel %vm546, %v3345, 0
      %v3426 = vsel %vm546, %v3347, 0
      %v3428 = vsel %vm546, %v3349, 0
      %v3430 = vsel %vm546, %v3351, 0
      %v3432 = vsel %vm546, %v3353, 0
      %v3434 = vsel %vm546, %v3355, 0
      %v3436 = vsel %vm546, %v3357, 0
      %v3438 = vsel %vm546, %v3359, 0
      %v3440 = vsel %vm546, %v3361, 0
      %3442 = vmatprep.subr.mxu0 0.0
      %3443 = vmatpush1.msra.mxu0 %v3279
      %3444 = vmatprep.subr.mxu0 0.0
      %3445 = vmatpush1.msra.mxu0 0.0
      %3446 = vmatprep.subr.mxu0 0.0
      %3447 = vmatpush1.msra.mxu0 0.0
      %3448 = vmatprep.subr.mxu0 0.0
      %3449 = vmatpush1.msra.mxu0 0.0
      %3450 = vmatprep.subr.mxu0 0.0
      %3451 = vmatpush1.msra.mxu0 0.0
      %3452 = vmatprep.subr.mxu0 0.0
      %3453 = vmatpush1.msra.mxu0 0.0
      %3454 = vmatprep.subr.mxu0 0.0
      %3455 = vmatpush1.msra.mxu0 0.0
      %3456 = vmatprep.subr.mxu0 0.0
      %3457 = vmatpush1.msra.mxu0 0.0
      %3458 = vmatprep.subr.mxu0 0.0
      %3459 = vmatpush1.msra.mxu0 0.0
      %3460 = vmatprep.subr.mxu0 0.0
      %3461 = vmatpush1.msra.mxu0 0.0
      %3462 = vmatprep.subr.mxu0 0.0
      %3463 = vmatpush1.msra.mxu0 0.0
      %3464 = vmatprep.subr.mxu0 0.0
      %3465 = vmatpush1.msra.mxu0 0.0
      %3466 = vmatprep.subr.mxu0 0.0
      %3467 = vmatpush1.msra.mxu0 0.0
      %3468 = vmatprep.subr.mxu0 0.0
      %3469 = vmatpush1.msra.mxu0 0.0
      %3470 = vmatprep.subr.mxu0 0.0
      %3471 = vmatpush1.msra.mxu0 0.0
      %3472 = vmatprep.subr.mxu0 0.0
      %3473 = vmatpush1.msra.mxu0 0.0
      %3474 = vmatprep.subr.mxu0 0.0
      %3475 = vmatpush1.msra.mxu0 0.0
      %3476 = vmatprep.subr.mxu0 0.0
      %3477 = vmatpush1.msra.mxu0 0.0
      %3478 = vmatprep.subr.mxu0 0.0
      %3479 = vmatpush1.msra.mxu0 0.0
      %3480 = vmatprep.subr.mxu0 0.0
      %3481 = vmatpush1.msra.mxu0 0.0
      %3482 = vmatprep.subr.mxu0 0.0
      %3483 = vmatpush1.msra.mxu0 0.0
      %3484 = vmatprep.subr.mxu0 0.0
      %3485 = vmatpush1.msra.mxu0 0.0
      %3486 = vmatprep.subr.mxu0 0.0
      %3487 = vmatpush1.msra.mxu0 0.0
      %3488 = vmatprep.subr.mxu0 0.0
      %3489 = vmatpush1.msra.mxu0 0.0
      %3490 = vmatprep.subr.mxu0 0.0
      %3491 = vmatpush1.msra.mxu0 0.0
      %3492 = vmatprep.subr.mxu0 0.0
      %3493 = vmatpush1.msra.mxu0 0.0
      %3494 = vmatprep.subr.mxu0 0.0
      %3495 = vmatpush1.msra.mxu0 0.0
      %3496 = vmatprep.subr.mxu0 0.0
      %3497 = vmatpush1.msra.mxu0 0.0
      %3498 = vmatprep.subr.mxu0 0.0
      %3499 = vmatpush1.msra.mxu0 0.0
      %3500 = vmatprep.subr.mxu0 0.0
      %3501 = vmatpush1.msra.mxu0 0.0
      %3502 = vmatprep.subr.mxu0 0.0
      %3503 = vmatpush1.msra.mxu0 0.0
      %3504 = vmatprep.subr.mxu0 0.0
      %3505 = vmatpush1.msra.mxu0 0.0
      %3506 = vmatprep.mubr.f32.mxu0 0.0
      %3507 = vmatmul.mubr.f32.gmra.mrb[0].mxu0 %v3362
      %v3508 = vpop.f32.mrb[0].mxu0
      %v3509 = vadd.f32 0.0, %v3508
      %v3510 = vpop.f32.mrb[0].mxu0
      %3511 = vmatprep.mubr.f32.mxu0 0.0
      %3512 = vmatmul.mubr.f32.gmra.mrb[0].mxu0 %v3364
      %v3513 = vpop.f32.mrb[0].mxu0
      %v3514 = vadd.f32 0.0, %v3513
      %v3515 = vpop.f32.mrb[0].mxu0
      %3516 = vmatprep.mubr.f32.mxu0 0.0
      %3517 = vmatmul.mubr.f32.gmra.mrb[0].mxu0 %v3366
      %v3518 = vpop.f32.mrb[0].mxu0
      %v3519 = vadd.f32 0.0, %v3518
      %v3520 = vpop.f32.mrb[0].mxu0
      %3521 = vmatprep.mubr.f32.mxu0 0.0
      %3522 = vmatmul.mubr.f32.gmra.mrb[0].mxu0 %v3368
      %v3523 = vpop.f32.mrb[0].mxu0
      %v3524 = vadd.f32 0.0, %v3523
      %v3525 = vpop.f32.mrb[0].mxu0
      %3526 = vmatprep.mubr.f32.mxu0 0.0
      %3527 = vmatmul.mubr.f32.gmra.mrb[0].mxu0 %v3370
      %v3528 = vpop.f32.mrb[0].mxu0
      %v3529 = vadd.f32 0.0, %v3528
      %v3530 = vpop.f32.mrb[0].mxu0
      %3531 = vmatprep.mubr.f32.mxu0 0.0
      %3532 = vmatmul.mubr.f32.gmra.mrb[0].mxu0 %v3372
      %v3533 = vpop.f32.mrb[0].mxu0
      %v3534 = vadd.f32 0.0, %v3533
      %v3535 = vpop.f32.mrb[0].mxu0
      %3536 = vmatprep.mubr.f32.mxu0 0.0
      %3537 = vmatmul.mubr.f32.gmra.mrb[0].mxu0 %v3374
      %v3538 = vpop.f32.mrb[0].mxu0
      %v3539 = vadd.f32 0.0, %v3538
      %v3540 = vpop.f32.mrb[0].mxu0
      %3541 = vmatprep.mubr.f32.mxu0 0.0
      %3542 = vmatmul.mubr.f32.gmra.mrb[0].mxu0 %v3376
      %v3543 = vpop.f32.mrb[0].mxu0
      %v3544 = vadd.f32 0.0, %v3543
      %v3545 = vpop.f32.mrb[0].mxu0
      %3546 = vmatprep.mubr.f32.mxu0 0.0
      %3547 = vmatmul.mubr.f32.gmra.mrb[0].mxu0 %v3378
      %v3548 = vpop.f32.mrb[0].mxu0
      %v3549 = vadd.f32 0.0, %v3548
      %v3550 = vpop.f32.mrb[0].mxu0
      %3551 = vmatprep.mubr.f32.mxu0 0.0
      %3552 = vmatmul.mubr.f32.gmra.mrb[0].mxu0 %v3380
      %v3553 = vpop.f32.mrb[0].mxu0
      %v3554 = vadd.f32 0.0, %v3553
      %v3555 = vpop.f32.mrb[0].mxu0
      %3556 = vmatprep.mubr.f32.mxu0 0.0
      %3557 = vmatmul.mubr.f32.gmra.mrb[0].mxu0 %v3382
      %v3558 = vpop.f32.mrb[0].mxu0
      %v3559 = vadd.f32 0.0, %v3558
      %v3560 = vpop.f32.mrb[0].mxu0
      %3561 = vmatprep.mubr.f32.mxu0 0.0
      %3562 = vmatmul.mubr.f32.gmra.mrb[0].mxu0 %v3384
      %v3563 = vpop.f32.mrb[0].mxu0
      %v3564 = vadd.f32 0.0, %v3563
      %v3565 = vpop.f32.mrb[0].mxu0
      %3566 = vmatprep.mubr.f32.mxu0 0.0
      %3567 = vmatmul.mubr.f32.gmra.mrb[0].mxu0 %v3386
      %v3568 = vpop.f32.mrb[0].mxu0
      %v3569 = vadd.f32 0.0, %v3568
      %v3570 = vpop.f32.mrb[0].mxu0
      %3571 = vmatprep.mubr.f32.mxu0 0.0
      %3572 = vmatmul.mubr.f32.gmra.mrb[0].mxu0 %v3388
      %v3573 = vpop.f32.mrb[0].mxu0
      %v3574 = vadd.f32 0.0, %v3573
      %v3575 = vpop.f32.mrb[0].mxu0
      %3576 = vmatprep.mubr.f32.mxu0 0.0
      %3577 = vmatmul.mubr.f32.gmra.mrb[0].mxu0 %v3390
      %v3578 = vpop.f32.mrb[0].mxu0
      %v3579 = vadd.f32 0.0, %v3578
      %v3580 = vpop.f32.mrb[0].mxu0
      %3581 = vmatprep.mubr.f32.mxu0 0.0
      %3582 = vmatmul.mubr.f32.gmra.mrb[0].mxu0 %v3392
      %v3583 = vpop.f32.mrb[0].mxu0
      %v3584 = vadd.f32 0.0, %v3583
      %v3585 = vpop.f32.mrb[0].mxu0
      %3586 = vmatprep.mubr.f32.mxu0 0.0
      %3587 = vmatmul.mubr.f32.gmra.mrb[0].mxu0 %v3394
      %v3588 = vpop.f32.mrb[0].mxu0
      %v3589 = vadd.f32 0.0, %v3588
      %v3590 = vpop.f32.mrb[0].mxu0
      %3591 = vmatprep.mubr.f32.mxu0 0.0
      %3592 = vmatmul.mubr.f32.gmra.mrb[0].mxu0 %v3396
      %v3593 = vpop.f32.mrb[0].mxu0
      %v3594 = vadd.f32 0.0, %v3593
      %v3595 = vpop.f32.mrb[0].mxu0
      %3596 = vmatprep.mubr.f32.mxu0 0.0
      %3597 = vmatmul.mubr.f32.gmra.mrb[0].mxu0 %v3398
      %v3598 = vpop.f32.mrb[0].mxu0
      %v3599 = vadd.f32 0.0, %v3598
      %v3600 = vpop.f32.mrb[0].mxu0
      %3601 = vmatprep.mubr.f32.mxu0 0.0
      %3602 = vmatmul.mubr.f32.gmra.mrb[0].mxu0 %v3400
      %v3603 = vpop.f32.mrb[0].mxu0
      %v3604 = vadd.f32 0.0, %v3603
      %v3605 = vpop.f32.mrb[0].mxu0
      %3606 = vmatprep.mubr.f32.mxu0 0.0
      %3607 = vmatmul.mubr.f32.gmra.mrb[0].mxu0 %v3402
      %v3608 = vpop.f32.mrb[0].mxu0
      %v3609 = vadd.f32 0.0, %v3608
      %v3610 = vpop.f32.mrb[0].mxu0
      %3611 = vmatprep.mubr.f32.mxu0 0.0
      %3612 = vmatmul.mubr.f32.gmra.mrb[0].mxu0 %v3404
      %v3613 = vpop.f32.mrb[0].mxu0
      %v3614 = vadd.f32 0.0, %v3613
      %v3615 = vpop.f32.mrb[0].mxu0
      %3616 = vmatprep.mubr.f32.mxu0 0.0
      %3617 = vmatmul.mubr.f32.gmra.mrb[0].mxu0 %v3406
      %v3618 = vpop.f32.mrb[0].mxu0
      %v3619 = vadd.f32 0.0, %v3618
      %v3620 = vpop.f32.mrb[0].mxu0
      %3621 = vmatprep.mubr.f32.mxu0 0.0
      %3622 = vmatmul.mubr.f32.gmra.mrb[0].mxu0 %v3408
      %v3623 = vpop.f32.mrb[0].mxu0
      %v3624 = vadd.f32 0.0, %v3623
      %v3625 = vpop.f32.mrb[0].mxu0
      %3626 = vmatprep.mubr.f32.mxu0 0.0
      %3627 = vmatmul.mubr.f32.gmra.mrb[0].mxu0 %v3410
      %v3628 = vpop.f32.mrb[0].mxu0
      %v3629 = vadd.f32 0.0, %v3628
      %v3630 = vpop.f32.mrb[0].mxu0
      %3631 = vmatprep.mubr.f32.mxu0 0.0
      %3632 = vmatmul.mubr.f32.gmra.mrb[0].mxu0 %v3412
      %v3633 = vpop.f32.mrb[0].mxu0
      %v3634 = vadd.f32 0.0, %v3633
      %v3635 = vpop.f32.mrb[0].mxu0
      %3636 = vmatprep.mubr.f32.mxu0 0.0
      %3637 = vmatmul.mubr.f32.gmra.mrb[0].mxu0 %v3414
      %v3638 = vpop.f32.mrb[0].mxu0
      %v3639 = vadd.f32 0.0, %v3638
      %v3640 = vpop.f32.mrb[0].mxu0
      %3641 = vmatprep.mubr.f32.mxu0 0.0
      %3642 = vmatmul.mubr.f32.gmra.mrb[0].mxu0 %v3416
      %v3643 = vpop.f32.mrb[0].mxu0
      %v3644 = vadd.f32 0.0, %v3643
      %v3645 = vpop.f32.mrb[0].mxu0
      %3646 = vmatprep.mubr.f32.mxu0 0.0
      %3647 = vmatmul.mubr.f32.gmra.mrb[0].mxu0 %v3418
      %v3648 = vpop.f32.mrb[0].mxu0
      %v3649 = vadd.f32 0.0, %v3648
      %v3650 = vpop.f32.mrb[0].mxu0
      %3651 = vmatprep.mubr.f32.mxu0 0.0
      %3652 = vmatmul.mubr.f32.gmra.mrb[0].mxu0 %v3420
      %v3653 = vpop.f32.mrb[0].mxu0
      %v3654 = vadd.f32 0.0, %v3653
      %v3655 = vpop.f32.mrb[0].mxu0
      %3656 = vmatprep.mubr.f32.mxu0 0.0
      %3657 = vmatmul.mubr.f32.gmra.mrb[0].mxu0 %v3422
      %v3658 = vpop.f32.mrb[0].mxu0
      %v3659 = vadd.f32 0.0, %v3658
      %v3660 = vpop.f32.mrb[0].mxu0
      %3661 = vmatprep.mubr.f32.mxu0 0.0
      %3662 = vmatmul.mubr.f32.gmra.mrb[0].mxu0 %v3424
      %v3663 = vpop.f32.mrb[0].mxu0
      %v3664 = vadd.f32 0.0, %v3663
      %v3665 = vpop.f32.mrb[0].mxu0
      %3666 = vmatprep.mubr.f32.mxu0 0.0
      %3667 = vmatmul.mubr.f32.gmra.mrb[0].mxu0 %v3426
      %v3668 = vpop.f32.mrb[0].mxu0
      %v3669 = vadd.f32 0.0, %v3668
      %v3670 = vpop.f32.mrb[0].mxu0
      %3671 = vmatprep.mubr.f32.mxu0 0.0
      %3672 = vmatmul.mubr.f32.gmra.mrb[0].mxu0 %v3428
      %v3673 = vpop.f32.mrb[0].mxu0
      %v3674 = vadd.f32 0.0, %v3673
      %v3675 = vpop.f32.mrb[0].mxu0
      %3676 = vmatprep.mubr.f32.mxu0 0.0
      %3677 = vmatmul.mubr.f32.gmra.mrb[0].mxu0 %v3430
      %v3678 = vpop.f32.mrb[0].mxu0
      %v3679 = vadd.f32 0.0, %v3678
      %v3680 = vpop.f32.mrb[0].mxu0
      %3681 = vmatprep.mubr.f32.mxu0 0.0
      %3682 = vmatmul.mubr.f32.gmra.mrb[0].mxu0 %v3432
      %v3683 = vpop.f32.mrb[0].mxu0
      %v3684 = vadd.f32 0.0, %v3683
      %v3685 = vpop.f32.mrb[0].mxu0
      %3686 = vmatprep.mubr.f32.mxu0 0.0
      %3687 = vmatmul.mubr.f32.gmra.mrb[0].mxu0 %v3434
      %v3688 = vpop.f32.mrb[0].mxu0
      %v3689 = vadd.f32 0.0, %v3688
      %v3690 = vpop.f32.mrb[0].mxu0
      %3691 = vmatprep.mubr.f32.mxu0 0.0
      %3692 = vmatmul.mubr.f32.gmra.mrb[0].mxu0 %v3436
      %v3693 = vpop.f32.mrb[0].mxu0
      %v3694 = vadd.f32 0.0, %v3693
      %v3695 = vpop.f32.mrb[0].mxu0
      %3696 = vmatprep.mubr.f32.mxu0 0.0
      %3697 = vmatmul.mubr.f32.gmra.mrb[0].mxu0 %v3438
      %v3698 = vpop.f32.mrb[0].mxu0
      %v3699 = vadd.f32 0.0, %v3698
      %v3700 = vpop.f32.mrb[0].mxu0
      %3701 = vmatprep.mubr.f32.mxu0 0.0
      %3702 = vmatmul.mubr.f32.gmra.mrb[0].mxu0 %v3440
      %v3703 = vpop.f32.mrb[0].mxu0
      %v3704 = vadd.f32 0.0, %v3703
      %v3705 = vpop.f32.mrb[0].mxu0
      %3706 = vdwg.mxu0
      %v3707 = vadd.f32 %v3238, %v3509
      %v3708 = vadd.f32 %v3239, %v3514
      %v3709 = vadd.f32 %v3240, %v3519
      %v3710 = vadd.f32 %v3241, %v3524
      %v3711 = vadd.f32 %v3242, %v3529
      %v3712 = vadd.f32 %v3243, %v3534
      %v3713 = vadd.f32 %v3244, %v3539
      %v3714 = vadd.f32 %v3245, %v3544
      %v3715 = vadd.f32 %v3246, %v3549
      %v3716 = vadd.f32 %v3247, %v3554
      %v3717 = vadd.f32 %v3248, %v3559
      %v3718 = vadd.f32 %v3249, %v3564
      %v3719 = vadd.f32 %v3250, %v3569
      %v3720 = vadd.f32 %v3251, %v3574
      %v3721 = vadd.f32 %v3252, %v3579
      %v3722 = vadd.f32 %v3253, %v3584
      %v3723 = vadd.f32 %v3254, %v3589
      %v3724 = vadd.f32 %v3255, %v3594
      %v3725 = vadd.f32 %v3256, %v3599
      %v3726 = vadd.f32 %v3257, %v3604
      %v3727 = vadd.f32 %v3258, %v3609
      %v3728 = vadd.f32 %v3259, %v3614
      %v3729 = vadd.f32 %v3260, %v3619
      %v3730 = vadd.f32 %v3261, %v3624
      %v3731 = vadd.f32 %v3262, %v3629
      %v3732 = vadd.f32 %v3263, %v3634
      %v3733 = vadd.f32 %v3264, %v3639
      %v3734 = vadd.f32 %v3265, %v3644
      %v3735 = vadd.f32 %v3266, %v3649
      %v3736 = vadd.f32 %v3267, %v3654
      %v3737 = vadd.f32 %v3268, %v3659
      %v3738 = vadd.f32 %v3269, %v3664
      %v3739 = vadd.f32 %v3270, %v3669
      %v3740 = vadd.f32 %v3271, %v3674
      %v3741 = vadd.f32 %v3272, %v3679
      %v3742 = vadd.f32 %v3273, %v3684
      %v3743 = vadd.f32 %v3274, %v3689
      %v3744 = vadd.f32 %v3275, %v3694
      %v3745 = vadd.f32 %v3276, %v3699
      %v3746 = vadd.f32 %v3277, %v3704
      %s3747 = scalar_lea.vmem %s2, 64
      %v3748 = vld [vmem:[%s3747] sm:$0xff]
      %vm3749 = vcmask 1041408
      %v3750 = vrot.slane %v379, 6
      %v3751 = vrot.slane %v380, 6
      %v3752 = vsel %vm3749, %v3750, %v3751
      %v3753 = vrot.slane %v381, 6
      %v3754 = vsel %vm3749, %v3751, %v3753
      %v3755 = vrot.slane %v382, 6
      %v3756 = vsel %vm3749, %v3753, %v3755
      %v3757 = vrot.slane %v383, 6
      %v3758 = vsel %vm3749, %v3755, %v3757
      %v3759 = vrot.slane %v384, 6
      %v3760 = vsel %vm3749, %v3757, %v3759
      %v3761 = vrot.slane %v385, 6
      %v3762 = vsel %vm3749, %v3759, %v3761
      %v3763 = vrot.slane %v386, 6
      %v3764 = vsel %vm3749, %v3761, %v3763
      %v3765 = vrot.slane %v387, 6
      %v3766 = vsel %vm3749, %v3763, %v3765
      %v3767 = vrot.slane %v388, 6
      %v3768 = vsel %vm3749, %v3765, %v3767
      %v3769 = vrot.slane %v389, 6
      %v3770 = vsel %vm3749, %v3767, %v3769
      %v3771 = vrot.slane %v390, 6
      %v3772 = vsel %vm3749, %v3769, %v3771
      %v3773 = vrot.slane %v391, 6
      %v3774 = vsel %vm3749, %v3771, %v3773
      %v3775 = vrot.slane %v392, 6
      %v3776 = vsel %vm3749, %v3773, %v3775
      %v3777 = vrot.slane %v393, 6
      %v3778 = vsel %vm3749, %v3775, %v3777
      %v3779 = vrot.slane %v394, 6
      %v3780 = vsel %vm3749, %v3777, %v3779
      %v3781 = vrot.slane %v395, 6
      %v3782 = vsel %vm3749, %v3779, %v3781
      %v3783 = vrot.slane %v396, 6
      %v3784 = vsel %vm3749, %v3781, %v3783
      %v3785 = vrot.slane %v397, 6
      %v3786 = vsel %vm3749, %v3783, %v3785
      %v3787 = vrot.slane %v398, 6
      %v3788 = vsel %vm3749, %v3785, %v3787
      %v3789 = vrot.slane %v399, 6
      %v3790 = vsel %vm3749, %v3787, %v3789
      %v3791 = vrot.slane %v400, 6
      %v3792 = vsel %vm3749, %v3789, %v3791
      %v3793 = vrot.slane %v401, 6
      %v3794 = vsel %vm3749, %v3791, %v3793
      %v3795 = vrot.slane %v402, 6
      %v3796 = vsel %vm3749, %v3793, %v3795
      %v3797 = vrot.slane %v403, 6
      %v3798 = vsel %vm3749, %v3795, %v3797
      %v3799 = vrot.slane %v404, 6
      %v3800 = vsel %vm3749, %v3797, %v3799
      %v3801 = vrot.slane %v405, 6
      %v3802 = vsel %vm3749, %v3799, %v3801
      %v3803 = vrot.slane %v406, 6
      %v3804 = vsel %vm3749, %v3801, %v3803
      %v3805 = vrot.slane %v407, 6
      %v3806 = vsel %vm3749, %v3803, %v3805
      %v3807 = vrot.slane %v408, 6
      %v3808 = vsel %vm3749, %v3805, %v3807
      %v3809 = vrot.slane %v409, 6
      %v3810 = vsel %vm3749, %v3807, %v3809
      %v3811 = vrot.slane %v410, 6
      %v3812 = vsel %vm3749, %v3809, %v3811
      %v3813 = vrot.slane %v411, 6
      %v3814 = vsel %vm3749, %v3811, %v3813
      %v3815 = vrot.slane %v412, 6
      %v3816 = vsel %vm3749, %v3813, %v3815
      %v3817 = vrot.slane %v413, 6
      %v3818 = vsel %vm3749, %v3815, %v3817
      %v3819 = vrot.slane %v414, 6
      %v3820 = vsel %vm3749, %v3817, %v3819
      %v3821 = vrot.slane %v415, 6
      %v3822 = vsel %vm3749, %v3819, %v3821
      %v3823 = vrot.slane %v416, 6
      %v3824 = vsel %vm3749, %v3821, %v3823
      %v3825 = vrot.slane %v417, 6
      %v3826 = vsel %vm3749, %v3823, %v3825
      %v3827 = vrot.slane %v418, 6
      %v3828 = vsel %vm3749, %v3825, %v3827
      %v3829 = vrot.slane %v419, 6
      %v3830 = vsel %vm3749, %v3827, %v3829
      %v3831 = vsel %vm546, %v3752, 0
      %v3833 = vsel %vm546, %v3754, 0
      %v3835 = vsel %vm546, %v3756, 0
      %v3837 = vsel %vm546, %v3758, 0
      %v3839 = vsel %vm546, %v3760, 0
      %v3841 = vsel %vm546, %v3762, 0
      %v3843 = vsel %vm546, %v3764, 0
      %v3845 = vsel %vm546, %v3766, 0
      %v3847 = vsel %vm546, %v3768, 0
      %v3849 = vsel %vm546, %v3770, 0
      %v3851 = vsel %vm546, %v3772, 0
      %v3853 = vsel %vm546, %v3774, 0
      %v3855 = vsel %vm546, %v3776, 0
      %v3857 = vsel %vm546, %v3778, 0
      %v3859 = vsel %vm546, %v3780, 0
      %v3861 = vsel %vm546, %v3782, 0
      %v3863 = vsel %vm546, %v3784, 0
      %v3865 = vsel %vm546, %v3786, 0
      %v3867 = vsel %vm546, %v3788, 0
      %v3869 = vsel %vm546, %v3790, 0
      %v3871 = vsel %vm546, %v3792, 0
      %v3873 = vsel %vm546, %v3794, 0
      %v3875 = vsel %vm546, %v3796, 0
      %v3877 = vsel %vm546, %v3798, 0
      %v3879 = vsel %vm546, %v3800, 0
      %v3881 = vsel %vm546, %v3802, 0
      %v3883 = vsel %vm546, %v3804, 0
      %v3885 = vsel %vm546, %v3806, 0
      %v3887 = vsel %vm546, %v3808, 0
      %v3889 = vsel %vm546, %v3810, 0
      %v3891 = vsel %vm546, %v3812, 0
      %v3893 = vsel %vm546, %v3814, 0
      %v3895 = vsel %vm546, %v3816, 0
      %v3897 = vsel %vm546, %v3818, 0
      %v3899 = vsel %vm546, %v3820, 0
      %v3901 = vsel %vm546, %v3822, 0
      %v3903 = vsel %vm546, %v3824, 0
      %v3905 = vsel %vm546, %v3826, 0
      %v3907 = vsel %vm546, %v3828, 0
      %v3909 = vsel %vm546, %v3830, 0
      %3911 = vmatprep.subr.mxu0 0.0
      %3912 = vmatpush1.msra.mxu0 %v3748
      %3913 = vmatprep.subr.mxu0 0.0
      %3914 = vmatpush1.msra.mxu0 0.0
      %3915 = vmatprep.subr.mxu0 0.0
      %3916 = vmatpush1.msra.mxu0 0.0
      %3917 = vmatprep.subr.mxu0 0.0
      %3918 = vmatpush1.msra.mxu0 0.0
      %3919 = vmatprep.subr.mxu0 0.0
      %3920 = vmatpush1.msra.mxu0 0.0
      %3921 = vmatprep.subr.mxu0 0.0
      %3922 = vmatpush1.msra.mxu0 0.0
      %3923 = vmatprep.subr.mxu0 0.0
      %3924 = vmatpush1.msra.mxu0 0.0
      %3925 = vmatprep.subr.mxu0 0.0
      %3926 = vmatpush1.msra.mxu0 0.0
      %3927 = vmatprep.subr.mxu0 0.0
      %3928 = vmatpush1.msra.mxu0 0.0
      %3929 = vmatprep.subr.mxu0 0.0
      %3930 = vmatpush1.msra.mxu0 0.0
      %3931 = vmatprep.subr.mxu0 0.0
      %3932 = vmatpush1.msra.mxu0 0.0
      %3933 = vmatprep.subr.mxu0 0.0
      %3934 = vmatpush1.msra.mxu0 0.0
      %3935 = vmatprep.subr.mxu0 0.0
      %3936 = vmatpush1.msra.mxu0 0.0
      %3937 = vmatprep.subr.mxu0 0.0
      %3938 = vmatpush1.msra.mxu0 0.0
      %3939 = vmatprep.subr.mxu0 0.0
      %3940 = vmatpush1.msra.mxu0 0.0
      %3941 = vmatprep.subr.mxu0 0.0
      %3942 = vmatpush1.msra.mxu0 0.0
      %3943 = vmatprep.subr.mxu0 0.0
      %3944 = vmatpush1.msra.mxu0 0.0
      %3945 = vmatprep.subr.mxu0 0.0
      %3946 = vmatpush1.msra.mxu0 0.0
      %3947 = vmatprep.subr.mxu0 0.0
      %3948 = vmatpush1.msra.mxu0 0.0
      %3949 = vmatprep.subr.mxu0 0.0
      %3950 = vmatpush1.msra.mxu0 0.0
      %3951 = vmatprep.subr.mxu0 0.0
      %3952 = vmatpush1.msra.mxu0 0.0
      %3953 = vmatprep.subr.mxu0 0.0
      %3954 = vmatpush1.msra.mxu0 0.0
      %3955 = vmatprep.subr.mxu0 0.0
      %3956 = vmatpush1.msra.mxu0 0.0
      %3957 = vmatprep.subr.mxu0 0.0
      %3958 = vmatpush1.msra.mxu0 0.0
      %3959 = vmatprep.subr.mxu0 0.0
      %3960 = vmatpush1.msra.mxu0 0.0
      %3961 = vmatprep.subr.mxu0 0.0
      %3962 = vmatpush1.msra.mxu0 0.0
      %3963 = vmatprep.subr.mxu0 0.0
      %3964 = vmatpush1.msra.mxu0 0.0
      %3965 = vmatprep.subr.mxu0 0.0
      %3966 = vmatpush1.msra.mxu0 0.0
      %3967 = vmatprep.subr.mxu0 0.0
      %3968 = vmatpush1.msra.mxu0 0.0
      %3969 = vmatprep.subr.mxu0 0.0
      %3970 = vmatpush1.msra.mxu0 0.0
      %3971 = vmatprep.subr.mxu0 0.0
      %3972 = vmatpush1.msra.mxu0 0.0
      %3973 = vmatprep.subr.mxu0 0.0
      %3974 = vmatpush1.msra.mxu0 0.0
      %3975 = vmatprep.mubr.f32.mxu0 0.0
      %3976 = vmatmul.mubr.f32.gmra.mrb[0].mxu0 %v3831
      %v3977 = vpop.f32.mrb[0].mxu0
      %v3978 = vadd.f32 0.0, %v3977
      %v3979 = vpop.f32.mrb[0].mxu0
      %3980 = vmatprep.mubr.f32.mxu0 0.0
      %3981 = vmatmul.mubr.f32.gmra.mrb[0].mxu0 %v3833
      %v3982 = vpop.f32.mrb[0].mxu0
      %v3983 = vadd.f32 0.0, %v3982
      %v3984 = vpop.f32.mrb[0].mxu0
      %3985 = vmatprep.mubr.f32.mxu0 0.0
      %3986 = vmatmul.mubr.f32.gmra.mrb[0].mxu0 %v3835
      %v3987 = vpop.f32.mrb[0].mxu0
      %v3988 = vadd.f32 0.0, %v3987
      %v3989 = vpop.f32.mrb[0].mxu0
      %3990 = vmatprep.mubr.f32.mxu0 0.0
      %3991 = vmatmul.mubr.f32.gmra.mrb[0].mxu0 %v3837
      %v3992 = vpop.f32.mrb[0].mxu0
      %v3993 = vadd.f32 0.0, %v3992
      %v3994 = vpop.f32.mrb[0].mxu0
      %3995 = vmatprep.mubr.f32.mxu0 0.0
      %3996 = vmatmul.mubr.f32.gmra.mrb[0].mxu0 %v3839
      %v3997 = vpop.f32.mrb[0].mxu0
      %v3998 = vadd.f32 0.0, %v3997
      %v3999 = vpop.f32.mrb[0].mxu0
      %4000 = vmatprep.mubr.f32.mxu0 0.0
      %4001 = vmatmul.mubr.f32.gmra.mrb[0].mxu0 %v3841
      %v4002 = vpop.f32.mrb[0].mxu0
      %v4003 = vadd.f32 0.0, %v4002
      %v4004 = vpop.f32.mrb[0].mxu0
      %4005 = vmatprep.mubr.f32.mxu0 0.0
      %4006 = vmatmul.mubr.f32.gmra.mrb[0].mxu0 %v3843
      %v4007 = vpop.f32.mrb[0].mxu0
      %v4008 = vadd.f32 0.0, %v4007
      %v4009 = vpop.f32.mrb[0].mxu0
      %4010 = vmatprep.mubr.f32.mxu0 0.0
      %4011 = vmatmul.mubr.f32.gmra.mrb[0].mxu0 %v3845
      %v4012 = vpop.f32.mrb[0].mxu0
      %v4013 = vadd.f32 0.0, %v4012
      %v4014 = vpop.f32.mrb[0].mxu0
      %4015 = vmatprep.mubr.f32.mxu0 0.0
      %4016 = vmatmul.mubr.f32.gmra.mrb[0].mxu0 %v3847
      %v4017 = vpop.f32.mrb[0].mxu0
      %v4018 = vadd.f32 0.0, %v4017
      %v4019 = vpop.f32.mrb[0].mxu0
      %4020 = vmatprep.mubr.f32.mxu0 0.0
      %4021 = vmatmul.mubr.f32.gmra.mrb[0].mxu0 %v3849
      %v4022 = vpop.f32.mrb[0].mxu0
      %v4023 = vadd.f32 0.0, %v4022
      %v4024 = vpop.f32.mrb[0].mxu0
      %4025 = vmatprep.mubr.f32.mxu0 0.0
      %4026 = vmatmul.mubr.f32.gmra.mrb[0].mxu0 %v3851
      %v4027 = vpop.f32.mrb[0].mxu0
      %v4028 = vadd.f32 0.0, %v4027
      %v4029 = vpop.f32.mrb[0].mxu0
      %4030 = vmatprep.mubr.f32.mxu0 0.0
      %4031 = vmatmul.mubr.f32.gmra.mrb[0].mxu0 %v3853
      %v4032 = vpop.f32.mrb[0].mxu0
      %v4033 = vadd.f32 0.0, %v4032
      %v4034 = vpop.f32.mrb[0].mxu0
      %4035 = vmatprep.mubr.f32.mxu0 0.0
      %4036 = vmatmul.mubr.f32.gmra.mrb[0].mxu0 %v3855
      %v4037 = vpop.f32.mrb[0].mxu0
      %v4038 = vadd.f32 0.0, %v4037
      %v4039 = vpop.f32.mrb[0].mxu0
      %4040 = vmatprep.mubr.f32.mxu0 0.0
      %4041 = vmatmul.mubr.f32.gmra.mrb[0].mxu0 %v3857
      %v4042 = vpop.f32.mrb[0].mxu0
      %v4043 = vadd.f32 0.0, %v4042
      %v4044 = vpop.f32.mrb[0].mxu0
      %4045 = vmatprep.mubr.f32.mxu0 0.0
      %4046 = vmatmul.mubr.f32.gmra.mrb[0].mxu0 %v3859
      %v4047 = vpop.f32.mrb[0].mxu0
      %v4048 = vadd.f32 0.0, %v4047
      %v4049 = vpop.f32.mrb[0].mxu0
      %4050 = vmatprep.mubr.f32.mxu0 0.0
      %4051 = vmatmul.mubr.f32.gmra.mrb[0].mxu0 %v3861
      %v4052 = vpop.f32.mrb[0].mxu0
      %v4053 = vadd.f32 0.0, %v4052
      %v4054 = vpop.f32.mrb[0].mxu0
      %4055 = vmatprep.mubr.f32.mxu0 0.0
      %4056 = vmatmul.mubr.f32.gmra.mrb[0].mxu0 %v3863
      %v4057 = vpop.f32.mrb[0].mxu0
      %v4058 = vadd.f32 0.0, %v4057
      %v4059 = vpop.f32.mrb[0].mxu0
      %4060 = vmatprep.mubr.f32.mxu0 0.0
      %4061 = vmatmul.mubr.f32.gmra.mrb[0].mxu0 %v3865
      %v4062 = vpop.f32.mrb[0].mxu0
      %v4063 = vadd.f32 0.0, %v4062
      %v4064 = vpop.f32.mrb[0].mxu0
      %4065 = vmatprep.mubr.f32.mxu0 0.0
      %4066 = vmatmul.mubr.f32.gmra.mrb[0].mxu0 %v3867
      %v4067 = vpop.f32.mrb[0].mxu0
      %v4068 = vadd.f32 0.0, %v4067
      %v4069 = vpop.f32.mrb[0].mxu0
      %4070 = vmatprep.mubr.f32.mxu0 0.0
      %4071 = vmatmul.mubr.f32.gmra.mrb[0].mxu0 %v3869
      %v4072 = vpop.f32.mrb[0].mxu0
      %v4073 = vadd.f32 0.0, %v4072
      %v4074 = vpop.f32.mrb[0].mxu0
      %4075 = vmatprep.mubr.f32.mxu0 0.0
      %4076 = vmatmul.mubr.f32.gmra.mrb[0].mxu0 %v3871
      %v4077 = vpop.f32.mrb[0].mxu0
      %v4078 = vadd.f32 0.0, %v4077
      %v4079 = vpop.f32.mrb[0].mxu0
      %4080 = vmatprep.mubr.f32.mxu0 0.0
      %4081 = vmatmul.mubr.f32.gmra.mrb[0].mxu0 %v3873
      %v4082 = vpop.f32.mrb[0].mxu0
      %v4083 = vadd.f32 0.0, %v4082
      %v4084 = vpop.f32.mrb[0].mxu0
      %4085 = vmatprep.mubr.f32.mxu0 0.0
      %4086 = vmatmul.mubr.f32.gmra.mrb[0].mxu0 %v3875
      %v4087 = vpop.f32.mrb[0].mxu0
      %v4088 = vadd.f32 0.0, %v4087
      %v4089 = vpop.f32.mrb[0].mxu0
      %4090 = vmatprep.mubr.f32.mxu0 0.0
      %4091 = vmatmul.mubr.f32.gmra.mrb[0].mxu0 %v3877
      %v4092 = vpop.f32.mrb[0].mxu0
      %v4093 = vadd.f32 0.0, %v4092
      %v4094 = vpop.f32.mrb[0].mxu0
      %4095 = vmatprep.mubr.f32.mxu0 0.0
      %4096 = vmatmul.mubr.f32.gmra.mrb[0].mxu0 %v3879
      %v4097 = vpop.f32.mrb[0].mxu0
      %v4098 = vadd.f32 0.0, %v4097
      %v4099 = vpop.f32.mrb[0].mxu0
      %4100 = vmatprep.mubr.f32.mxu0 0.0
      %4101 = vmatmul.mubr.f32.gmra.mrb[0].mxu0 %v3881
      %v4102 = vpop.f32.mrb[0].mxu0
      %v4103 = vadd.f32 0.0, %v4102
      %v4104 = vpop.f32.mrb[0].mxu0
      %4105 = vmatprep.mubr.f32.mxu0 0.0
      %4106 = vmatmul.mubr.f32.gmra.mrb[0].mxu0 %v3883
      %v4107 = vpop.f32.mrb[0].mxu0
      %v4108 = vadd.f32 0.0, %v4107
      %v4109 = vpop.f32.mrb[0].mxu0
      %4110 = vmatprep.mubr.f32.mxu0 0.0
      %4111 = vmatmul.mubr.f32.gmra.mrb[0].mxu0 %v3885
      %v4112 = vpop.f32.mrb[0].mxu0
      %v4113 = vadd.f32 0.0, %v4112
      %v4114 = vpop.f32.mrb[0].mxu0
      %4115 = vmatprep.mubr.f32.mxu0 0.0
      %4116 = vmatmul.mubr.f32.gmra.mrb[0].mxu0 %v3887
      %v4117 = vpop.f32.mrb[0].mxu0
      %v4118 = vadd.f32 0.0, %v4117
      %v4119 = vpop.f32.mrb[0].mxu0
      %4120 = vmatprep.mubr.f32.mxu0 0.0
      %4121 = vmatmul.mubr.f32.gmra.mrb[0].mxu0 %v3889
      %v4122 = vpop.f32.mrb[0].mxu0
      %v4123 = vadd.f32 0.0, %v4122
      %v4124 = vpop.f32.mrb[0].mxu0
      %4125 = vmatprep.mubr.f32.mxu0 0.0
      %4126 = vmatmul.mubr.f32.gmra.mrb[0].mxu0 %v3891
      %v4127 = vpop.f32.mrb[0].mxu0
      %v4128 = vadd.f32 0.0, %v4127
      %v4129 = vpop.f32.mrb[0].mxu0
      %4130 = vmatprep.mubr.f32.mxu0 0.0
      %4131 = vmatmul.mubr.f32.gmra.mrb[0].mxu0 %v3893
      %v4132 = vpop.f32.mrb[0].mxu0
      %v4133 = vadd.f32 0.0, %v4132
      %v4134 = vpop.f32.mrb[0].mxu0
      %4135 = vmatprep.mubr.f32.mxu0 0.0
      %4136 = vmatmul.mubr.f32.gmra.mrb[0].mxu0 %v3895
      %v4137 = vpop.f32.mrb[0].mxu0
      %v4138 = vadd.f32 0.0, %v4137
      %v4139 = vpop.f32.mrb[0].mxu0
      %4140 = vmatprep.mubr.f32.mxu0 0.0
      %4141 = vmatmul.mubr.f32.gmra.mrb[0].mxu0 %v3897
      %v4142 = vpop.f32.mrb[0].mxu0
      %v4143 = vadd.f32 0.0, %v4142
      %v4144 = vpop.f32.mrb[0].mxu0
      %4145 = vmatprep.mubr.f32.mxu0 0.0
      %4146 = vmatmul.mubr.f32.gmra.mrb[0].mxu0 %v3899
      %v4147 = vpop.f32.mrb[0].mxu0
      %v4148 = vadd.f32 0.0, %v4147
      %v4149 = vpop.f32.mrb[0].mxu0
      %4150 = vmatprep.mubr.f32.mxu0 0.0
      %4151 = vmatmul.mubr.f32.gmra.mrb[0].mxu0 %v3901
      %v4152 = vpop.f32.mrb[0].mxu0
      %v4153 = vadd.f32 0.0, %v4152
      %v4154 = vpop.f32.mrb[0].mxu0
      %4155 = vmatprep.mubr.f32.mxu0 0.0
      %4156 = vmatmul.mubr.f32.gmra.mrb[0].mxu0 %v3903
      %v4157 = vpop.f32.mrb[0].mxu0
      %v4158 = vadd.f32 0.0, %v4157
      %v4159 = vpop.f32.mrb[0].mxu0
      %4160 = vmatprep.mubr.f32.mxu0 0.0
      %4161 = vmatmul.mubr.f32.gmra.mrb[0].mxu0 %v3905
      %v4162 = vpop.f32.mrb[0].mxu0
      %v4163 = vadd.f32 0.0, %v4162
      %v4164 = vpop.f32.mrb[0].mxu0
      %4165 = vmatprep.mubr.f32.mxu0 0.0
      %4166 = vmatmul.mubr.f32.gmra.mrb[0].mxu0 %v3907
      %v4167 = vpop.f32.mrb[0].mxu0
      %v4168 = vadd.f32 0.0, %v4167
      %v4169 = vpop.f32.mrb[0].mxu0
      %4170 = vmatprep.mubr.f32.mxu0 0.0
      %4171 = vmatmul.mubr.f32.gmra.mrb[0].mxu0 %v3909
      %v4172 = vpop.f32.mrb[0].mxu0
      %v4173 = vadd.f32 0.0, %v4172
      %v4174 = vpop.f32.mrb[0].mxu0
      %4175 = vdwg.mxu0
      %v4176 = vadd.f32 %v3707, %v3978
      %v4177 = vadd.f32 %v3708, %v3983
      %v4178 = vadd.f32 %v3709, %v3988
      %v4179 = vadd.f32 %v3710, %v3993
      %v4180 = vadd.f32 %v3711, %v3998
      %v4181 = vadd.f32 %v3712, %v4003
      %v4182 = vadd.f32 %v3713, %v4008
      %v4183 = vadd.f32 %v3714, %v4013
      %v4184 = vadd.f32 %v3715, %v4018
      %v4185 = vadd.f32 %v3716, %v4023
      %v4186 = vadd.f32 %v3717, %v4028
      %v4187 = vadd.f32 %v3718, %v4033
      %v4188 = vadd.f32 %v3719, %v4038
      %v4189 = vadd.f32 %v3720, %v4043
      %v4190 = vadd.f32 %v3721, %v4048
      %v4191 = vadd.f32 %v3722, %v4053
      %v4192 = vadd.f32 %v3723, %v4058
      %v4193 = vadd.f32 %v3724, %v4063
      %v4194 = vadd.f32 %v3725, %v4068
      %v4195 = vadd.f32 %v3726, %v4073
      %v4196 = vadd.f32 %v3727, %v4078
      %v4197 = vadd.f32 %v3728, %v4083
      %v4198 = vadd.f32 %v3729, %v4088
      %v4199 = vadd.f32 %v3730, %v4093
      %v4200 = vadd.f32 %v3731, %v4098
      %v4201 = vadd.f32 %v3732, %v4103
      %v4202 = vadd.f32 %v3733, %v4108
      %v4203 = vadd.f32 %v3734, %v4113
      %v4204 = vadd.f32 %v3735, %v4118
      %v4205 = vadd.f32 %v3736, %v4123
      %v4206 = vadd.f32 %v3737, %v4128
      %v4207 = vadd.f32 %v3738, %v4133
      %v4208 = vadd.f32 %v3739, %v4138
      %v4209 = vadd.f32 %v3740, %v4143
      %v4210 = vadd.f32 %v3741, %v4148
      %v4211 = vadd.f32 %v3742, %v4153
      %v4212 = vadd.f32 %v3743, %v4158
      %v4213 = vadd.f32 %v3744, %v4163
      %v4214 = vadd.f32 %v3745, %v4168
      %v4215 = vadd.f32 %v3746, %v4173
      %v4216 = vld [vmem:[%s356] sm:$0xff]
      %v4217 = vld [vmem:[%s356 + $0x8] sm:$0xff]
      %v4218 = vld [vmem:[%s356 + $0x10] sm:$0xff]
      %v4219 = vld [vmem:[%s356 + $0x18] sm:$0xff]
      %v4220 = vld [vmem:[%s356 + $0x20] sm:$0xff]
      %v4221 = vld [vmem:[%s356 + $0x28] sm:$0xff]
      %v4222 = vld [vmem:[%s356 + $0x30] sm:$0xff]
      %v4223 = vld [vmem:[%s356 + $0x38] sm:$0xff]
      %v4224 = vld [vmem:[%s356 + $0x40] sm:$0xff]
      %v4225 = vld [vmem:[%s356 + $0x48] sm:$0xff]
      %v4226 = vld [vmem:[%s356 + $0x50] sm:$0xff]
      %v4227 = vld [vmem:[%s356 + $0x58] sm:$0xff]
      %v4228 = vld [vmem:[%s356 + $0x60] sm:$0xff]
      %v4229 = vld [vmem:[%s356 + $0x68] sm:$0xff]
      %v4230 = vld [vmem:[%s356 + $0x70] sm:$0xff]
      %v4231 = vld [vmem:[%s356 + $0x78] sm:$0xff]
      %v4232 = vld [vmem:[%s356 + $0x80] sm:$0xff]
      %v4233 = vld [vmem:[%s356 + $0x88] sm:$0xff]
      %v4234 = vld [vmem:[%s356 + $0x90] sm:$0xff]
      %v4235 = vld [vmem:[%s356 + $0x98] sm:$0xff]
      %v4236 = vld [vmem:[%s356 + $0xa0] sm:$0xff]
      %v4237 = vld [vmem:[%s356 + $0xa8] sm:$0xff]
      %v4238 = vld [vmem:[%s356 + $0xb0] sm:$0xff]
      %v4239 = vld [vmem:[%s356 + $0xb8] sm:$0xff]
      %v4240 = vld [vmem:[%s356 + $0xc0] sm:$0xff]
      %v4241 = vld [vmem:[%s356 + $0xc8] sm:$0xff]
      %v4242 = vld [vmem:[%s356 + $0xd0] sm:$0xff]
      %v4243 = vld [vmem:[%s356 + $0xd8] sm:$0xff]
      %v4244 = vld [vmem:[%s356 + $0xe0] sm:$0xff]
      %v4245 = vld [vmem:[%s356 + $0xe8] sm:$0xff]
      %v4246 = vld [vmem:[%s356 + $0xf0] sm:$0xff]
      %v4247 = vld [vmem:[%s356 + $0xf8] sm:$0xff]
      %v4248 = vld [vmem:[%s356 + $0x100] sm:$0xff]
      %v4249 = vld [vmem:[%s356 + $0x108] sm:$0xff]
      %v4250 = vld [vmem:[%s356 + $0x110] sm:$0xff]
      %v4251 = vld [vmem:[%s356 + $0x118] sm:$0xff]
      %v4252 = vld [vmem:[%s356 + $0x120] sm:$0xff]
      %v4253 = vld [vmem:[%s356 + $0x128] sm:$0xff]
      %v4254 = vld [vmem:[%s356 + $0x130] sm:$0xff]
      %v4255 = vld [vmem:[%s356 + $0x138] sm:$0xff]
      %4257 = vset.pattern.permute.xlu0 0
      %4258 = vperm.xlu0 %4257, %v4216
      %v4259 = vpop.permute.xlu0 %4258
      %4262 = vset.pattern.permute.xlu0 0
      %4263 = vperm.xlu0 %4262, %v4217
      %v4264 = vpop.permute.xlu0 %4263
      %4267 = vset.pattern.permute.xlu0 0
      %4268 = vperm.xlu0 %4267, %v4218
      %v4269 = vpop.permute.xlu0 %4268
      %4272 = vset.pattern.permute.xlu0 0
      %4273 = vperm.xlu0 %4272, %v4219
      %v4274 = vpop.permute.xlu0 %4273
      %4277 = vset.pattern.permute.xlu0 0
      %4278 = vperm.xlu0 %4277, %v4220
      %v4279 = vpop.permute.xlu0 %4278
      %4282 = vset.pattern.permute.xlu0 0
      %4283 = vperm.xlu0 %4282, %v4221
      %v4284 = vpop.permute.xlu0 %4283
      %4287 = vset.pattern.permute.xlu0 0
      %4288 = vperm.xlu0 %4287, %v4222
      %v4289 = vpop.permute.xlu0 %4288
      %4292 = vset.pattern.permute.xlu0 0
      %4293 = vperm.xlu0 %4292, %v4223
      %v4294 = vpop.permute.xlu0 %4293
      %4297 = vset.pattern.permute.xlu0 0
      %4298 = vperm.xlu0 %4297, %v4224
      %v4299 = vpop.permute.xlu0 %4298
      %4302 = vset.pattern.permute.xlu0 0
      %4303 = vperm.xlu0 %4302, %v4225
      %v4304 = vpop.permute.xlu0 %4303
      %4307 = vset.pattern.permute.xlu0 0
      %4308 = vperm.xlu0 %4307, %v4226
      %v4309 = vpop.permute.xlu0 %4308
      %4312 = vset.pattern.permute.xlu0 0
      %4313 = vperm.xlu0 %4312, %v4227
      %v4314 = vpop.permute.xlu0 %4313
      %4317 = vset.pattern.permute.xlu0 0
      %4318 = vperm.xlu0 %4317, %v4228
      %v4319 = vpop.permute.xlu0 %4318
      %4322 = vset.pattern.permute.xlu0 0
      %4323 = vperm.xlu0 %4322, %v4229
      %v4324 = vpop.permute.xlu0 %4323
      %4327 = vset.pattern.permute.xlu0 0
      %4328 = vperm.xlu0 %4327, %v4230
      %v4329 = vpop.permute.xlu0 %4328
      %4332 = vset.pattern.permute.xlu0 0
      %4333 = vperm.xlu0 %4332, %v4231
      %v4334 = vpop.permute.xlu0 %4333
      %4337 = vset.pattern.permute.xlu0 0
      %4338 = vperm.xlu0 %4337, %v4232
      %v4339 = vpop.permute.xlu0 %4338
      %4342 = vset.pattern.permute.xlu0 0
      %4343 = vperm.xlu0 %4342, %v4233
      %v4344 = vpop.permute.xlu0 %4343
      %4347 = vset.pattern.permute.xlu0 0
      %4348 = vperm.xlu0 %4347, %v4234
      %v4349 = vpop.permute.xlu0 %4348
      %4352 = vset.pattern.permute.xlu0 0
      %4353 = vperm.xlu0 %4352, %v4235
      %v4354 = vpop.permute.xlu0 %4353
      %4357 = vset.pattern.permute.xlu0 0
      %4358 = vperm.xlu0 %4357, %v4236
      %v4359 = vpop.permute.xlu0 %4358
      %4362 = vset.pattern.permute.xlu0 0
      %4363 = vperm.xlu0 %4362, %v4237
      %v4364 = vpop.permute.xlu0 %4363
      %4367 = vset.pattern.permute.xlu0 0
      %4368 = vperm.xlu0 %4367, %v4238
      %v4369 = vpop.permute.xlu0 %4368
      %4372 = vset.pattern.permute.xlu0 0
      %4373 = vperm.xlu0 %4372, %v4239
      %v4374 = vpop.permute.xlu0 %4373
      %4377 = vset.pattern.permute.xlu0 0
      %4378 = vperm.xlu0 %4377, %v4240
      %v4379 = vpop.permute.xlu0 %4378
      %4382 = vset.pattern.permute.xlu0 0
      %4383 = vperm.xlu0 %4382, %v4241
      %v4384 = vpop.permute.xlu0 %4383
      %4387 = vset.pattern.permute.xlu0 0
      %4388 = vperm.xlu0 %4387, %v4242
      %v4389 = vpop.permute.xlu0 %4388
      %4392 = vset.pattern.permute.xlu0 0
      %4393 = vperm.xlu0 %4392, %v4243
      %v4394 = vpop.permute.xlu0 %4393
      %4397 = vset.pattern.permute.xlu0 0
      %4398 = vperm.xlu0 %4397, %v4244
      %v4399 = vpop.permute.xlu0 %4398
      %4402 = vset.pattern.permute.xlu0 0
      %4403 = vperm.xlu0 %4402, %v4245
      %v4404 = vpop.permute.xlu0 %4403
      %4407 = vset.pattern.permute.xlu0 0
      %4408 = vperm.xlu0 %4407, %v4246
      %v4409 = vpop.permute.xlu0 %4408
      %4412 = vset.pattern.permute.xlu0 0
      %4413 = vperm.xlu0 %4412, %v4247
      %v4414 = vpop.permute.xlu0 %4413
      %4417 = vset.pattern.permute.xlu0 0
      %4418 = vperm.xlu0 %4417, %v4248
      %v4419 = vpop.permute.xlu0 %4418
      %4422 = vset.pattern.permute.xlu0 0
      %4423 = vperm.xlu0 %4422, %v4249
      %v4424 = vpop.permute.xlu0 %4423
      %4427 = vset.pattern.permute.xlu0 0
      %4428 = vperm.xlu0 %4427, %v4250
      %v4429 = vpop.permute.xlu0 %4428
      %4432 = vset.pattern.permute.xlu0 0
      %4433 = vperm.xlu0 %4432, %v4251
      %v4434 = vpop.permute.xlu0 %4433
      %4437 = vset.pattern.permute.xlu0 0
      %4438 = vperm.xlu0 %4437, %v4252
      %v4439 = vpop.permute.xlu0 %4438
      %4442 = vset.pattern.permute.xlu0 0
      %4443 = vperm.xlu0 %4442, %v4253
      %v4444 = vpop.permute.xlu0 %4443
      %4447 = vset.pattern.permute.xlu0 0
      %4448 = vperm.xlu0 %4447, %v4254
      %v4449 = vpop.permute.xlu0 %4448
      %4452 = vset.pattern.permute.xlu0 0
      %4453 = vperm.xlu0 %4452, %v4255
      %v4454 = vpop.permute.xlu0 %4453
      %v4456 = vmul.f32 %v4176, %v4259
      %v4457 = vmul.f32 %v4177, %v4264
      %v4458 = vmul.f32 %v4178, %v4269
      %v4459 = vmul.f32 %v4179, %v4274
      %v4460 = vmul.f32 %v4180, %v4279
      %v4461 = vmul.f32 %v4181, %v4284
      %v4462 = vmul.f32 %v4182, %v4289
      %v4463 = vmul.f32 %v4183, %v4294
      %v4464 = vmul.f32 %v4184, %v4299
      %v4465 = vmul.f32 %v4185, %v4304
      %v4466 = vmul.f32 %v4186, %v4309
      %v4467 = vmul.f32 %v4187, %v4314
      %v4468 = vmul.f32 %v4188, %v4319
      %v4469 = vmul.f32 %v4189, %v4324
      %v4470 = vmul.f32 %v4190, %v4329
      %v4471 = vmul.f32 %v4191, %v4334
      %v4472 = vmul.f32 %v4192, %v4339
      %v4473 = vmul.f32 %v4193, %v4344
      %v4474 = vmul.f32 %v4194, %v4349
      %v4475 = vmul.f32 %v4195, %v4354
      %v4476 = vmul.f32 %v4196, %v4359
      %v4477 = vmul.f32 %v4197, %v4364
      %v4478 = vmul.f32 %v4198, %v4369
      %v4479 = vmul.f32 %v4199, %v4374
      %v4480 = vmul.f32 %v4200, %v4379
      %v4481 = vmul.f32 %v4201, %v4384
      %v4482 = vmul.f32 %v4202, %v4389
      %v4483 = vmul.f32 %v4203, %v4394
      %v4484 = vmul.f32 %v4204, %v4399
      %v4485 = vmul.f32 %v4205, %v4404
      %v4486 = vmul.f32 %v4206, %v4409
      %v4487 = vmul.f32 %v4207, %v4414
      %v4488 = vmul.f32 %v4208, %v4419
      %v4489 = vmul.f32 %v4209, %v4424
      %v4490 = vmul.f32 %v4210, %v4429
      %v4491 = vmul.f32 %v4211, %v4434
      %v4492 = vmul.f32 %v4212, %v4439
      %v4493 = vmul.f32 %v4213, %v4444
      %v4494 = vmul.f32 %v4214, %v4449
      %v4495 = vmul.f32 %v4215, %v4454
      %4496 = vst [vmem:[%s366] sm:$0xff] %v4456
      %4497 = vst [vmem:[%s366 + $0x8] sm:$0xff] %v4457
      %4498 = vst [vmem:[%s366 + $0x10] sm:$0xff] %v4458
      %4499 = vst [vmem:[%s366 + $0x18] sm:$0xff] %v4459
      %4500 = vst [vmem:[%s366 + $0x20] sm:$0xff] %v4460
      %4501 = vst [vmem:[%s366 + $0x28] sm:$0xff] %v4461
      %4502 = vst [vmem:[%s366 + $0x30] sm:$0xff] %v4462
      %4503 = vst [vmem:[%s366 + $0x38] sm:$0xff] %v4463
      %4504 = vst [vmem:[%s366 + $0x40] sm:$0xff] %v4464
      %4505 = vst [vmem:[%s366 + $0x48] sm:$0xff] %v4465
      %4506 = vst [vmem:[%s366 + $0x50] sm:$0xff] %v4466
      %4507 = vst [vmem:[%s366 + $0x58] sm:$0xff] %v4467
      %4508 = vst [vmem:[%s366 + $0x60] sm:$0xff] %v4468
      %4509 = vst [vmem:[%s366 + $0x68] sm:$0xff] %v4469
      %4510 = vst [vmem:[%s366 + $0x70] sm:$0xff] %v4470
      %4511 = vst [vmem:[%s366 + $0x78] sm:$0xff] %v4471
      %4512 = vst [vmem:[%s366 + $0x80] sm:$0xff] %v4472
      %4513 = vst [vmem:[%s366 + $0x88] sm:$0xff] %v4473
      %4514 = vst [vmem:[%s366 + $0x90] sm:$0xff] %v4474
      %4515 = vst [vmem:[%s366 + $0x98] sm:$0xff] %v4475
      %4516 = vst [vmem:[%s366 + $0xa0] sm:$0xff] %v4476
      %4517 = vst [vmem:[%s366 + $0xa8] sm:$0xff] %v4477
      %4518 = vst [vmem:[%s366 + $0xb0] sm:$0xff] %v4478
      %4519 = vst [vmem:[%s366 + $0xb8] sm:$0xff] %v4479
      %4520 = vst [vmem:[%s366 + $0xc0] sm:$0xff] %v4480
      %4521 = vst [vmem:[%s366 + $0xc8] sm:$0xff] %v4481
      %4522 = vst [vmem:[%s366 + $0xd0] sm:$0xff] %v4482
      %4523 = vst [vmem:[%s366 + $0xd8] sm:$0xff] %v4483
      %4524 = vst [vmem:[%s366 + $0xe0] sm:$0xff] %v4484
      %4525 = vst [vmem:[%s366 + $0xe8] sm:$0xff] %v4485
      %4526 = vst [vmem:[%s366 + $0xf0] sm:$0xff] %v4486
      %4527 = vst [vmem:[%s366 + $0xf8] sm:$0xff] %v4487
      %4528 = vst [vmem:[%s366 + $0x100] sm:$0xff] %v4488
      %4529 = vst [vmem:[%s366 + $0x108] sm:$0xff] %v4489
      %4530 = vst [vmem:[%s366 + $0x110] sm:$0xff] %v4490
      %4531 = vst [vmem:[%s366 + $0x118] sm:$0xff] %v4491
      %4532 = vst [vmem:[%s366 + $0x120] sm:$0xff] %v4492
      %4533 = vst [vmem:[%s366 + $0x128] sm:$0xff] %v4493
      %4534 = vst [vmem:[%s366 + $0x130] sm:$0xff] %v4494
      %4535 = vst [vmem:[%s366 + $0x138] sm:$0xff] %v4495
      %v4536 = vadd.f32 %v4456, %v4457
      %v4537 = vadd.f32 %v4536, %v4458
      %v4538 = vadd.f32 %v4537, %v4459
      %v4539 = vadd.f32 %v4538, %v4460
      %v4540 = vadd.f32 %v4539, %v4461
      %v4541 = vadd.f32 %v4540, %v4462
      %v4542 = vadd.f32 %v4541, %v4463
      %v4543 = vadd.f32 %v4542, %v4464
      %v4544 = vadd.f32 %v4543, %v4465
      %v4545 = vadd.f32 %v4544, %v4466
      %v4546 = vadd.f32 %v4545, %v4467
      %v4547 = vadd.f32 %v4546, %v4468
      %v4548 = vadd.f32 %v4547, %v4469
      %v4549 = vadd.f32 %v4548, %v4470
      %v4550 = vadd.f32 %v4549, %v4471
      %v4551 = vadd.f32 %v4550, %v4472
      %v4552 = vadd.f32 %v4551, %v4473
      %v4553 = vadd.f32 %v4552, %v4474
      %v4554 = vadd.f32 %v4553, %v4475
      %v4555 = vadd.f32 %v4554, %v4476
      %v4556 = vadd.f32 %v4555, %v4477
      %v4557 = vadd.f32 %v4556, %v4478
      %v4558 = vadd.f32 %v4557, %v4479
      %v4559 = vadd.f32 %v4558, %v4480
      %v4560 = vadd.f32 %v4559, %v4481
      %v4561 = vadd.f32 %v4560, %v4482
      %v4562 = vadd.f32 %v4561, %v4483
      %v4563 = vadd.f32 %v4562, %v4484
      %v4564 = vadd.f32 %v4563, %v4485
      %v4565 = vadd.f32 %v4564, %v4486
      %v4566 = vadd.f32 %v4565, %v4487
      %v4567 = vadd.f32 %v4566, %v4488
      %v4568 = vadd.f32 %v4567, %v4489
      %v4569 = vadd.f32 %v4568, %v4490
      %v4570 = vadd.f32 %v4569, %v4491
      %v4571 = vadd.f32 %v4570, %v4492
      %v4572 = vadd.f32 %v4571, %v4493
      %v4573 = vadd.f32 %v4572, %v4494
      %v4574 = vadd.f32 %v4573, %v4495
      %v4575 = vrot.slane %v4574, 4
      %v4576 = vadd.f32 %v4574, %v4575
      %v4577 = vrot.slane %v4576, 2
      %v4578 = vadd.f32 %v4576, %v4577
      %v4579 = vrot.slane %v4578, 1
      %v4580 = vadd.f32 %v4578, %v4579
      %v4581 = vmul.f32 %v4456, %v4456
      %v4582 = vmul.f32 %v4457, %v4457
      %v4583 = vmul.f32 %v4458, %v4458
      %v4584 = vmul.f32 %v4459, %v4459
      %v4585 = vmul.f32 %v4460, %v4460
      %v4586 = vmul.f32 %v4461, %v4461
      %v4587 = vmul.f32 %v4462, %v4462
      %v4588 = vmul.f32 %v4463, %v4463
      %v4589 = vmul.f32 %v4464, %v4464
      %v4590 = vmul.f32 %v4465, %v4465
      %v4591 = vmul.f32 %v4466, %v4466
      %v4592 = vmul.f32 %v4467, %v4467
      %v4593 = vmul.f32 %v4468, %v4468
      %v4594 = vmul.f32 %v4469, %v4469
      %v4595 = vmul.f32 %v4470, %v4470
      %v4596 = vmul.f32 %v4471, %v4471
      %v4597 = vmul.f32 %v4472, %v4472
      %v4598 = vmul.f32 %v4473, %v4473
      %v4599 = vmul.f32 %v4474, %v4474
      %v4600 = vmul.f32 %v4475, %v4475
      %v4601 = vmul.f32 %v4476, %v4476
      %v4602 = vmul.f32 %v4477, %v4477
      %v4603 = vmul.f32 %v4478, %v4478
      %v4604 = vmul.f32 %v4479, %v4479
      %v4605 = vmul.f32 %v4480, %v4480
      %v4606 = vmul.f32 %v4481, %v4481
      %v4607 = vmul.f32 %v4482, %v4482
      %v4608 = vmul.f32 %v4483, %v4483
      %v4609 = vmul.f32 %v4484, %v4484
      %v4610 = vmul.f32 %v4485, %v4485
      %v4611 = vmul.f32 %v4486, %v4486
      %v4612 = vmul.f32 %v4487, %v4487
      %v4613 = vmul.f32 %v4488, %v4488
      %v4614 = vmul.f32 %v4489, %v4489
      %v4615 = vmul.f32 %v4490, %v4490
      %v4616 = vmul.f32 %v4491, %v4491
      %v4617 = vmul.f32 %v4492, %v4492
      %v4618 = vmul.f32 %v4493, %v4493
      %v4619 = vmul.f32 %v4494, %v4494
      %v4620 = vmul.f32 %v4495, %v4495
      %v4621 = vadd.f32 %v4581, %v4582
      %v4622 = vadd.f32 %v4621, %v4583
      %v4623 = vadd.f32 %v4622, %v4584
      %v4624 = vadd.f32 %v4623, %v4585
      %v4625 = vadd.f32 %v4624, %v4586
      %v4626 = vadd.f32 %v4625, %v4587
      %v4627 = vadd.f32 %v4626, %v4588
      %v4628 = vadd.f32 %v4627, %v4589
      %v4629 = vadd.f32 %v4628, %v4590
      %v4630 = vadd.f32 %v4629, %v4591
      %v4631 = vadd.f32 %v4630, %v4592
      %v4632 = vadd.f32 %v4631, %v4593
      %v4633 = vadd.f32 %v4632, %v4594
      %v4634 = vadd.f32 %v4633, %v4595
      %v4635 = vadd.f32 %v4634, %v4596
      %v4636 = vadd.f32 %v4635, %v4597
      %v4637 = vadd.f32 %v4636, %v4598
      %v4638 = vadd.f32 %v4637, %v4599
      %v4639 = vadd.f32 %v4638, %v4600
      %v4640 = vadd.f32 %v4639, %v4601
      %v4641 = vadd.f32 %v4640, %v4602
      %v4642 = vadd.f32 %v4641, %v4603
      %v4643 = vadd.f32 %v4642, %v4604
      %v4644 = vadd.f32 %v4643, %v4605
      %v4645 = vadd.f32 %v4644, %v4606
      %v4646 = vadd.f32 %v4645, %v4607
      %v4647 = vadd.f32 %v4646, %v4608
      %v4648 = vadd.f32 %v4647, %v4609
      %v4649 = vadd.f32 %v4648, %v4610
      %v4650 = vadd.f32 %v4649, %v4611
      %v4651 = vadd.f32 %v4650, %v4612
      %v4652 = vadd.f32 %v4651, %v4613
      %v4653 = vadd.f32 %v4652, %v4614
      %v4654 = vadd.f32 %v4653, %v4615
      %v4655 = vadd.f32 %v4654, %v4616
      %v4656 = vadd.f32 %v4655, %v4617
      %v4657 = vadd.f32 %v4656, %v4618
      %v4658 = vadd.f32 %v4657, %v4619
      %v4659 = vadd.f32 %v4658, %v4620
      %v4660 = vrot.slane %v4659, 4
      %v4661 = vadd.f32 %v4659, %v4660
      %v4662 = vrot.slane %v4661, 2
      %v4663 = vadd.f32 %v4661, %v4662
      %v4664 = vrot.slane %v4663, 1
      %v4665 = vadd.f32 %v4663, %v4664
      %vm4666 = vcmask 1040384
      %v4667 = vsel %vm4666, %v4580, %v4665
      %v4668 = vsel %vm3749, %v4667, 0.0
      %4669 = vst [vmem:[%s374] sm:$0xff] %v4668
      %s4670 = smul.u32 40, %s22
      %p4671 = scmp.lt.s32.totalorder %s21, 1
      %s4672 = scalar_select %p4671, %s21, 1
      %p4673 = scmp.lt.s32.totalorder %s4670, 39
      %s4674 = scalar_select %p4673, %s4670, 39
      %s4675 = smul.addr %s4672, 40
      %s4676 = sadd.s32 %s4674, %s4675
      %s4677 = smul.addr %s4676, 8
      %s4678 = scalar_lea.vmem %s4, %s4677
      %p4679 = scmp.lt.s32.totalorder %s21, 1
      %s4680 = scalar_select %p4679, %s21, 1
      %p4681 = scmp.lt.s32.totalorder %s22, 0
      %s4682 = scalar_select %p4681, %s22, 0
      %s4683 = sadd.s32 %s4682, %s4680
      %s4684 = smul.addr %s4683, 8
      %s4685 = scalar_lea.vmem %s5, %s4684
      // Predicated region
      $region37: #{conv_bn_relu.2} parent=35 // pred_check
        %p4686 = pneg %p156
      $region38: #{conv_bn_relu.2} parent=35 // pred_check_branch
        %4688 = sbr.rel (%p4686) target = $region40
      $region39: #{conv_bn_relu.2} parent=35 // pred_region
        %s4689 = smul.u32 40, %s22
      $region40: #{conv_bn_relu.2} parent=35 // pred_fallthru
        _
      // Predicated region
      $region41: #{conv_bn_relu.2} parent=35 // pred_check
        %p4690 = pneg %p184
      $region42: #{conv_bn_relu.2} parent=35 // pred_check_branch
        %4692 = sbr.rel (%p4690) target = $region44
      $region43: #{conv_bn_relu.2} parent=35 // pred_region
        _
      $region44: #{conv_bn_relu.2} parent=35 // pred_fallthru
        _
    $region36: #{conv_bn_relu.2} parent=5 // pred_fallthru
      _
    %p4693 = scmp.le.s32.totalorder 2, %s12
    // Predicated region
    $region45: #{conv_bn_relu.2} parent=5 // pred_check
      %p4694 = pneg %p4693
    $region46: #{conv_bn_relu.2} parent=5 // pred_check_branch
      %4696 = sbr.rel (%p4694) target = $region48
    $region47: #{conv_bn_relu.2} parent=5 // pred_region
      %s4697 = ssub.s32 %s12, 2
      // Predicated region
      $region49: #{conv_bn_relu.2} parent=47 // pred_check
        %p4698 = pneg %p162
      $region50: #{conv_bn_relu.2} parent=47 // pred_check_branch
        %4700 = sbr.rel (%p4698) target = $region52
      $region51: #{conv_bn_relu.2} parent=47 // pred_region
        %s4701 = smul.u32 40, %s24
        %p4702 = scmp.lt.s32.totalorder %s23, 1
        %s4703 = scalar_select %p4702, %s23, 1
        %p4704 = scmp.lt.s32.totalorder %s4701, 39
        %s4705 = scalar_select %p4704, %s4701, 39
        %s4706 = smul.addr %s4703, 40
        %s4707 = sadd.s32 %s4705, %s4706
        %s4708 = smul.addr %s4707, 8
        %s4709 = scalar_lea.vmem %s4, %s4708
      $region52: #{conv_bn_relu.2} parent=47 // pred_fallthru
        _
      // Predicated region
      $region53: #{conv_bn_relu.2} parent=47 // pred_check
        %p4710 = pneg %p190
      $region54: #{conv_bn_relu.2} parent=47 // pred_check_branch
        %4712 = sbr.rel (%p4710) target = $region56
      $region55: #{conv_bn_relu.2} parent=47 // pred_region
        %p4713 = scmp.lt.s32.totalorder %s23, 1
        %s4714 = scalar_select %p4713, %s23, 1
        %p4715 = scmp.lt.s32.totalorder %s24, 0
        %s4716 = scalar_select %p4715, %s24, 0
        %s4717 = sadd.s32 %s4716, %s4714
        %s4718 = smul.addr %s4717, 8
        %s4719 = scalar_lea.vmem %s5, %s4718
      $region56: #{conv_bn_relu.2} parent=47 // pred_fallthru
        _
    $region48: #{conv_bn_relu.2} parent=5 // pred_fallthru
      _
  $region6: #{conv_bn_relu.2} parent=0 // loop_footer
    %s16 = sadd.s32 1, %s12
  $region7: #{conv_bn_relu.2} parent=0 // loop_footer_branch
    %11 = sbr.rel target = $region3
  $region8: #{conv_bn_relu.2} parent=0 // loop_exit
    _

</llo_original>
